<compile_context>
chip_gen: v6e
topology: v6e:2x2x1
jax: 0.10.0
libtpu: 0.0.40
codegen_flags: <defaults>
</compile_context>

<pallas_src>
import math

import jax
import jax.numpy as jnp
from jax.experimental import pallas as pl
from jax.experimental.pallas import tpu as pltpu

_BN_EPS = 1e-5


def _round_up(x, m):
    return ((x + m - 1) // m) * m


# ---------------------------------------------------------------------------
# Pallas kernels
# ---------------------------------------------------------------------------

def _lstm2_kernel(x_ref, w0_ref, b0_ref, w1_ref, b1_ref, h0_ref, c0_ref,
                  y_ref, hT_ref, cT_ref,
                  h0s, c0s, h1s, c1s):
    """Both LSTM layers, full sequence, single kernel (no grid).

    x_ref : (T, B, I)   w0_ref : (I+H, 4H)   w1_ref : (2H, 4H)
    b*_ref: (1, 4H)     h0/c0  : (2, B, H)
    y_ref : (T, B, H)   hT/cT  : (2, B, H)
    scratch h0s/c0s/h1s/c1s : (B, H)
    """
    T = x_ref.shape[0]
    H = h0_ref.shape[-1]

    h0s[...] = h0_ref[0]
    c0s[...] = c0_ref[0]
    h1s[...] = h0_ref[1]
    c1s[...] = c0_ref[1]

    def cell(xh, w_ref, b_ref, c_prev):
        # Single fused gate matmul: (B, I+H) @ (I+H, 4H) + (1, 4H)
        gates = (jnp.dot(xh, w_ref[...], preferred_element_type=jnp.float32)
                 + b_ref[...])
        i_g = jax.nn.sigmoid(gates[:, 0 * H:1 * H])
        f_g = jax.nn.sigmoid(gates[:, 1 * H:2 * H])
        g_g = jnp.tanh(gates[:, 2 * H:3 * H])
        o_g = jax.nn.sigmoid(gates[:, 3 * H:4 * H])
        c_new = f_g * c_prev + i_g * g_g
        h_new = o_g * jnp.tanh(c_new)
        return h_new, c_new

    def step(t, carry):
        x_t = x_ref[t]                                          # (B, I)
        # Layer 0
        h_new0, c_new0 = cell(jnp.concatenate([x_t, h0s[...]], axis=1),
                              w0_ref, b0_ref, c0s[...])
        h0s[...] = h_new0
        c0s[...] = c_new0
        # Layer 1
        h_new1, c_new1 = cell(jnp.concatenate([h_new0, h1s[...]], axis=1),
                              w1_ref, b1_ref, c1s[...])
        h1s[...] = h_new1
        c1s[...] = c_new1
        y_ref[t] = h_new1
        return carry

    jax.lax.fori_loop(0, T, step, 0, unroll=True)

    # Final states written exactly once.
    hT_ref[0] = h0s[...]
    hT_ref[1] = h1s[...]
    cT_ref[0] = c0s[...]
    cT_ref[1] = c1s[...]


def _heads_kernel(x_ref, w1_ref, b1_ref, w2_ref, b2_ref, w3_ref, b3_ref,
                  out_ref):
    """One MLP head per grid step (pos=0, mode=1); BN already folded in."""
    x = x_ref[...].astype(w1_ref.dtype)
    h = jnp.dot(x, w1_ref[0], preferred_element_type=jnp.float32) + b1_ref[0]
    h = jnp.maximum(h, 0.0)
    h = jnp.dot(h.astype(w2_ref.dtype), w2_ref[0],
                preferred_element_type=jnp.float32) + b2_ref[0]
    h = jnp.maximum(h, 0.0)
    out_ref[0] = (jnp.dot(h.astype(w3_ref.dtype), w3_ref[0],
                          preferred_element_type=jnp.float32) + b3_ref[0])


# ---------------------------------------------------------------------------
# Wrappers
# ---------------------------------------------------------------------------

def _lstm2(xp, prep, h0, c0):
    T, Bp, _ = xp.shape
    H = prep["hidden_size"]
    return pl.pallas_call(
        _lstm2_kernel,
        out_shape=(jax.ShapeDtypeStruct((T, Bp, H), jnp.float32),
                   jax.ShapeDtypeStruct((2, Bp, H), jnp.float32),
                   jax.ShapeDtypeStruct((2, Bp, H), jnp.float32)),
        scratch_shapes=[pltpu.VMEM((Bp, H), jnp.float32)] * 4,
    )(xp, prep["lstm_w0"], prep["lstm_b0"],
      prep["lstm_w1"], prep["lstm_b1"], h0, c0)


def _heads(lstm_out, prep):
    N, H = lstm_out.shape
    MLP = prep["head_w1"].shape[-1]
    OP = prep["out_pad"]
    return pl.pallas_call(
        _heads_kernel,
        out_shape=jax.ShapeDtypeStruct((2, N, OP), jnp.float32),
        grid_spec=pltpu.PrefetchScalarGridSpec(
            num_scalar_prefetch=0,
            grid=(2,),
            in_specs=[
                pl.BlockSpec((N, H), lambda h: (0, 0)),
                pl.BlockSpec((1, H, MLP), lambda h: (h, 0, 0)),
                pl.BlockSpec((1, 1, MLP), lambda h: (h, 0, 0)),
                pl.BlockSpec((1, MLP, MLP), lambda h: (h, 0, 0)),
                pl.BlockSpec((1, 1, MLP), lambda h: (h, 0, 0)),
                pl.BlockSpec((1, MLP, OP), lambda h: (h, 0, 0)),
                pl.BlockSpec((1, 1, OP), lambda h: (h, 0, 0)),
            ],
            out_specs=pl.BlockSpec((1, N, OP), lambda h: (h, 0, 0)),
        ),
        compiler_params=pltpu.CompilerParams(
            dimension_semantics=("parallel",)),
    )(lstm_out, prep["head_w1"], prep["head_b1"],
      prep["head_w2"], prep["head_b2"],
      prep["head_w3"], prep["head_b3"])


def prepare_params(p, *, eps=_BN_EPS, head_dtype=jnp.bfloat16):
    """One-time weight prep: gate packing, transposes, BN folding, padding."""
    H = p["w_hh0"].shape[1]
    prep = {"hidden_size": H}

    # --- LSTM: pack [x, h] gate weights into (I+H, 4H), bias (1, 4H) ------
    prep["lstm_w0"] = jnp.concatenate(
        [p["w_ih0"].T, p["w_hh0"].T], axis=0).astype(jnp.float32)
    prep["lstm_b0"] = (p["b_ih0"] + p["b_hh0"]).reshape(1, -1).astype(jnp.float32)
    prep["lstm_w1"] = jnp.concatenate(
        [p["w_ih1"].T, p["w_hh1"].T], axis=0).astype(jnp.float32)
    prep["lstm_b1"] = (p["b_ih1"] + p["b_hh1"]).reshape(1, -1).astype(jnp.float32)

    # --- pos head: fold eval-mode BN forward into the following Linear ----
    s1 = p["pos_g1"] * jax.lax.rsqrt(p["pos_rv1"] + eps)
    t1 = p["pos_be1"] - p["pos_rm1"] * s1
    s2 = p["pos_g2"] * jax.lax.rsqrt(p["pos_rv2"] + eps)
    t2 = p["pos_be2"] - p["pos_rm2"] * s2
    pos_w1 = p["pos_w1"].T                         # (H, 1024)
    pos_b1 = p["pos_b1"]
    pos_w2 = s1[:, None] * p["pos_w2"].T           # (1024, 1024)
    pos_b2 = p["pos_b2"] + t1 @ p["pos_w2"].T
    pos_w3 = s2[:, None] * p["pos_w3"].T           # (1024, nc*fl)
    pos_b3 = p["pos_b3"] + t2 @ p["pos_w3"].T

    # --- mode head (Dropout is identity in eval mode) ----------------------
    mode_w1 = p["mode_w1"].T
    mode_b1 = p["mode_b1"]
    mode_w2 = p["mode_w2"].T
    mode_b2 = p["mode_b2"]
    mode_w3 = p["mode_w3"].T                       # (1024, 3*fl)
    mode_b3 = p["mode_b3"]

    pos_out = pos_w3.shape[1]
    mode_out = mode_w3.shape[1]
    out_pad = max(_round_up(pos_out, 128), _round_up(mode_out, 128))
    prep["pos_out"] = pos_out
    prep["mode_out"] = mode_out
    prep["out_pad"] = out_pad

    def pad_last(a, n):
        return jnp.pad(a, [(0, 0)] * (a.ndim - 1) + [(0, n - a.shape[-1])])

    prep["head_w1"] = jnp.stack([pos_w1, mode_w1]).astype(head_dtype)
    prep["head_b1"] = jnp.stack([pos_b1, mode_b1])[:, None, :].astype(jnp.float32)
    prep["head_w2"] = jnp.stack([pos_w2, mode_w2]).astype(head_dtype)
    prep["head_b2"] = jnp.stack([pos_b2, mode_b2])[:, None, :].astype(jnp.float32)
    prep["head_w3"] = jnp.stack([pad_last(pos_w3, out_pad),
                                 pad_last(mode_w3, out_pad)]).astype(head_dtype)
    prep["head_b3"] = jnp.stack([pad_last(pos_b3, out_pad),
                                 pad_last(mode_b3, out_pad)])[:, None, :].astype(jnp.float32)
    return prep


def naive_mapper_forward(prep, x, hidden=None, *, num_classes, future_length=1):
    """Mirrors NaiveMapper.forward: returns (pos, mode, (h_n, c_n))."""
    T, B, _ = x.shape
    H = prep["hidden_size"]
    Bp = _round_up(B, 8)

    if hidden is None:
        # NaiveMapper.init_hidden() is all-zeros.
        h0 = jnp.zeros((2, Bp, H), jnp.float32)
        c0 = jnp.zeros((2, Bp, H), jnp.float32)
    else:
        h0, c0 = hidden
        if Bp != B:
            h0 = jnp.pad(h0, ((0, 0), (0, Bp - B), (0, 0)))
            c0 = jnp.pad(c0, ((0, 0), (0, Bp - B), (0, 0)))

    xp = jnp.pad(x, ((0, 0), (0, Bp - B), (0, 0))) if Bp != B else x

    y, hT, cT = _lstm2(xp, prep, h0, c0)             # y: (T, Bp, H)

    lstm_out = y.reshape(T * Bp, H)
    heads = _heads(lstm_out, prep)                   # (2, T*Bp, out_pad)

    pos = (heads[0].reshape(T, Bp, -1)[:, :B, :prep["pos_out"]]
           .reshape(-1, num_classes))
    mode = (heads[1].reshape(T, Bp, -1)[:, :B, :prep["mode_out"]]
            .reshape(-1, 3))
    hidden_out = (hT[:, :B], cT[:, :B])
    return pos, mode, hidden_out


# ---------------------------------------------------------------------------
# Deterministic parameter init (mirrors _init_weights_and_biases)
# ---------------------------------------------------------------------------

def xavier_normal(key, shape):
    fan_out, fan_in = shape  # PyTorch weight convention: (out_features, in_features)
    std = math.sqrt(2.0 / (fan_in + fan_out))
    return (std * jax.random.normal(key, shape)).astype(jnp.float32)


def init_params(key, input_size, hidden, num_classes, future_length, mlp_hidden=1024):
    keys = iter(jax.random.split(key, 16))
    z = lambda *s: jnp.zeros(s, jnp.float32)      # noqa: E731
    o = lambda *s: jnp.ones(s, jnp.float32)       # noqa: E731
    H4 = 4 * hidden
    p = {}
    # 2-layer LSTM ("features"): weights xavier_normal, biases 0.
    p["w_ih0"] = xavier_normal(next(keys), (H4, input_size))
    p["w_hh0"] = xavier_normal(next(keys), (H4, hidden))
    p["b_ih0"], p["b_hh0"] = z(H4), z(H4)
    p["w_ih1"] = xavier_normal(next(keys), (H4, hidden))
    p["w_hh1"] = xavier_normal(next(keys), (H4, hidden))
    p["b_ih1"], p["b_hh1"] = z(H4), z(H4)
    # pos_top: Linear/ReLU/BN/Linear/ReLU/BN/Linear (BN default running stats)
    p["pos_w1"] = xavier_normal(next(keys), (mlp_hidden, hidden)); p["pos_b1"] = z(mlp_hidden)
    p["pos_g1"], p["pos_be1"] = o(mlp_hidden), z(mlp_hidden)
    p["pos_rm1"], p["pos_rv1"] = z(mlp_hidden), o(mlp_hidden)
    p["pos_w2"] = xavier_normal(next(keys), (mlp_hidden, mlp_hidden)); p["pos_b2"] = z(mlp_hidden)
    p["pos_g2"], p["pos_be2"] = o(mlp_hidden), z(mlp_hidden)
    p["pos_rm2"], p["pos_rv2"] = z(mlp_hidden), o(mlp_hidden)
    p["pos_w3"] = xavier_normal(next(keys), (num_classes * future_length, mlp_hidden))
    p["pos_b3"] = z(num_classes * future_length)
    # mode_top: Linear/ReLU/Dropout/Linear/ReLU/Linear
    p["mode_w1"] = xavier_normal(next(keys), (mlp_hidden, hidden)); p["mode_b1"] = z(mlp_hidden)
    p["mode_w2"] = xavier_normal(next(keys), (mlp_hidden, mlp_hidden)); p["mode_b2"] = z(mlp_hidden)
    p["mode_w3"] = xavier_normal(next(keys), (3 * future_length, mlp_hidden))
    p["mode_b3"] = z(3 * future_length)
    # NOTE: `classifier` head is built in __init__ but never used in forward().
    return p


# ---------------------------------------------------------------------------

if __name__ == "__main__":
    INPUT_SIZE = 32
    HIDDEN = 64
    NUM_CLASSES = 16
    FUTURE_LEN = 1
    T, B = 6, 10   # time-major sequence, batch matches hardcoded hidden batch

    key = jax.random.PRNGKey(0)
    pkey, xkey = jax.random.split(key)
    params = init_params(pkey, INPUT_SIZE, HIDDEN, NUM_CLASSES, FUTURE_LEN)
    prep = prepare_params(params)          # one-time weight prep (cached)
    x = jax.random.normal(xkey, (T, B, INPUT_SIZE), dtype=jnp.float32)

    pos, mode, (h_n, c_n) = naive_mapper_forward(
        prep, x, num_classes=NUM_CLASSES, future_length=FUTURE_LEN)
    jax.block_until_ready((pos, mode, h_n, c_n))

    assert pos.shape == (T * B * FUTURE_LEN, NUM_CLASSES)
    assert mode.shape == (T * B * FUTURE_LEN, 3)
    assert h_n.shape == (2, B, HIDDEN) and c_n.shape == (2, B, HIDDEN)
    assert bool(jnp.all(jnp.isfinite(pos))) and bool(jnp.all(jnp.isfinite(mode)))
    assert bool(jnp.all(jnp.isfinite(h_n))) and bool(jnp.all(jnp.isfinite(c_n)))
    print("KERNEL_OK")
</pallas_src>

<mosaic_0001>
module attributes {stable_mosaic.version = 11 : i64} {
  func.func @_lstm2_kernel(%arg0: memref<6x16x32xf32, #tpu.memory_space<vmem>>, %arg1: memref<96x256xf32, #tpu.memory_space<vmem>>, %arg2: memref<1x256xf32, #tpu.memory_space<vmem>>, %arg3: memref<128x256xf32, #tpu.memory_space<vmem>>, %arg4: memref<1x256xf32, #tpu.memory_space<vmem>>, %arg5: memref<2x16x64xf32, #tpu.memory_space<vmem>>, %arg6: memref<2x16x64xf32, #tpu.memory_space<vmem>>, %arg7: memref<6x16x64xf32, #tpu.memory_space<vmem>>, %arg8: memref<2x16x64xf32, #tpu.memory_space<vmem>>, %arg9: memref<2x16x64xf32, #tpu.memory_space<vmem>>, %arg10: memref<16x64xf32, #tpu.memory_space<vmem>>, %arg11: memref<16x64xf32, #tpu.memory_space<vmem>>, %arg12: memref<16x64xf32, #tpu.memory_space<vmem>>, %arg13: memref<16x64xf32, #tpu.memory_space<vmem>>) attributes {dimension_semantics = [], scalar_prefetch = 0 : i64, scratch_operands = 4 : i64, tpu.core_type = #tpu.core_type<tc>} {
    %c0 = arith.constant 0 : index
    %c0_0 = arith.constant 0 : index
    %c0_1 = arith.constant 0 : index
    %0 = vector.load %arg5[%c0, %c0_0, %c0_1] : memref<2x16x64xf32, #tpu.memory_space<vmem>>, vector<1x16x64xf32>
    %1 = vector.shape_cast %0 : vector<1x16x64xf32> to vector<16x64xf32>
    %c0_2 = arith.constant 0 : index
    %c0_3 = arith.constant 0 : index
    %2 = vector.load %arg10[%c0_2, %c0_3] : memref<16x64xf32, #tpu.memory_space<vmem>>, vector<16x64xf32>
    tpu.vector_store %arg10[%c0_2, %c0_3], %1 {strides = array<i32>} : memref<16x64xf32, #tpu.memory_space<vmem>>, vector<16x64xf32>,
    %c0_4 = arith.constant 0 : index
    %c0_5 = arith.constant 0 : index
    %c0_6 = arith.constant 0 : index
    %3 = vector.load %arg6[%c0_4, %c0_5, %c0_6] : memref<2x16x64xf32, #tpu.memory_space<vmem>>, vector<1x16x64xf32>
    %4 = vector.shape_cast %3 : vector<1x16x64xf32> to vector<16x64xf32>
    %c0_7 = arith.constant 0 : index
    %c0_8 = arith.constant 0 : index
    %5 = vector.load %arg11[%c0_7, %c0_8] : memref<16x64xf32, #tpu.memory_space<vmem>>, vector<16x64xf32>
    tpu.vector_store %arg11[%c0_7, %c0_8], %4 {strides = array<i32>} : memref<16x64xf32, #tpu.memory_space<vmem>>, vector<16x64xf32>,
    %c1 = arith.constant 1 : index
    %c0_9 = arith.constant 0 : index
    %c0_10 = arith.constant 0 : index
    %6 = vector.load %arg5[%c1, %c0_9, %c0_10] : memref<2x16x64xf32, #tpu.memory_space<vmem>>, vector<1x16x64xf32>
    %7 = vector.shape_cast %6 : vector<1x16x64xf32> to vector<16x64xf32>
    %c0_11 = arith.constant 0 : index
    %c0_12 = arith.constant 0 : index
    %8 = vector.load %arg12[%c0_11, %c0_12] : memref<16x64xf32, #tpu.memory_space<vmem>>, vector<16x64xf32>
    tpu.vector_store %arg12[%c0_11, %c0_12], %7 {strides = array<i32>} : memref<16x64xf32, #tpu.memory_space<vmem>>, vector<16x64xf32>,
    %c1_13 = arith.constant 1 : index
    %c0_14 = arith.constant 0 : index
    %c0_15 = arith.constant 0 : index
    %9 = vector.load %arg6[%c1_13, %c0_14, %c0_15] : memref<2x16x64xf32, #tpu.memory_space<vmem>>, vector<1x16x64xf32>
    %10 = vector.shape_cast %9 : vector<1x16x64xf32> to vector<16x64xf32>
    %c0_16 = arith.constant 0 : index
    %c0_17 = arith.constant 0 : index
    %11 = vector.load %arg13[%c0_16, %c0_17] : memref<16x64xf32, #tpu.memory_space<vmem>>, vector<16x64xf32>
    tpu.vector_store %arg13[%c0_16, %c0_17], %10 {strides = array<i32>} : memref<16x64xf32, #tpu.memory_space<vmem>>, vector<16x64xf32>,
    %c0_i32 = arith.constant 0 : i32
    %12 = arith.index_cast %c0_i32 : i32 to index
    %c0_18 = arith.constant 0 : index
    %c0_19 = arith.constant 0 : index
    %13 = vector.load %arg0[%12, %c0_18, %c0_19] : memref<6x16x32xf32, #tpu.memory_space<vmem>>, vector<1x16x32xf32>
    %14 = vector.shape_cast %13 : vector<1x16x32xf32> to vector<16x32xf32>
    %c0_20 = arith.constant 0 : index
    %c0_21 = arith.constant 0 : index
    %15 = vector.load %arg10[%c0_20, %c0_21] : memref<16x64xf32, #tpu.memory_space<vmem>>, vector<16x64xf32>
    %16 = tpu.concatenate %14, %15 in 1 : vector<16x32xf32>, vector<16x64xf32> -> vector<16x96xf32>
    %c0_22 = arith.constant 0 : index
    %c0_23 = arith.constant 0 : index
    %17 = vector.load %arg11[%c0_22, %c0_23] : memref<16x64xf32, #tpu.memory_space<vmem>>, vector<16x64xf32>
    %c0_24 = arith.constant 0 : index
    %c0_25 = arith.constant 0 : index
    %18 = vector.load %arg1[%c0_24, %c0_25] : memref<96x256xf32, #tpu.memory_space<vmem>>, vector<96x256xf32>
    %cst = arith.constant dense<0.000000e+00> : vector<16x256xf32>
    %19 = tpu.matmul %16, %18, %cst {dimension_numbers = #tpu.dot_dimension_numbers<[1], [0], [0], [1], [0, 0, 1, 1], [], []>} : vector<16x96xf32>, vector<96x256xf32>, vector<16x256xf32> -> vector<16x256xf32>
    %c0_26 = arith.constant 0 : index
    %c0_27 = arith.constant 0 : index
    %20 = vector.load %arg2[%c0_26, %c0_27] : memref<1x256xf32, #tpu.memory_space<vmem>>, vector<1x256xf32>
    %21 = vector.broadcast %20 : vector<1x256xf32> to vector<16x256xf32>
    %22 = arith.addf %19, %21 : vector<16x256xf32>
    %23 = vector.extract_strided_slice %22 {offsets = [0, 0], sizes = [16, 64], strides = [1, 1]} : vector<16x256xf32> to vector<16x64xf32>
    %24 = arith.negf %23 : vector<16x64xf32>
    %25 = math.exp %24 : vector<16x64xf32>
    %cst_28 = arith.constant 1.000000e+00 : f32
    %26 = vector.broadcast %cst_28 : f32 to vector<16x64xf32>
    %27 = arith.addf %26, %25 : vector<16x64xf32>
    %28 = arith.divf %26, %27 : vector<16x64xf32>
    %29 = vector.extract_strided_slice %22 {offsets = [0, 64], sizes = [16, 64], strides = [1, 1]} : vector<16x256xf32> to vector<16x64xf32>
    %30 = arith.negf %29 : vector<16x64xf32>
    %31 = math.exp %30 : vector<16x64xf32>
    %cst_29 = arith.constant 1.000000e+00 : f32
    %32 = vector.broadcast %cst_29 : f32 to vector<16x64xf32>
    %33 = arith.addf %32, %31 : vector<16x64xf32>
    %34 = arith.divf %32, %33 : vector<16x64xf32>
    %35 = vector.extract_strided_slice %22 {offsets = [0, 128], sizes = [16, 64], strides = [1, 1]} : vector<16x256xf32> to vector<16x64xf32>
    %36 = math.tanh %35 : vector<16x64xf32>
    %37 = vector.extract_strided_slice %22 {offsets = [0, 192], sizes = [16, 64], strides = [1, 1]} : vector<16x256xf32> to vector<16x64xf32>
    %38 = arith.negf %37 : vector<16x64xf32>
    %39 = math.exp %38 : vector<16x64xf32>
    %cst_30 = arith.constant 1.000000e+00 : f32
    %40 = vector.broadcast %cst_30 : f32 to vector<16x64xf32>
    %41 = arith.addf %40, %39 : vector<16x64xf32>
    %42 = arith.divf %40, %41 : vector<16x64xf32>
    %43 = arith.mulf %34, %17 : vector<16x64xf32>
    %44 = arith.mulf %28, %36 : vector<16x64xf32>
    %45 = arith.addf %43, %44 : vector<16x64xf32>
    %46 = math.tanh %45 : vector<16x64xf32>
    %47 = arith.mulf %42, %46 : vector<16x64xf32>
    %c0_31 = arith.constant 0 : index
    %c0_32 = arith.constant 0 : index
    %48 = vector.load %arg10[%c0_31, %c0_32] : memref<16x64xf32, #tpu.memory_space<vmem>>, vector<16x64xf32>
    tpu.vector_store %arg10[%c0_31, %c0_32], %47 {strides = array<i32>} : memref<16x64xf32, #tpu.memory_space<vmem>>, vector<16x64xf32>,
    %c0_33 = arith.constant 0 : index
    %c0_34 = arith.constant 0 : index
    %49 = vector.load %arg11[%c0_33, %c0_34] : memref<16x64xf32, #tpu.memory_space<vmem>>, vector<16x64xf32>
    tpu.vector_store %arg11[%c0_33, %c0_34], %45 {strides = array<i32>} : memref<16x64xf32, #tpu.memory_space<vmem>>, vector<16x64xf32>,
    %c0_35 = arith.constant 0 : index
    %c0_36 = arith.constant 0 : index
    %50 = vector.load %arg12[%c0_35, %c0_36] : memref<16x64xf32, #tpu.memory_space<vmem>>, vector<16x64xf32>
    %51 = tpu.concatenate %47, %50 in 1 : vector<16x64xf32>, vector<16x64xf32> -> vector<16x128xf32>
    %c0_37 = arith.constant 0 : index
    %c0_38 = arith.constant 0 : index
    %52 = vector.load %arg13[%c0_37, %c0_38] : memref<16x64xf32, #tpu.memory_space<vmem>>, vector<16x64xf32>
    %c0_39 = arith.constant 0 : index
    %c0_40 = arith.constant 0 : index
    %53 = vector.load %arg3[%c0_39, %c0_40] : memref<128x256xf32, #tpu.memory_space<vmem>>, vector<128x256xf32>
    %cst_41 = arith.constant dense<0.000000e+00> : vector<16x256xf32>
    %54 = tpu.matmul %51, %53, %cst_41 {dimension_numbers = #tpu.dot_dimension_numbers<[1], [0], [0], [1], [0, 0, 1, 1], [], []>} : vector<16x128xf32>, vector<128x256xf32>, vector<16x256xf32> -> vector<16x256xf32>
    %c0_42 = arith.constant 0 : index
    %c0_43 = arith.constant 0 : index
    %55 = vector.load %arg4[%c0_42, %c0_43] : memref<1x256xf32, #tpu.memory_space<vmem>>, vector<1x256xf32>
    %56 = vector.broadcast %55 : vector<1x256xf32> to vector<16x256xf32>
    %57 = arith.addf %54, %56 : vector<16x256xf32>
    %58 = vector.extract_strided_slice %57 {offsets = [0, 0], sizes = [16, 64], strides = [1, 1]} : vector<16x256xf32> to vector<16x64xf32>
    %59 = arith.negf %58 : vector<16x64xf32>
    %60 = math.exp %59 : vector<16x64xf32>
    %cst_44 = arith.constant 1.000000e+00 : f32
    %61 = vector.broadcast %cst_44 : f32 to vector<16x64xf32>
    %62 = arith.addf %61, %60 : vector<16x64xf32>
    %63 = arith.divf %61, %62 : vector<16x64xf32>
    %64 = vector.extract_strided_slice %57 {offsets = [0, 64], sizes = [16, 64], strides = [1, 1]} : vector<16x256xf32> to vector<16x64xf32>
    %65 = arith.negf %64 : vector<16x64xf32>
    %66 = math.exp %65 : vector<16x64xf32>
    %cst_45 = arith.constant 1.000000e+00 : f32
    %67 = vector.broadcast %cst_45 : f32 to vector<16x64xf32>
    %68 = arith.addf %67, %66 : vector<16x64xf32>
    %69 = arith.divf %67, %68 : vector<16x64xf32>
    %70 = vector.extract_strided_slice %57 {offsets = [0, 128], sizes = [16, 64], strides = [1, 1]} : vector<16x256xf32> to vector<16x64xf32>
    %71 = math.tanh %70 : vector<16x64xf32>
    %72 = vector.extract_strided_slice %57 {offsets = [0, 192], sizes = [16, 64], strides = [1, 1]} : vector<16x256xf32> to vector<16x64xf32>
    %73 = arith.negf %72 : vector<16x64xf32>
    %74 = math.exp %73 : vector<16x64xf32>
    %cst_46 = arith.constant 1.000000e+00 : f32
    %75 = vector.broadcast %cst_46 : f32 to vector<16x64xf32>
    %76 = arith.addf %75, %74 : vector<16x64xf32>
    %77 = arith.divf %75, %76 : vector<16x64xf32>
    %78 = arith.mulf %69, %52 : vector<16x64xf32>
    %79 = arith.mulf %63, %71 : vector<16x64xf32>
    %80 = arith.addf %78, %79 : vector<16x64xf32>
    %81 = math.tanh %80 : vector<16x64xf32>
    %82 = arith.mulf %77, %81 : vector<16x64xf32>
    %c0_47 = arith.constant 0 : index
    %c0_48 = arith.constant 0 : index
    %83 = vector.load %arg12[%c0_47, %c0_48] : memref<16x64xf32, #tpu.memory_space<vmem>>, vector<16x64xf32>
    tpu.vector_store %arg12[%c0_47, %c0_48], %82 {strides = array<i32>} : memref<16x64xf32, #tpu.memory_space<vmem>>, vector<16x64xf32>,
    %c0_49 = arith.constant 0 : index
    %c0_50 = arith.constant 0 : index
    %84 = vector.load %arg13[%c0_49, %c0_50] : memref<16x64xf32, #tpu.memory_space<vmem>>, vector<16x64xf32>
    tpu.vector_store %arg13[%c0_49, %c0_50], %80 {strides = array<i32>} : memref<16x64xf32, #tpu.memory_space<vmem>>, vector<16x64xf32>,
    %85 = arith.index_cast %c0_i32 : i32 to index
    %c0_51 = arith.constant 0 : index
    %c0_52 = arith.constant 0 : index
    %86 = vector.load %arg7[%85, %c0_51, %c0_52] : memref<6x16x64xf32, #tpu.memory_space<vmem>>, vector<1x16x64xf32>
    %87 = vector.shape_cast %86 : vector<1x16x64xf32> to vector<16x64xf32>
    %88 = vector.shape_cast %82 : vector<16x64xf32> to vector<1x16x64xf32>
    tpu.vector_store %arg7[%85, %c0_51, %c0_52], %88 {strides = array<i32>} : memref<6x16x64xf32, #tpu.memory_space<vmem>>, vector<1x16x64xf32>,
    %c1_i32 = arith.constant 1 : i32
    %89 = arith.index_cast %c1_i32 : i32 to index
    %c0_53 = arith.constant 0 : index
    %c0_54 = arith.constant 0 : index
    %90 = vector.load %arg0[%89, %c0_53, %c0_54] : memref<6x16x32xf32, #tpu.memory_space<vmem>>, vector<1x16x32xf32>
    %91 = vector.shape_cast %90 : vector<1x16x32xf32> to vector<16x32xf32>
    %c0_55 = arith.constant 0 : index
    %c0_56 = arith.constant 0 : index
    %92 = vector.load %arg10[%c0_55, %c0_56] : memref<16x64xf32, #tpu.memory_space<vmem>>, vector<16x64xf32>
    %93 = tpu.concatenate %91, %92 in 1 : vector<16x32xf32>, vector<16x64xf32> -> vector<16x96xf32>
    %c0_57 = arith.constant 0 : index
    %c0_58 = arith.constant 0 : index
    %94 = vector.load %arg11[%c0_57, %c0_58] : memref<16x64xf32, #tpu.memory_space<vmem>>, vector<16x64xf32>
    %c0_59 = arith.constant 0 : index
    %c0_60 = arith.constant 0 : index
    %95 = vector.load %arg1[%c0_59, %c0_60] : memref<96x256xf32, #tpu.memory_space<vmem>>, vector<96x256xf32>
    %cst_61 = arith.constant dense<0.000000e+00> : vector<16x256xf32>
    %96 = tpu.matmul %93, %95, %cst_61 {dimension_numbers = #tpu.dot_dimension_numbers<[1], [0], [0], [1], [0, 0, 1, 1], [], []>} : vector<16x96xf32>, vector<96x256xf32>, vector<16x256xf32> -> vector<16x256xf32>
    %c0_62 = arith.constant 0 : index
    %c0_63 = arith.constant 0 : index
    %97 = vector.load %arg2[%c0_62, %c0_63] : memref<1x256xf32, #tpu.memory_space<vmem>>, vector<1x256xf32>
    %98 = vector.broadcast %97 : vector<1x256xf32> to vector<16x256xf32>
    %99 = arith.addf %96, %98 : vector<16x256xf32>
    %100 = vector.extract_strided_slice %99 {offsets = [0, 0], sizes = [16, 64], strides = [1, 1]} : vector<16x256xf32> to vector<16x64xf32>
    %101 = arith.negf %100 : vector<16x64xf32>
    %102 = math.exp %101 : vector<16x64xf32>
    %cst_64 = arith.constant 1.000000e+00 : f32
    %103 = vector.broadcast %cst_64 : f32 to vector<16x64xf32>
    %104 = arith.addf %103, %102 : vector<16x64xf32>
    %105 = arith.divf %103, %104 : vector<16x64xf32>
    %106 = vector.extract_strided_slice %99 {offsets = [0, 64], sizes = [16, 64], strides = [1, 1]} : vector<16x256xf32> to vector<16x64xf32>
    %107 = arith.negf %106 : vector<16x64xf32>
    %108 = math.exp %107 : vector<16x64xf32>
    %cst_65 = arith.constant 1.000000e+00 : f32
    %109 = vector.broadcast %cst_65 : f32 to vector<16x64xf32>
    %110 = arith.addf %109, %108 : vector<16x64xf32>
    %111 = arith.divf %109, %110 : vector<16x64xf32>
    %112 = vector.extract_strided_slice %99 {offsets = [0, 128], sizes = [16, 64], strides = [1, 1]} : vector<16x256xf32> to vector<16x64xf32>
    %113 = math.tanh %112 : vector<16x64xf32>
    %114 = vector.extract_strided_slice %99 {offsets = [0, 192], sizes = [16, 64], strides = [1, 1]} : vector<16x256xf32> to vector<16x64xf32>
    %115 = arith.negf %114 : vector<16x64xf32>
    %116 = math.exp %115 : vector<16x64xf32>
    %cst_66 = arith.constant 1.000000e+00 : f32
    %117 = vector.broadcast %cst_66 : f32 to vector<16x64xf32>
    %118 = arith.addf %117, %116 : vector<16x64xf32>
    %119 = arith.divf %117, %118 : vector<16x64xf32>
    %120 = arith.mulf %111, %94 : vector<16x64xf32>
    %121 = arith.mulf %105, %113 : vector<16x64xf32>
    %122 = arith.addf %120, %121 : vector<16x64xf32>
    %123 = math.tanh %122 : vector<16x64xf32>
    %124 = arith.mulf %119, %123 : vector<16x64xf32>
    %c0_67 = arith.constant 0 : index
    %c0_68 = arith.constant 0 : index
    %125 = vector.load %arg10[%c0_67, %c0_68] : memref<16x64xf32, #tpu.memory_space<vmem>>, vector<16x64xf32>
    tpu.vector_store %arg10[%c0_67, %c0_68], %124 {strides = array<i32>} : memref<16x64xf32, #tpu.memory_space<vmem>>, vector<16x64xf32>,
    %c0_69 = arith.constant 0 : index
    %c0_70 = arith.constant 0 : index
    %126 = vector.load %arg11[%c0_69, %c0_70] : memref<16x64xf32, #tpu.memory_space<vmem>>, vector<16x64xf32>
    tpu.vector_store %arg11[%c0_69, %c0_70], %122 {strides = array<i32>} : memref<16x64xf32, #tpu.memory_space<vmem>>, vector<16x64xf32>,
    %c0_71 = arith.constant 0 : index
    %c0_72 = arith.constant 0 : index
    %127 = vector.load %arg12[%c0_71, %c0_72] : memref<16x64xf32, #tpu.memory_space<vmem>>, vector<16x64xf32>
    %128 = tpu.concatenate %124, %127 in 1 : vector<16x64xf32>, vector<16x64xf32> -> vector<16x128xf32>
    %c0_73 = arith.constant 0 : index
    %c0_74 = arith.constant 0 : index
    %129 = vector.load %arg13[%c0_73, %c0_74] : memref<16x64xf32, #tpu.memory_space<vmem>>, vector<16x64xf32>
    %c0_75 = arith.constant 0 : index
    %c0_76 = arith.constant 0 : index
    %130 = vector.load %arg3[%c0_75, %c0_76] : memref<128x256xf32, #tpu.memory_space<vmem>>, vector<128x256xf32>
    %cst_77 = arith.constant dense<0.000000e+00> : vector<16x256xf32>
    %131 = tpu.matmul %128, %130, %cst_77 {dimension_numbers = #tpu.dot_dimension_numbers<[1], [0], [0], [1], [0, 0, 1, 1], [], []>} : vector<16x128xf32>, vector<128x256xf32>, vector<16x256xf32> -> vector<16x256xf32>
    %c0_78 = arith.constant 0 : index
    %c0_79 = arith.constant 0 : index
    %132 = vector.load %arg4[%c0_78, %c0_79] : memref<1x256xf32, #tpu.memory_space<vmem>>, vector<1x256xf32>
    %133 = vector.broadcast %132 : vector<1x256xf32> to vector<16x256xf32>
    %134 = arith.addf %131, %133 : vector<16x256xf32>
    %135 = vector.extract_strided_slice %134 {offsets = [0, 0], sizes = [16, 64], strides = [1, 1]} : vector<16x256xf32> to vector<16x64xf32>
    %136 = arith.negf %135 : vector<16x64xf32>
    %137 = math.exp %136 : vector<16x64xf32>
    %cst_80 = arith.constant 1.000000e+00 : f32
    %138 = vector.broadcast %cst_80 : f32 to vector<16x64xf32>
    %139 = arith.addf %138, %137 : vector<16x64xf32>
    %140 = arith.divf %138, %139 : vector<16x64xf32>
    %141 = vector.extract_strided_slice %134 {offsets = [0, 64], sizes = [16, 64], strides = [1, 1]} : vector<16x256xf32> to vector<16x64xf32>
    %142 = arith.negf %141 : vector<16x64xf32>
    %143 = math.exp %142 : vector<16x64xf32>
    %cst_81 = arith.constant 1.000000e+00 : f32
    %144 = vector.broadcast %cst_81 : f32 to vector<16x64xf32>
    %145 = arith.addf %144, %143 : vector<16x64xf32>
    %146 = arith.divf %144, %145 : vector<16x64xf32>
    %147 = vector.extract_strided_slice %134 {offsets = [0, 128], sizes = [16, 64], strides = [1, 1]} : vector<16x256xf32> to vector<16x64xf32>
    %148 = math.tanh %147 : vector<16x64xf32>
    %149 = vector.extract_strided_slice %134 {offsets = [0, 192], sizes = [16, 64], strides = [1, 1]} : vector<16x256xf32> to vector<16x64xf32>
    %150 = arith.negf %149 : vector<16x64xf32>
    %151 = math.exp %150 : vector<16x64xf32>
    %cst_82 = arith.constant 1.000000e+00 : f32
    %152 = vector.broadcast %cst_82 : f32 to vector<16x64xf32>
    %153 = arith.addf %152, %151 : vector<16x64xf32>
    %154 = arith.divf %152, %153 : vector<16x64xf32>
    %155 = arith.mulf %146, %129 : vector<16x64xf32>
    %156 = arith.mulf %140, %148 : vector<16x64xf32>
    %157 = arith.addf %155, %156 : vector<16x64xf32>
    %158 = math.tanh %157 : vector<16x64xf32>
    %159 = arith.mulf %154, %158 : vector<16x64xf32>
    %c0_83 = arith.constant 0 : index
    %c0_84 = arith.constant 0 : index
    %160 = vector.load %arg12[%c0_83, %c0_84] : memref<16x64xf32, #tpu.memory_space<vmem>>, vector<16x64xf32>
    tpu.vector_store %arg12[%c0_83, %c0_84], %159 {strides = array<i32>} : memref<16x64xf32, #tpu.memory_space<vmem>>, vector<16x64xf32>,
    %c0_85 = arith.constant 0 : index
    %c0_86 = arith.constant 0 : index
    %161 = vector.load %arg13[%c0_85, %c0_86] : memref<16x64xf32, #tpu.memory_space<vmem>>, vector<16x64xf32>
    tpu.vector_store %arg13[%c0_85, %c0_86], %157 {strides = array<i32>} : memref<16x64xf32, #tpu.memory_space<vmem>>, vector<16x64xf32>,
    %162 = arith.index_cast %c1_i32 : i32 to index
    %c0_87 = arith.constant 0 : index
    %c0_88 = arith.constant 0 : index
    %163 = vector.load %arg7[%162, %c0_87, %c0_88] : memref<6x16x64xf32, #tpu.memory_space<vmem>>, vector<1x16x64xf32>
    %164 = vector.shape_cast %163 : vector<1x16x64xf32> to vector<16x64xf32>
    %165 = vector.shape_cast %159 : vector<16x64xf32> to vector<1x16x64xf32>
    tpu.vector_store %arg7[%162, %c0_87, %c0_88], %165 {strides = array<i32>} : memref<6x16x64xf32, #tpu.memory_space<vmem>>, vector<1x16x64xf32>,
    %c2_i32 = arith.constant 2 : i32
    %166 = arith.index_cast %c2_i32 : i32 to index
    %c0_89 = arith.constant 0 : index
    %c0_90 = arith.constant 0 : index
    %167 = vector.load %arg0[%166, %c0_89, %c0_90] : memref<6x16x32xf32, #tpu.memory_space<vmem>>, vector<1x16x32xf32>
    %168 = vector.shape_cast %167 : vector<1x16x32xf32> to vector<16x32xf32>
    %c0_91 = arith.constant 0 : index
    %c0_92 = arith.constant 0 : index
    %169 = vector.load %arg10[%c0_91, %c0_92] : memref<16x64xf32, #tpu.memory_space<vmem>>, vector<16x64xf32>
    %170 = tpu.concatenate %168, %169 in 1 : vector<16x32xf32>, vector<16x64xf32> -> vector<16x96xf32>
    %c0_93 = arith.constant 0 : index
    %c0_94 = arith.constant 0 : index
    %171 = vector.load %arg11[%c0_93, %c0_94] : memref<16x64xf32, #tpu.memory_space<vmem>>, vector<16x64xf32>
    %c0_95 = arith.constant 0 : index
    %c0_96 = arith.constant 0 : index
    %172 = vector.load %arg1[%c0_95, %c0_96] : memref<96x256xf32, #tpu.memory_space<vmem>>, vector<96x256xf32>
    %cst_97 = arith.constant dense<0.000000e+00> : vector<16x256xf32>
    %173 = tpu.matmul %170, %172, %cst_97 {dimension_numbers = #tpu.dot_dimension_numbers<[1], [0], [0], [1], [0, 0, 1, 1], [], []>} : vector<16x96xf32>, vector<96x256xf32>, vector<16x256xf32> -> vector<16x256xf32>
    %c0_98 = arith.constant 0 : index
    %c0_99 = arith.constant 0 : index
    %174 = vector.load %arg2[%c0_98, %c0_99] : memref<1x256xf32, #tpu.memory_space<vmem>>, vector<1x256xf32>
    %175 = vector.broadcast %174 : vector<1x256xf32> to vector<16x256xf32>
    %176 = arith.addf %173, %175 : vector<16x256xf32>
    %177 = vector.extract_strided_slice %176 {offsets = [0, 0], sizes = [16, 64], strides = [1, 1]} : vector<16x256xf32> to vector<16x64xf32>
    %178 = arith.negf %177 : vector<16x64xf32>
    %179 = math.exp %178 : vector<16x64xf32>
    %cst_100 = arith.constant 1.000000e+00 : f32
    %180 = vector.broadcast %cst_100 : f32 to vector<16x64xf32>
    %181 = arith.addf %180, %179 : vector<16x64xf32>
    %182 = arith.divf %180, %181 : vector<16x64xf32>
    %183 = vector.extract_strided_slice %176 {offsets = [0, 64], sizes = [16, 64], strides = [1, 1]} : vector<16x256xf32> to vector<16x64xf32>
    %184 = arith.negf %183 : vector<16x64xf32>
    %185 = math.exp %184 : vector<16x64xf32>
    %cst_101 = arith.constant 1.000000e+00 : f32
    %186 = vector.broadcast %cst_101 : f32 to vector<16x64xf32>
    %187 = arith.addf %186, %185 : vector<16x64xf32>
    %188 = arith.divf %186, %187 : vector<16x64xf32>
    %189 = vector.extract_strided_slice %176 {offsets = [0, 128], sizes = [16, 64], strides = [1, 1]} : vector<16x256xf32> to vector<16x64xf32>
    %190 = math.tanh %189 : vector<16x64xf32>
    %191 = vector.extract_strided_slice %176 {offsets = [0, 192], sizes = [16, 64], strides = [1, 1]} : vector<16x256xf32> to vector<16x64xf32>
    %192 = arith.negf %191 : vector<16x64xf32>
    %193 = math.exp %192 : vector<16x64xf32>
    %cst_102 = arith.constant 1.000000e+00 : f32
    %194 = vector.broadcast %cst_102 : f32 to vector<16x64xf32>
    %195 = arith.addf %194, %193 : vector<16x64xf32>
    %196 = arith.divf %194, %195 : vector<16x64xf32>
    %197 = arith.mulf %188, %171 : vector<16x64xf32>
    %198 = arith.mulf %182, %190 : vector<16x64xf32>
    %199 = arith.addf %197, %198 : vector<16x64xf32>
    %200 = math.tanh %199 : vector<16x64xf32>
    %201 = arith.mulf %196, %200 : vector<16x64xf32>
    %c0_103 = arith.constant 0 : index
    %c0_104 = arith.constant 0 : index
    %202 = vector.load %arg10[%c0_103, %c0_104] : memref<16x64xf32, #tpu.memory_space<vmem>>, vector<16x64xf32>
    tpu.vector_store %arg10[%c0_103, %c0_104], %201 {strides = array<i32>} : memref<16x64xf32, #tpu.memory_space<vmem>>, vector<16x64xf32>,
    %c0_105 = arith.constant 0 : index
    %c0_106 = arith.constant 0 : index
    %203 = vector.load %arg11[%c0_105, %c0_106] : memref<16x64xf32, #tpu.memory_space<vmem>>, vector<16x64xf32>
    tpu.vector_store %arg11[%c0_105, %c0_106], %199 {strides = array<i32>} : memref<16x64xf32, #tpu.memory_space<vmem>>, vector<16x64xf32>,
    %c0_107 = arith.constant 0 : index
    %c0_108 = arith.constant 0 : index
    %204 = vector.load %arg12[%c0_107, %c0_108] : memref<16x64xf32, #tpu.memory_space<vmem>>, vector<16x64xf32>
    %205 = tpu.concatenate %201, %204 in 1 : vector<16x64xf32>, vector<16x64xf32> -> vector<16x128xf32>
    %c0_109 = arith.constant 0 : index
    %c0_110 = arith.constant 0 : index
    %206 = vector.load %arg13[%c0_109, %c0_110] : memref<16x64xf32, #tpu.memory_space<vmem>>, vector<16x64xf32>
    %c0_111 = arith.constant 0 : index
    %c0_112 = arith.constant 0 : index
    %207 = vector.load %arg3[%c0_111, %c0_112] : memref<128x256xf32, #tpu.memory_space<vmem>>, vector<128x256xf32>
    %cst_113 = arith.constant dense<0.000000e+00> : vector<16x256xf32>
    %208 = tpu.matmul %205, %207, %cst_113 {dimension_numbers = #tpu.dot_dimension_numbers<[1], [0], [0], [1], [0, 0, 1, 1], [], []>} : vector<16x128xf32>, vector<128x256xf32>, vector<16x256xf32> -> vector<16x256xf32>
    %c0_114 = arith.constant 0 : index
    %c0_115 = arith.constant 0 : index
    %209 = vector.load %arg4[%c0_114, %c0_115] : memref<1x256xf32, #tpu.memory_space<vmem>>, vector<1x256xf32>
    %210 = vector.broadcast %209 : vector<1x256xf32> to vector<16x256xf32>
    %211 = arith.addf %208, %210 : vector<16x256xf32>
    %212 = vector.extract_strided_slice %211 {offsets = [0, 0], sizes = [16, 64], strides = [1, 1]} : vector<16x256xf32> to vector<16x64xf32>
    %213 = arith.negf %212 : vector<16x64xf32>
    %214 = math.exp %213 : vector<16x64xf32>
    %cst_116 = arith.constant 1.000000e+00 : f32
    %215 = vector.broadcast %cst_116 : f32 to vector<16x64xf32>
    %216 = arith.addf %215, %214 : vector<16x64xf32>
    %217 = arith.divf %215, %216 : vector<16x64xf32>
    %218 = vector.extract_strided_slice %211 {offsets = [0, 64], sizes = [16, 64], strides = [1, 1]} : vector<16x256xf32> to vector<16x64xf32>
    %219 = arith.negf %218 : vector<16x64xf32>
    %220 = math.exp %219 : vector<16x64xf32>
    %cst_117 = arith.constant 1.000000e+00 : f32
    %221 = vector.broadcast %cst_117 : f32 to vector<16x64xf32>
    %222 = arith.addf %221, %220 : vector<16x64xf32>
    %223 = arith.divf %221, %222 : vector<16x64xf32>
    %224 = vector.extract_strided_slice %211 {offsets = [0, 128], sizes = [16, 64], strides = [1, 1]} : vector<16x256xf32> to vector<16x64xf32>
    %225 = math.tanh %224 : vector<16x64xf32>
    %226 = vector.extract_strided_slice %211 {offsets = [0, 192], sizes = [16, 64], strides = [1, 1]} : vector<16x256xf32> to vector<16x64xf32>
    %227 = arith.negf %226 : vector<16x64xf32>
    %228 = math.exp %227 : vector<16x64xf32>
    %cst_118 = arith.constant 1.000000e+00 : f32
    %229 = vector.broadcast %cst_118 : f32 to vector<16x64xf32>
    %230 = arith.addf %229, %228 : vector<16x64xf32>
    %231 = arith.divf %229, %230 : vector<16x64xf32>
    %232 = arith.mulf %223, %206 : vector<16x64xf32>
    %233 = arith.mulf %217, %225 : vector<16x64xf32>
    %234 = arith.addf %232, %233 : vector<16x64xf32>
    %235 = math.tanh %234 : vector<16x64xf32>
    %236 = arith.mulf %231, %235 : vector<16x64xf32>
    %c0_119 = arith.constant 0 : index
    %c0_120 = arith.constant 0 : index
    %237 = vector.load %arg12[%c0_119, %c0_120] : memref<16x64xf32, #tpu.memory_space<vmem>>, vector<16x64xf32>
    tpu.vector_store %arg12[%c0_119, %c0_120], %236 {strides = array<i32>} : memref<16x64xf32, #tpu.memory_space<vmem>>, vector<16x64xf32>,
    %c0_121 = arith.constant 0 : index
    %c0_122 = arith.constant 0 : index
    %238 = vector.load %arg13[%c0_121, %c0_122] : memref<16x64xf32, #tpu.memory_space<vmem>>, vector<16x64xf32>
    tpu.vector_store %arg13[%c0_121, %c0_122], %234 {strides = array<i32>} : memref<16x64xf32, #tpu.memory_space<vmem>>, vector<16x64xf32>,
    %239 = arith.index_cast %c2_i32 : i32 to index
    %c0_123 = arith.constant 0 : index
    %c0_124 = arith.constant 0 : index
    %240 = vector.load %arg7[%239, %c0_123, %c0_124] : memref<6x16x64xf32, #tpu.memory_space<vmem>>, vector<1x16x64xf32>
    %241 = vector.shape_cast %240 : vector<1x16x64xf32> to vector<16x64xf32>
    %242 = vector.shape_cast %236 : vector<16x64xf32> to vector<1x16x64xf32>
    tpu.vector_store %arg7[%239, %c0_123, %c0_124], %242 {strides = array<i32>} : memref<6x16x64xf32, #tpu.memory_space<vmem>>, vector<1x16x64xf32>,
    %c3_i32 = arith.constant 3 : i32
    %243 = arith.index_cast %c3_i32 : i32 to index
    %c0_125 = arith.constant 0 : index
    %c0_126 = arith.constant 0 : index
    %244 = vector.load %arg0[%243, %c0_125, %c0_126] : memref<6x16x32xf32, #tpu.memory_space<vmem>>, vector<1x16x32xf32>
    %245 = vector.shape_cast %244 : vector<1x16x32xf32> to vector<16x32xf32>
    %c0_127 = arith.constant 0 : index
    %c0_128 = arith.constant 0 : index
    %246 = vector.load %arg10[%c0_127, %c0_128] : memref<16x64xf32, #tpu.memory_space<vmem>>, vector<16x64xf32>
    %247 = tpu.concatenate %245, %246 in 1 : vector<16x32xf32>, vector<16x64xf32> -> vector<16x96xf32>
    %c0_129 = arith.constant 0 : index
    %c0_130 = arith.constant 0 : index
    %248 = vector.load %arg11[%c0_129, %c0_130] : memref<16x64xf32, #tpu.memory_space<vmem>>, vector<16x64xf32>
    %c0_131 = arith.constant 0 : index
    %c0_132 = arith.constant 0 : index
    %249 = vector.load %arg1[%c0_131, %c0_132] : memref<96x256xf32, #tpu.memory_space<vmem>>, vector<96x256xf32>
    %cst_133 = arith.constant dense<0.000000e+00> : vector<16x256xf32>
    %250 = tpu.matmul %247, %249, %cst_133 {dimension_numbers = #tpu.dot_dimension_numbers<[1], [0], [0], [1], [0, 0, 1, 1], [], []>} : vector<16x96xf32>, vector<96x256xf32>, vector<16x256xf32> -> vector<16x256xf32>
    %c0_134 = arith.constant 0 : index
    %c0_135 = arith.constant 0 : index
    %251 = vector.load %arg2[%c0_134, %c0_135] : memref<1x256xf32, #tpu.memory_space<vmem>>, vector<1x256xf32>
    %252 = vector.broadcast %251 : vector<1x256xf32> to vector<16x256xf32>
    %253 = arith.addf %250, %252 : vector<16x256xf32>
    %254 = vector.extract_strided_slice %253 {offsets = [0, 0], sizes = [16, 64], strides = [1, 1]} : vector<16x256xf32> to vector<16x64xf32>
    %255 = arith.negf %254 : vector<16x64xf32>
    %256 = math.exp %255 : vector<16x64xf32>
    %cst_136 = arith.constant 1.000000e+00 : f32
    %257 = vector.broadcast %cst_136 : f32 to vector<16x64xf32>
    %258 = arith.addf %257, %256 : vector<16x64xf32>
    %259 = arith.divf %257, %258 : vector<16x64xf32>
    %260 = vector.extract_strided_slice %253 {offsets = [0, 64], sizes = [16, 64], strides = [1, 1]} : vector<16x256xf32> to vector<16x64xf32>
    %261 = arith.negf %260 : vector<16x64xf32>
    %262 = math.exp %261 : vector<16x64xf32>
    %cst_137 = arith.constant 1.000000e+00 : f32
    %263 = vector.broadcast %cst_137 : f32 to vector<16x64xf32>
    %264 = arith.addf %263, %262 : vector<16x64xf32>
    %265 = arith.divf %263, %264 : vector<16x64xf32>
    %266 = vector.extract_strided_slice %253 {offsets = [0, 128], sizes = [16, 64], strides = [1, 1]} : vector<16x256xf32> to vector<16x64xf32>
    %267 = math.tanh %266 : vector<16x64xf32>
    %268 = vector.extract_strided_slice %253 {offsets = [0, 192], sizes = [16, 64], strides = [1, 1]} : vector<16x256xf32> to vector<16x64xf32>
    %269 = arith.negf %268 : vector<16x64xf32>
    %270 = math.exp %269 : vector<16x64xf32>
    %cst_138 = arith.constant 1.000000e+00 : f32
    %271 = vector.broadcast %cst_138 : f32 to vector<16x64xf32>
    %272 = arith.addf %271, %270 : vector<16x64xf32>
    %273 = arith.divf %271, %272 : vector<16x64xf32>
    %274 = arith.mulf %265, %248 : vector<16x64xf32>
    %275 = arith.mulf %259, %267 : vector<16x64xf32>
    %276 = arith.addf %274, %275 : vector<16x64xf32>
    %277 = math.tanh %276 : vector<16x64xf32>
    %278 = arith.mulf %273, %277 : vector<16x64xf32>
    %c0_139 = arith.constant 0 : index
    %c0_140 = arith.constant 0 : index
    %279 = vector.load %arg10[%c0_139, %c0_140] : memref<16x64xf32, #tpu.memory_space<vmem>>, vector<16x64xf32>
    tpu.vector_store %arg10[%c0_139, %c0_140], %278 {strides = array<i32>} : memref<16x64xf32, #tpu.memory_space<vmem>>, vector<16x64xf32>,
    %c0_141 = arith.constant 0 : index
    %c0_142 = arith.constant 0 : index
    %280 = vector.load %arg11[%c0_141, %c0_142] : memref<16x64xf32, #tpu.memory_space<vmem>>, vector<16x64xf32>
    tpu.vector_store %arg11[%c0_141, %c0_142], %276 {strides = array<i32>} : memref<16x64xf32, #tpu.memory_space<vmem>>, vector<16x64xf32>,
    %c0_143 = arith.constant 0 : index
    %c0_144 = arith.constant 0 : index
    %281 = vector.load %arg12[%c0_143, %c0_144] : memref<16x64xf32, #tpu.memory_space<vmem>>, vector<16x64xf32>
    %282 = tpu.concatenate %278, %281 in 1 : vector<16x64xf32>, vector<16x64xf32> -> vector<16x128xf32>
    %c0_145 = arith.constant 0 : index
    %c0_146 = arith.constant 0 : index
    %283 = vector.load %arg13[%c0_145, %c0_146] : memref<16x64xf32, #tpu.memory_space<vmem>>, vector<16x64xf32>
    %c0_147 = arith.constant 0 : index
    %c0_148 = arith.constant 0 : index
    %284 = vector.load %arg3[%c0_147, %c0_148] : memref<128x256xf32, #tpu.memory_space<vmem>>, vector<128x256xf32>
    %cst_149 = arith.constant dense<0.000000e+00> : vector<16x256xf32>
    %285 = tpu.matmul %282, %284, %cst_149 {dimension_numbers = #tpu.dot_dimension_numbers<[1], [0], [0], [1], [0, 0, 1, 1], [], []>} : vector<16x128xf32>, vector<128x256xf32>, vector<16x256xf32> -> vector<16x256xf32>
    %c0_150 = arith.constant 0 : index
    %c0_151 = arith.constant 0 : index
    %286 = vector.load %arg4[%c0_150, %c0_151] : memref<1x256xf32, #tpu.memory_space<vmem>>, vector<1x256xf32>
    %287 = vector.broadcast %286 : vector<1x256xf32> to vector<16x256xf32>
    %288 = arith.addf %285, %287 : vector<16x256xf32>
    %289 = vector.extract_strided_slice %288 {offsets = [0, 0], sizes = [16, 64], strides = [1, 1]} : vector<16x256xf32> to vector<16x64xf32>
    %290 = arith.negf %289 : vector<16x64xf32>
    %291 = math.exp %290 : vector<16x64xf32>
    %cst_152 = arith.constant 1.000000e+00 : f32
    %292 = vector.broadcast %cst_152 : f32 to vector<16x64xf32>
    %293 = arith.addf %292, %291 : vector<16x64xf32>
    %294 = arith.divf %292, %293 : vector<16x64xf32>
    %295 = vector.extract_strided_slice %288 {offsets = [0, 64], sizes = [16, 64], strides = [1, 1]} : vector<16x256xf32> to vector<16x64xf32>
    %296 = arith.negf %295 : vector<16x64xf32>
    %297 = math.exp %296 : vector<16x64xf32>
    %cst_153 = arith.constant 1.000000e+00 : f32
    %298 = vector.broadcast %cst_153 : f32 to vector<16x64xf32>
    %299 = arith.addf %298, %297 : vector<16x64xf32>
    %300 = arith.divf %298, %299 : vector<16x64xf32>
    %301 = vector.extract_strided_slice %288 {offsets = [0, 128], sizes = [16, 64], strides = [1, 1]} : vector<16x256xf32> to vector<16x64xf32>
    %302 = math.tanh %301 : vector<16x64xf32>
    %303 = vector.extract_strided_slice %288 {offsets = [0, 192], sizes = [16, 64], strides = [1, 1]} : vector<16x256xf32> to vector<16x64xf32>
    %304 = arith.negf %303 : vector<16x64xf32>
    %305 = math.exp %304 : vector<16x64xf32>
    %cst_154 = arith.constant 1.000000e+00 : f32
    %306 = vector.broadcast %cst_154 : f32 to vector<16x64xf32>
    %307 = arith.addf %306, %305 : vector<16x64xf32>
    %308 = arith.divf %306, %307 : vector<16x64xf32>
    %309 = arith.mulf %300, %283 : vector<16x64xf32>
    %310 = arith.mulf %294, %302 : vector<16x64xf32>
    %311 = arith.addf %309, %310 : vector<16x64xf32>
    %312 = math.tanh %311 : vector<16x64xf32>
    %313 = arith.mulf %308, %312 : vector<16x64xf32>
    %c0_155 = arith.constant 0 : index
    %c0_156 = arith.constant 0 : index
    %314 = vector.load %arg12[%c0_155, %c0_156] : memref<16x64xf32, #tpu.memory_space<vmem>>, vector<16x64xf32>
    tpu.vector_store %arg12[%c0_155, %c0_156], %313 {strides = array<i32>} : memref<16x64xf32, #tpu.memory_space<vmem>>, vector<16x64xf32>,
    %c0_157 = arith.constant 0 : index
    %c0_158 = arith.constant 0 : index
    %315 = vector.load %arg13[%c0_157, %c0_158] : memref<16x64xf32, #tpu.memory_space<vmem>>, vector<16x64xf32>
    tpu.vector_store %arg13[%c0_157, %c0_158], %311 {strides = array<i32>} : memref<16x64xf32, #tpu.memory_space<vmem>>, vector<16x64xf32>,
    %316 = arith.index_cast %c3_i32 : i32 to index
    %c0_159 = arith.constant 0 : index
    %c0_160 = arith.constant 0 : index
    %317 = vector.load %arg7[%316, %c0_159, %c0_160] : memref<6x16x64xf32, #tpu.memory_space<vmem>>, vector<1x16x64xf32>
    %318 = vector.shape_cast %317 : vector<1x16x64xf32> to vector<16x64xf32>
    %319 = vector.shape_cast %313 : vector<16x64xf32> to vector<1x16x64xf32>
    tpu.vector_store %arg7[%316, %c0_159, %c0_160], %319 {strides = array<i32>} : memref<6x16x64xf32, #tpu.memory_space<vmem>>, vector<1x16x64xf32>,
    %c4_i32 = arith.constant 4 : i32
    %320 = arith.index_cast %c4_i32 : i32 to index
    %c0_161 = arith.constant 0 : index
    %c0_162 = arith.constant 0 : index
    %321 = vector.load %arg0[%320, %c0_161, %c0_162] : memref<6x16x32xf32, #tpu.memory_space<vmem>>, vector<1x16x32xf32>
    %322 = vector.shape_cast %321 : vector<1x16x32xf32> to vector<16x32xf32>
    %c0_163 = arith.constant 0 : index
    %c0_164 = arith.constant 0 : index
    %323 = vector.load %arg10[%c0_163, %c0_164] : memref<16x64xf32, #tpu.memory_space<vmem>>, vector<16x64xf32>
    %324 = tpu.concatenate %322, %323 in 1 : vector<16x32xf32>, vector<16x64xf32> -> vector<16x96xf32>
    %c0_165 = arith.constant 0 : index
    %c0_166 = arith.constant 0 : index
    %325 = vector.load %arg11[%c0_165, %c0_166] : memref<16x64xf32, #tpu.memory_space<vmem>>, vector<16x64xf32>
    %c0_167 = arith.constant 0 : index
    %c0_168 = arith.constant 0 : index
    %326 = vector.load %arg1[%c0_167, %c0_168] : memref<96x256xf32, #tpu.memory_space<vmem>>, vector<96x256xf32>
    %cst_169 = arith.constant dense<0.000000e+00> : vector<16x256xf32>
    %327 = tpu.matmul %324, %326, %cst_169 {dimension_numbers = #tpu.dot_dimension_numbers<[1], [0], [0], [1], [0, 0, 1, 1], [], []>} : vector<16x96xf32>, vector<96x256xf32>, vector<16x256xf32> -> vector<16x256xf32>
    %c0_170 = arith.constant 0 : index
    %c0_171 = arith.constant 0 : index
    %328 = vector.load %arg2[%c0_170, %c0_171] : memref<1x256xf32, #tpu.memory_space<vmem>>, vector<1x256xf32>
    %329 = vector.broadcast %328 : vector<1x256xf32> to vector<16x256xf32>
    %330 = arith.addf %327, %329 : vector<16x256xf32>
    %331 = vector.extract_strided_slice %330 {offsets = [0, 0], sizes = [16, 64], strides = [1, 1]} : vector<16x256xf32> to vector<16x64xf32>
    %332 = arith.negf %331 : vector<16x64xf32>
    %333 = math.exp %332 : vector<16x64xf32>
    %cst_172 = arith.constant 1.000000e+00 : f32
    %334 = vector.broadcast %cst_172 : f32 to vector<16x64xf32>
    %335 = arith.addf %334, %333 : vector<16x64xf32>
    %336 = arith.divf %334, %335 : vector<16x64xf32>
    %337 = vector.extract_strided_slice %330 {offsets = [0, 64], sizes = [16, 64], strides = [1, 1]} : vector<16x256xf32> to vector<16x64xf32>
    %338 = arith.negf %337 : vector<16x64xf32>
    %339 = math.exp %338 : vector<16x64xf32>
    %cst_173 = arith.constant 1.000000e+00 : f32
    %340 = vector.broadcast %cst_173 : f32 to vector<16x64xf32>
    %341 = arith.addf %340, %339 : vector<16x64xf32>
    %342 = arith.divf %340, %341 : vector<16x64xf32>
    %343 = vector.extract_strided_slice %330 {offsets = [0, 128], sizes = [16, 64], strides = [1, 1]} : vector<16x256xf32> to vector<16x64xf32>
    %344 = math.tanh %343 : vector<16x64xf32>
    %345 = vector.extract_strided_slice %330 {offsets = [0, 192], sizes = [16, 64], strides = [1, 1]} : vector<16x256xf32> to vector<16x64xf32>
    %346 = arith.negf %345 : vector<16x64xf32>
    %347 = math.exp %346 : vector<16x64xf32>
    %cst_174 = arith.constant 1.000000e+00 : f32
    %348 = vector.broadcast %cst_174 : f32 to vector<16x64xf32>
    %349 = arith.addf %348, %347 : vector<16x64xf32>
    %350 = arith.divf %348, %349 : vector<16x64xf32>
    %351 = arith.mulf %342, %325 : vector<16x64xf32>
    %352 = arith.mulf %336, %344 : vector<16x64xf32>
    %353 = arith.addf %351, %352 : vector<16x64xf32>
    %354 = math.tanh %353 : vector<16x64xf32>
    %355 = arith.mulf %350, %354 : vector<16x64xf32>
    %c0_175 = arith.constant 0 : index
    %c0_176 = arith.constant 0 : index
    %356 = vector.load %arg10[%c0_175, %c0_176] : memref<16x64xf32, #tpu.memory_space<vmem>>, vector<16x64xf32>
    tpu.vector_store %arg10[%c0_175, %c0_176], %355 {strides = array<i32>} : memref<16x64xf32, #tpu.memory_space<vmem>>, vector<16x64xf32>,
    %c0_177 = arith.constant 0 : index
    %c0_178 = arith.constant 0 : index
    %357 = vector.load %arg11[%c0_177, %c0_178] : memref<16x64xf32, #tpu.memory_space<vmem>>, vector<16x64xf32>
    tpu.vector_store %arg11[%c0_177, %c0_178], %353 {strides = array<i32>} : memref<16x64xf32, #tpu.memory_space<vmem>>, vector<16x64xf32>,
    %c0_179 = arith.constant 0 : index
    %c0_180 = arith.constant 0 : index
    %358 = vector.load %arg12[%c0_179, %c0_180] : memref<16x64xf32, #tpu.memory_space<vmem>>, vector<16x64xf32>
    %359 = tpu.concatenate %355, %358 in 1 : vector<16x64xf32>, vector<16x64xf32> -> vector<16x128xf32>
    %c0_181 = arith.constant 0 : index
    %c0_182 = arith.constant 0 : index
    %360 = vector.load %arg13[%c0_181, %c0_182] : memref<16x64xf32, #tpu.memory_space<vmem>>, vector<16x64xf32>
    %c0_183 = arith.constant 0 : index
    %c0_184 = arith.constant 0 : index
    %361 = vector.load %arg3[%c0_183, %c0_184] : memref<128x256xf32, #tpu.memory_space<vmem>>, vector<128x256xf32>
    %cst_185 = arith.constant dense<0.000000e+00> : vector<16x256xf32>
    %362 = tpu.matmul %359, %361, %cst_185 {dimension_numbers = #tpu.dot_dimension_numbers<[1], [0], [0], [1], [0, 0, 1, 1], [], []>} : vector<16x128xf32>, vector<128x256xf32>, vector<16x256xf32> -> vector<16x256xf32>
    %c0_186 = arith.constant 0 : index
    %c0_187 = arith.constant 0 : index
    %363 = vector.load %arg4[%c0_186, %c0_187] : memref<1x256xf32, #tpu.memory_space<vmem>>, vector<1x256xf32>
    %364 = vector.broadcast %363 : vector<1x256xf32> to vector<16x256xf32>
    %365 = arith.addf %362, %364 : vector<16x256xf32>
    %366 = vector.extract_strided_slice %365 {offsets = [0, 0], sizes = [16, 64], strides = [1, 1]} : vector<16x256xf32> to vector<16x64xf32>
    %367 = arith.negf %366 : vector<16x64xf32>
    %368 = math.exp %367 : vector<16x64xf32>
    %cst_188 = arith.constant 1.000000e+00 : f32
    %369 = vector.broadcast %cst_188 : f32 to vector<16x64xf32>
    %370 = arith.addf %369, %368 : vector<16x64xf32>
    %371 = arith.divf %369, %370 : vector<16x64xf32>
    %372 = vector.extract_strided_slice %365 {offsets = [0, 64], sizes = [16, 64], strides = [1, 1]} : vector<16x256xf32> to vector<16x64xf32>
    %373 = arith.negf %372 : vector<16x64xf32>
    %374 = math.exp %373 : vector<16x64xf32>
    %cst_189 = arith.constant 1.000000e+00 : f32
    %375 = vector.broadcast %cst_189 : f32 to vector<16x64xf32>
    %376 = arith.addf %375, %374 : vector<16x64xf32>
    %377 = arith.divf %375, %376 : vector<16x64xf32>
    %378 = vector.extract_strided_slice %365 {offsets = [0, 128], sizes = [16, 64], strides = [1, 1]} : vector<16x256xf32> to vector<16x64xf32>
    %379 = math.tanh %378 : vector<16x64xf32>
    %380 = vector.extract_strided_slice %365 {offsets = [0, 192], sizes = [16, 64], strides = [1, 1]} : vector<16x256xf32> to vector<16x64xf32>
    %381 = arith.negf %380 : vector<16x64xf32>
    %382 = math.exp %381 : vector<16x64xf32>
    %cst_190 = arith.constant 1.000000e+00 : f32
    %383 = vector.broadcast %cst_190 : f32 to vector<16x64xf32>
    %384 = arith.addf %383, %382 : vector<16x64xf32>
    %385 = arith.divf %383, %384 : vector<16x64xf32>
    %386 = arith.mulf %377, %360 : vector<16x64xf32>
    %387 = arith.mulf %371, %379 : vector<16x64xf32>
    %388 = arith.addf %386, %387 : vector<16x64xf32>
    %389 = math.tanh %388 : vector<16x64xf32>
    %390 = arith.mulf %385, %389 : vector<16x64xf32>
    %c0_191 = arith.constant 0 : index
    %c0_192 = arith.constant 0 : index
    %391 = vector.load %arg12[%c0_191, %c0_192] : memref<16x64xf32, #tpu.memory_space<vmem>>, vector<16x64xf32>
    tpu.vector_store %arg12[%c0_191, %c0_192], %390 {strides = array<i32>} : memref<16x64xf32, #tpu.memory_space<vmem>>, vector<16x64xf32>,
    %c0_193 = arith.constant 0 : index
    %c0_194 = arith.constant 0 : index
    %392 = vector.load %arg13[%c0_193, %c0_194] : memref<16x64xf32, #tpu.memory_space<vmem>>, vector<16x64xf32>
    tpu.vector_store %arg13[%c0_193, %c0_194], %388 {strides = array<i32>} : memref<16x64xf32, #tpu.memory_space<vmem>>, vector<16x64xf32>,
    %393 = arith.index_cast %c4_i32 : i32 to index
    %c0_195 = arith.constant 0 : index
    %c0_196 = arith.constant 0 : index
    %394 = vector.load %arg7[%393, %c0_195, %c0_196] : memref<6x16x64xf32, #tpu.memory_space<vmem>>, vector<1x16x64xf32>
    %395 = vector.shape_cast %394 : vector<1x16x64xf32> to vector<16x64xf32>
    %396 = vector.shape_cast %390 : vector<16x64xf32> to vector<1x16x64xf32>
    tpu.vector_store %arg7[%393, %c0_195, %c0_196], %396 {strides = array<i32>} : memref<6x16x64xf32, #tpu.memory_space<vmem>>, vector<1x16x64xf32>,
    %c5_i32 = arith.constant 5 : i32
    %397 = arith.index_cast %c5_i32 : i32 to index
    %c0_197 = arith.constant 0 : index
    %c0_198 = arith.constant 0 : index
    %398 = vector.load %arg0[%397, %c0_197, %c0_198] : memref<6x16x32xf32, #tpu.memory_space<vmem>>, vector<1x16x32xf32>
    %399 = vector.shape_cast %398 : vector<1x16x32xf32> to vector<16x32xf32>
    %c0_199 = arith.constant 0 : index
    %c0_200 = arith.constant 0 : index
    %400 = vector.load %arg10[%c0_199, %c0_200] : memref<16x64xf32, #tpu.memory_space<vmem>>, vector<16x64xf32>
    %401 = tpu.concatenate %399, %400 in 1 : vector<16x32xf32>, vector<16x64xf32> -> vector<16x96xf32>
    %c0_201 = arith.constant 0 : index
    %c0_202 = arith.constant 0 : index
    %402 = vector.load %arg11[%c0_201, %c0_202] : memref<16x64xf32, #tpu.memory_space<vmem>>, vector<16x64xf32>
    %c0_203 = arith.constant 0 : index
    %c0_204 = arith.constant 0 : index
    %403 = vector.load %arg1[%c0_203, %c0_204] : memref<96x256xf32, #tpu.memory_space<vmem>>, vector<96x256xf32>
    %cst_205 = arith.constant dense<0.000000e+00> : vector<16x256xf32>
    %404 = tpu.matmul %401, %403, %cst_205 {dimension_numbers = #tpu.dot_dimension_numbers<[1], [0], [0], [1], [0, 0, 1, 1], [], []>} : vector<16x96xf32>, vector<96x256xf32>, vector<16x256xf32> -> vector<16x256xf32>
    %c0_206 = arith.constant 0 : index
    %c0_207 = arith.constant 0 : index
    %405 = vector.load %arg2[%c0_206, %c0_207] : memref<1x256xf32, #tpu.memory_space<vmem>>, vector<1x256xf32>
    %406 = vector.broadcast %405 : vector<1x256xf32> to vector<16x256xf32>
    %407 = arith.addf %404, %406 : vector<16x256xf32>
    %408 = vector.extract_strided_slice %407 {offsets = [0, 0], sizes = [16, 64], strides = [1, 1]} : vector<16x256xf32> to vector<16x64xf32>
    %409 = arith.negf %408 : vector<16x64xf32>
    %410 = math.exp %409 : vector<16x64xf32>
    %cst_208 = arith.constant 1.000000e+00 : f32
    %411 = vector.broadcast %cst_208 : f32 to vector<16x64xf32>
    %412 = arith.addf %411, %410 : vector<16x64xf32>
    %413 = arith.divf %411, %412 : vector<16x64xf32>
    %414 = vector.extract_strided_slice %407 {offsets = [0, 64], sizes = [16, 64], strides = [1, 1]} : vector<16x256xf32> to vector<16x64xf32>
    %415 = arith.negf %414 : vector<16x64xf32>
    %416 = math.exp %415 : vector<16x64xf32>
    %cst_209 = arith.constant 1.000000e+00 : f32
    %417 = vector.broadcast %cst_209 : f32 to vector<16x64xf32>
    %418 = arith.addf %417, %416 : vector<16x64xf32>
    %419 = arith.divf %417, %418 : vector<16x64xf32>
    %420 = vector.extract_strided_slice %407 {offsets = [0, 128], sizes = [16, 64], strides = [1, 1]} : vector<16x256xf32> to vector<16x64xf32>
    %421 = math.tanh %420 : vector<16x64xf32>
    %422 = vector.extract_strided_slice %407 {offsets = [0, 192], sizes = [16, 64], strides = [1, 1]} : vector<16x256xf32> to vector<16x64xf32>
    %423 = arith.negf %422 : vector<16x64xf32>
    %424 = math.exp %423 : vector<16x64xf32>
    %cst_210 = arith.constant 1.000000e+00 : f32
    %425 = vector.broadcast %cst_210 : f32 to vector<16x64xf32>
    %426 = arith.addf %425, %424 : vector<16x64xf32>
    %427 = arith.divf %425, %426 : vector<16x64xf32>
    %428 = arith.mulf %419, %402 : vector<16x64xf32>
    %429 = arith.mulf %413, %421 : vector<16x64xf32>
    %430 = arith.addf %428, %429 : vector<16x64xf32>
    %431 = math.tanh %430 : vector<16x64xf32>
    %432 = arith.mulf %427, %431 : vector<16x64xf32>
    %c0_211 = arith.constant 0 : index
    %c0_212 = arith.constant 0 : index
    %433 = vector.load %arg10[%c0_211, %c0_212] : memref<16x64xf32, #tpu.memory_space<vmem>>, vector<16x64xf32>
    tpu.vector_store %arg10[%c0_211, %c0_212], %432 {strides = array<i32>} : memref<16x64xf32, #tpu.memory_space<vmem>>, vector<16x64xf32>,
    %c0_213 = arith.constant 0 : index
    %c0_214 = arith.constant 0 : index
    %434 = vector.load %arg11[%c0_213, %c0_214] : memref<16x64xf32, #tpu.memory_space<vmem>>, vector<16x64xf32>
    tpu.vector_store %arg11[%c0_213, %c0_214], %430 {strides = array<i32>} : memref<16x64xf32, #tpu.memory_space<vmem>>, vector<16x64xf32>,
    %c0_215 = arith.constant 0 : index
    %c0_216 = arith.constant 0 : index
    %435 = vector.load %arg12[%c0_215, %c0_216] : memref<16x64xf32, #tpu.memory_space<vmem>>, vector<16x64xf32>
    %436 = tpu.concatenate %432, %435 in 1 : vector<16x64xf32>, vector<16x64xf32> -> vector<16x128xf32>
    %c0_217 = arith.constant 0 : index
    %c0_218 = arith.constant 0 : index
    %437 = vector.load %arg13[%c0_217, %c0_218] : memref<16x64xf32, #tpu.memory_space<vmem>>, vector<16x64xf32>
    %c0_219 = arith.constant 0 : index
    %c0_220 = arith.constant 0 : index
    %438 = vector.load %arg3[%c0_219, %c0_220] : memref<128x256xf32, #tpu.memory_space<vmem>>, vector<128x256xf32>
    %cst_221 = arith.constant dense<0.000000e+00> : vector<16x256xf32>
    %439 = tpu.matmul %436, %438, %cst_221 {dimension_numbers = #tpu.dot_dimension_numbers<[1], [0], [0], [1], [0, 0, 1, 1], [], []>} : vector<16x128xf32>, vector<128x256xf32>, vector<16x256xf32> -> vector<16x256xf32>
    %c0_222 = arith.constant 0 : index
    %c0_223 = arith.constant 0 : index
    %440 = vector.load %arg4[%c0_222, %c0_223] : memref<1x256xf32, #tpu.memory_space<vmem>>, vector<1x256xf32>
    %441 = vector.broadcast %440 : vector<1x256xf32> to vector<16x256xf32>
    %442 = arith.addf %439, %441 : vector<16x256xf32>
    %443 = vector.extract_strided_slice %442 {offsets = [0, 0], sizes = [16, 64], strides = [1, 1]} : vector<16x256xf32> to vector<16x64xf32>
    %444 = arith.negf %443 : vector<16x64xf32>
    %445 = math.exp %444 : vector<16x64xf32>
    %cst_224 = arith.constant 1.000000e+00 : f32
    %446 = vector.broadcast %cst_224 : f32 to vector<16x64xf32>
    %447 = arith.addf %446, %445 : vector<16x64xf32>
    %448 = arith.divf %446, %447 : vector<16x64xf32>
    %449 = vector.extract_strided_slice %442 {offsets = [0, 64], sizes = [16, 64], strides = [1, 1]} : vector<16x256xf32> to vector<16x64xf32>
    %450 = arith.negf %449 : vector<16x64xf32>
    %451 = math.exp %450 : vector<16x64xf32>
    %cst_225 = arith.constant 1.000000e+00 : f32
    %452 = vector.broadcast %cst_225 : f32 to vector<16x64xf32>
    %453 = arith.addf %452, %451 : vector<16x64xf32>
    %454 = arith.divf %452, %453 : vector<16x64xf32>
    %455 = vector.extract_strided_slice %442 {offsets = [0, 128], sizes = [16, 64], strides = [1, 1]} : vector<16x256xf32> to vector<16x64xf32>
    %456 = math.tanh %455 : vector<16x64xf32>
    %457 = vector.extract_strided_slice %442 {offsets = [0, 192], sizes = [16, 64], strides = [1, 1]} : vector<16x256xf32> to vector<16x64xf32>
    %458 = arith.negf %457 : vector<16x64xf32>
    %459 = math.exp %458 : vector<16x64xf32>
    %cst_226 = arith.constant 1.000000e+00 : f32
    %460 = vector.broadcast %cst_226 : f32 to vector<16x64xf32>
    %461 = arith.addf %460, %459 : vector<16x64xf32>
    %462 = arith.divf %460, %461 : vector<16x64xf32>
    %463 = arith.mulf %454, %437 : vector<16x64xf32>
    %464 = arith.mulf %448, %456 : vector<16x64xf32>
    %465 = arith.addf %463, %464 : vector<16x64xf32>
    %466 = math.tanh %465 : vector<16x64xf32>
    %467 = arith.mulf %462, %466 : vector<16x64xf32>
    %c0_227 = arith.constant 0 : index
    %c0_228 = arith.constant 0 : index
    %468 = vector.load %arg12[%c0_227, %c0_228] : memref<16x64xf32, #tpu.memory_space<vmem>>, vector<16x64xf32>
    tpu.vector_store %arg12[%c0_227, %c0_228], %467 {strides = array<i32>} : memref<16x64xf32, #tpu.memory_space<vmem>>, vector<16x64xf32>,
    %c0_229 = arith.constant 0 : index
    %c0_230 = arith.constant 0 : index
    %469 = vector.load %arg13[%c0_229, %c0_230] : memref<16x64xf32, #tpu.memory_space<vmem>>, vector<16x64xf32>
    tpu.vector_store %arg13[%c0_229, %c0_230], %465 {strides = array<i32>} : memref<16x64xf32, #tpu.memory_space<vmem>>, vector<16x64xf32>,
    %470 = arith.index_cast %c5_i32 : i32 to index
    %c0_231 = arith.constant 0 : index
    %c0_232 = arith.constant 0 : index
    %471 = vector.load %arg7[%470, %c0_231, %c0_232] : memref<6x16x64xf32, #tpu.memory_space<vmem>>, vector<1x16x64xf32>
    %472 = vector.shape_cast %471 : vector<1x16x64xf32> to vector<16x64xf32>
    %473 = vector.shape_cast %467 : vector<16x64xf32> to vector<1x16x64xf32>
    tpu.vector_store %arg7[%470, %c0_231, %c0_232], %473 {strides = array<i32>} : memref<6x16x64xf32, #tpu.memory_space<vmem>>, vector<1x16x64xf32>,
    %c6_i32 = arith.constant 6 : i32
    %c0_233 = arith.constant 0 : index
    %c0_234 = arith.constant 0 : index
    %474 = vector.load %arg10[%c0_233, %c0_234] : memref<16x64xf32, #tpu.memory_space<vmem>>, vector<16x64xf32>
    %c0_235 = arith.constant 0 : index
    %c0_236 = arith.constant 0 : index
    %c0_237 = arith.constant 0 : index
    %475 = vector.load %arg8[%c0_235, %c0_236, %c0_237] : memref<2x16x64xf32, #tpu.memory_space<vmem>>, vector<1x16x64xf32>
    %476 = vector.shape_cast %475 : vector<1x16x64xf32> to vector<16x64xf32>
    %477 = vector.shape_cast %474 : vector<16x64xf32> to vector<1x16x64xf32>
    tpu.vector_store %arg8[%c0_235, %c0_236, %c0_237], %477 {strides = array<i32>} : memref<2x16x64xf32, #tpu.memory_space<vmem>>, vector<1x16x64xf32>,
    %c0_238 = arith.constant 0 : index
    %c0_239 = arith.constant 0 : index
    %478 = vector.load %arg12[%c0_238, %c0_239] : memref<16x64xf32, #tpu.memory_space<vmem>>, vector<16x64xf32>
    %c1_240 = arith.constant 1 : index
    %c0_241 = arith.constant 0 : index
    %c0_242 = arith.constant 0 : index
    %479 = vector.load %arg8[%c1_240, %c0_241, %c0_242] : memref<2x16x64xf32, #tpu.memory_space<vmem>>, vector<1x16x64xf32>
    %480 = vector.shape_cast %479 : vector<1x16x64xf32> to vector<16x64xf32>
    %481 = vector.shape_cast %478 : vector<16x64xf32> to vector<1x16x64xf32>
    tpu.vector_store %arg8[%c1_240, %c0_241, %c0_242], %481 {strides = array<i32>} : memref<2x16x64xf32, #tpu.memory_space<vmem>>, vector<1x16x64xf32>,
    %c0_243 = arith.constant 0 : index
    %c0_244 = arith.constant 0 : index
    %482 = vector.load %arg11[%c0_243, %c0_244] : memref<16x64xf32, #tpu.memory_space<vmem>>, vector<16x64xf32>
    %c0_245 = arith.constant 0 : index
    %c0_246 = arith.constant 0 : index
    %c0_247 = arith.constant 0 : index
    %483 = vector.load %arg9[%c0_245, %c0_246, %c0_247] : memref<2x16x64xf32, #tpu.memory_space<vmem>>, vector<1x16x64xf32>
    %484 = vector.shape_cast %483 : vector<1x16x64xf32> to vector<16x64xf32>
    %485 = vector.shape_cast %482 : vector<16x64xf32> to vector<1x16x64xf32>
    tpu.vector_store %arg9[%c0_245, %c0_246, %c0_247], %485 {strides = array<i32>} : memref<2x16x64xf32, #tpu.memory_space<vmem>>, vector<1x16x64xf32>,
    %c0_248 = arith.constant 0 : index
    %c0_249 = arith.constant 0 : index
    %486 = vector.load %arg13[%c0_248, %c0_249] : memref<16x64xf32, #tpu.memory_space<vmem>>, vector<16x64xf32>
    %c1_250 = arith.constant 1 : index
    %c0_251 = arith.constant 0 : index
    %c0_252 = arith.constant 0 : index
    %487 = vector.load %arg9[%c1_250, %c0_251, %c0_252] : memref<2x16x64xf32, #tpu.memory_space<vmem>>, vector<1x16x64xf32>
    %488 = vector.shape_cast %487 : vector<1x16x64xf32> to vector<16x64xf32>
    %489 = vector.shape_cast %486 : vector<16x64xf32> to vector<1x16x64xf32>
    tpu.vector_store %arg9[%c1_250, %c0_251, %c0_252], %489 {strides = array<i32>} : memref<2x16x64xf32, #tpu.memory_space<vmem>>, vector<1x16x64xf32>,
    return
  }
}

</mosaic_0001>

<llo_original>
// kernel: tpu_custom_call.1
$region0: #{tpu_custom_call.1}
  #allocation0 [shape = 'u32[]', space=smem, size = 0x4, offset = 0x4, fixed_abs, tag = 'smem constant byte address 0x4 - core index']
  #allocation1 [shape = 'u32[144,128]{1,0:T(1,128)}', space=vmem, size = 0x12000, scoped, tag = 'internal scratch']
  #allocation2 [shape = 'f32[16,64]{1,0:T(8,128)}', space=vmem, size = 0x2000, scoped, tag = 'scratch operand']
  #allocation3 [shape = 'f32[16,64]{1,0:T(8,128)}', space=vmem, size = 0x2000, scoped, tag = 'scratch operand']
  #allocation4 [shape = 'f32[16,64]{1,0:T(8,128)}', space=vmem, size = 0x2000, scoped, tag = 'scratch operand']
  #allocation5 [shape = 'f32[16,64]{1,0:T(8,128)}', space=vmem, size = 0x2000, scoped, tag = 'scratch operand']
  %s0 = inlined_call_operand.hbm [shape: f32[6,16,32], index: 0, kind: input, shape index: {}]
  %s1 = inlined_call_operand.hbm [shape: f32[96,256], index: 1, kind: input, shape index: {}]
  %s2 = inlined_call_operand.vmem [shape: f32[1,256], index: 2, kind: input, shape index: {}]
  %s3 = inlined_call_operand.hbm [shape: f32[128,256], index: 3, kind: input, shape index: {}]
  %s4 = inlined_call_operand.vmem [shape: f32[1,256], index: 4, kind: input, shape index: {}]
  %s5 = inlined_call_operand.hbm [shape: f32[2,16,64], index: 5, kind: input, shape index: {}]
  %s6 = inlined_call_operand.hbm [shape: f32[2,16,64], index: 6, kind: input, shape index: {}]
  %s7 = inlined_call_operand.hbm [shape: f32[6,16,64], index: 7, kind: output, shape index: {0}]
  %s8 = inlined_call_operand.hbm [shape: f32[2,16,64], index: 8, kind: output, shape index: {1}]
  %s9 = inlined_call_operand.hbm [shape: f32[2,16,64], index: 9, kind: output, shape index: {2}]
  %10 = xla_tuple %s7, %s8, %s9
  %s11 = sld [smem:[#allocation0]]
  $region74: #{tpu_custom_call.1} parent=0
    _
  %s13 = ssub.s32 1, %s11
  %s14 = scalar_select 0, %s13, %s11
  $region1: #{tpu_custom_call.1} parent=0
    #allocation6 [shape = 'u8[49152]{0}', space=vmem, size = 0xc000, scoped, tag = 'input window, operand 0, single buffered']
    #allocation7 [shape = 's32[1]{0}', space=sflag, size = 0x4, scoped, tag = 'scoped memory for tpu_custom_call.1']
    #allocation8 [shape = 's32[1]{0}', space=sflag, size = 0x4, scoped, tag = 'scoped memory for tpu_custom_call.1']
    #allocation9 [shape = 'u8[98304]{0}', space=vmem, size = 0x18000, scoped, tag = 'input window, operand 1, single buffered']
    #allocation10 [shape = 's32[1]{0}', space=sflag, size = 0x4, scoped, tag = 'scoped memory for tpu_custom_call.1']
    #allocation11 [shape = 'u8[131072]{0}', space=vmem, size = 0x20000, scoped, tag = 'input window, operand 3, single buffered']
    #allocation12 [shape = 'u8[16384]{0}', space=vmem, size = 0x4000, scoped, tag = 'input window, operand 5, single buffered']
    #allocation13 [shape = 's32[1]{0}', space=sflag, size = 0x4, scoped, tag = 'scoped memory for tpu_custom_call.1']
    #allocation14 [shape = 'u8[16384]{0}', space=vmem, size = 0x4000, scoped, tag = 'input window, operand 6, single buffered']
    #allocation15 [shape = 'u8[49152]{0}', space=vmem, size = 0xc000, scoped, tag = 'output window, operand 0, single buffered']
    #allocation16 [shape = 'u8[16384]{0}', space=vmem, size = 0x4000, scoped, tag = 'output window, operand 1, single buffered']
    #allocation17 [shape = 's32[1]{0}', space=sflag, size = 0x4, scoped, tag = 'scoped memory for tpu_custom_call.1']
    #allocation18 [shape = 'u8[16384]{0}', space=vmem, size = 0x4000, scoped, tag = 'output window, operand 2, single buffered']
    %15 = vsyncpa [#allocation7], 0
    %16 = vsyncpa [#allocation10], 0
    %17 = vsyncpa [#allocation13], 0
    %18 = vsyncpa [#allocation8], 0
    %19 = vsyncpa [#allocation17], 0
    // Predicated region
    $region2: #{tpu_custom_call.1} parent=1 // pred_check
      _
    $region3: #{tpu_custom_call.1} parent=1 // pred_check_branch
      %21 = sbr.rel (0) target = $region5
    $region4: #{tpu_custom_call.1} parent=1 // pred_region
      %s23 = ssub.s32 1536, 1536
      %24 = vsyncadd [#allocation7], %s23
      %s25 = sshll.u32 [#allocation6], 4
      %s26 = int_to_ptr.vmem [resolvable:$true] %s25
      %31 = dma.hbm_to_vmem [thread:$0]  %s0, 1536, %s26, [#allocation7], 128, 128, 8
    $region5: #{tpu_custom_call.1} parent=1 // pred_fallthru
      _
    // Predicated region
    $region6: #{tpu_custom_call.1} parent=1 // pred_check
      _
    $region7: #{tpu_custom_call.1} parent=1 // pred_check_branch
      %33 = sbr.rel (0) target = $region9
    $region8: #{tpu_custom_call.1} parent=1 // pred_region
      %s35 = ssub.s32 3072, 3072
      %36 = vsyncadd [#allocation10], %s35
      %s37 = sshll.u32 [#allocation9], 4
      %s38 = int_to_ptr.vmem [resolvable:$true] %s37
      %43 = dma.hbm_to_vmem [thread:$0]  %s1, 3072, %s38, [#allocation10], 256, 256, 16
    $region9: #{tpu_custom_call.1} parent=1 // pred_fallthru
      _
    // Predicated region
    $region10: #{tpu_custom_call.1} parent=1 // pred_check
      _
    $region11: #{tpu_custom_call.1} parent=1 // pred_check_branch
      %45 = sbr.rel (0) target = $region13
    $region12: #{tpu_custom_call.1} parent=1 // pred_region
      _
    $region13: #{tpu_custom_call.1} parent=1 // pred_fallthru
      _
    // Predicated region
    $region14: #{tpu_custom_call.1} parent=1 // pred_check
      _
    $region15: #{tpu_custom_call.1} parent=1 // pred_check_branch
      %47 = sbr.rel (0) target = $region17
    $region16: #{tpu_custom_call.1} parent=1 // pred_region
      %s49 = ssub.s32 4096, 4096
      %50 = vsyncadd [#allocation10], %s49
      %s51 = sshll.u32 [#allocation11], 4
      %s52 = int_to_ptr.vmem [resolvable:$true] %s51
      %57 = dma.hbm_to_vmem [thread:$0]  %s3, 4096, %s52, [#allocation10], 256, 256, 16
    $region17: #{tpu_custom_call.1} parent=1 // pred_fallthru
      _
    // Predicated region
    $region18: #{tpu_custom_call.1} parent=1 // pred_check
      _
    $region19: #{tpu_custom_call.1} parent=1 // pred_check_branch
      %59 = sbr.rel (0) target = $region21
    $region20: #{tpu_custom_call.1} parent=1 // pred_region
      _
    $region21: #{tpu_custom_call.1} parent=1 // pred_fallthru
      _
    // Predicated region
    $region22: #{tpu_custom_call.1} parent=1 // pred_check
      _
    $region23: #{tpu_custom_call.1} parent=1 // pred_check_branch
      %61 = sbr.rel (0) target = $region25
    $region24: #{tpu_custom_call.1} parent=1 // pred_region
      %s63 = ssub.s32 512, 512
      %64 = vsyncadd [#allocation13], %s63
      %s65 = sshll.u32 [#allocation12], 4
      %s66 = int_to_ptr.vmem [resolvable:$true] %s65
      %71 = dma.hbm_to_vmem [thread:$0]  %s5, 512, %s66, [#allocation13], 128, 128, 8
    $region25: #{tpu_custom_call.1} parent=1 // pred_fallthru
      _
    // Predicated region
    $region26: #{tpu_custom_call.1} parent=1 // pred_check
      _
    $region27: #{tpu_custom_call.1} parent=1 // pred_check_branch
      %73 = sbr.rel (0) target = $region29
    $region28: #{tpu_custom_call.1} parent=1 // pred_region
      %s75 = ssub.s32 512, 512
      %76 = vsyncadd [#allocation13], %s75
      %s77 = sshll.u32 [#allocation14], 4
      %s78 = int_to_ptr.vmem [resolvable:$true] %s77
      %83 = dma.hbm_to_vmem [thread:$0]  %s6, 512, %s78, [#allocation13], 128, 128, 8
    $region29: #{tpu_custom_call.1} parent=1 // pred_fallthru
      _
    // Predicated region
    $region30: #{tpu_custom_call.1} parent=1 // pred_check
      _
    $region31: #{tpu_custom_call.1} parent=1 // pred_check_branch
      %85 = sbr.rel (0) target = $region33
    $region32: #{tpu_custom_call.1} parent=1 // pred_region
      %86 = dma.done [#allocation7], 1536
    $region33: #{tpu_custom_call.1} parent=1 // pred_fallthru
      _
    // Predicated region
    $region34: #{tpu_custom_call.1} parent=1 // pred_check
      _
    $region35: #{tpu_custom_call.1} parent=1 // pred_check_branch
      %88 = sbr.rel (0) target = $region37
    $region36: #{tpu_custom_call.1} parent=1 // pred_region
      %89 = dma.done [#allocation10], 3072
    $region37: #{tpu_custom_call.1} parent=1 // pred_fallthru
      _
    // Predicated region
    $region38: #{tpu_custom_call.1} parent=1 // pred_check
      _
    $region39: #{tpu_custom_call.1} parent=1 // pred_check_branch
      %91 = sbr.rel (0) target = $region41
    $region40: #{tpu_custom_call.1} parent=1 // pred_region
      %92 = dma.done [#allocation10], 4096
    $region41: #{tpu_custom_call.1} parent=1 // pred_fallthru
      _
    // Predicated region
    $region42: #{tpu_custom_call.1} parent=1 // pred_check
      _
    $region43: #{tpu_custom_call.1} parent=1 // pred_check_branch
      %94 = sbr.rel (0) target = $region45
    $region44: #{tpu_custom_call.1} parent=1 // pred_region
      %95 = dma.done [#allocation13], 512
    $region45: #{tpu_custom_call.1} parent=1 // pred_fallthru
      _
    // Predicated region
    $region46: #{tpu_custom_call.1} parent=1 // pred_check
      _
    $region47: #{tpu_custom_call.1} parent=1 // pred_check_branch
      %97 = sbr.rel (0) target = $region49
    $region48: #{tpu_custom_call.1} parent=1 // pred_region
      %98 = dma.done [#allocation13], 512
    $region49: #{tpu_custom_call.1} parent=1 // pred_fallthru
      _
    %v99 = vld [vmem:[#allocation12] sm:$0xff]
    %v100 = vld [vmem:[#allocation12 + $0x8] sm:$0xff]
    %vm101 = vcmask 523264
    %102 = vst.msk [vmem:[#allocation2] sm:$0xff] %vm101, %v99
    %103 = vst.msk [vmem:[#allocation2 + $0x8] sm:$0xff] %vm101, %v100
    %v104 = vld [vmem:[#allocation14] sm:$0xff]
    %v105 = vld [vmem:[#allocation14 + $0x8] sm:$0xff]
    %106 = vst.msk [vmem:[#allocation3] sm:$0xff] %vm101, %v104
    %107 = vst.msk [vmem:[#allocation3 + $0x8] sm:$0xff] %vm101, %v105
    %s108 = scalar_lea.vmem [#allocation12], 16
    %v109 = vld [vmem:[%s108] sm:$0xff]
    %v110 = vld [vmem:[%s108 + $0x8] sm:$0xff]
    %111 = vst.msk [vmem:[#allocation4] sm:$0xff] %vm101, %v109
    %112 = vst.msk [vmem:[#allocation4 + $0x8] sm:$0xff] %vm101, %v110
    %s113 = scalar_lea.vmem [#allocation14], 16
    %v114 = vld [vmem:[%s113] sm:$0xff]
    %v115 = vld [vmem:[%s113 + $0x8] sm:$0xff]
    %116 = vst.msk [vmem:[#allocation5] sm:$0xff] %vm101, %v114
    %117 = vst.msk [vmem:[#allocation5 + $0x8] sm:$0xff] %vm101, %v115
    %v118 = vld [vmem:[#allocation6] sm:$0xff]
    %v119 = vld [vmem:[#allocation6 + $0x8] sm:$0xff]
    %v120 = vld [vmem:[#allocation2] sm:$0xff]
    %v121 = vld [vmem:[#allocation2 + $0x8] sm:$0xff]
    %124 = vrot.lane.b32.xlu0 %v120, 32
    %v125 = vpop.permute.xlu0 %124
    %126 = vrot.lane.b32.xlu0 %v121, 32
    %v127 = vpop.permute.xlu0 %126
    %vm130 = vcmask 261120
    %v131 = vsel %vm130, %v118, %v125
    %v132 = vsel %vm130, %v119, %v127
    %v133 = vld [vmem:[#allocation3] sm:$0xff]
    %v134 = vld [vmem:[#allocation3 + $0x8] sm:$0xff]
    %v135 = vld [vmem:[#allocation9] sm:$0xff]
    %v136 = vld [vmem:[#allocation9 + $0x8] sm:$0xff]
    %v137 = vld [vmem:[#allocation9 + $0x10] sm:$0xff]
    %v138 = vld [vmem:[#allocation9 + $0x18] sm:$0xff]
    %v139 = vld [vmem:[#allocation9 + $0x20] sm:$0xff]
    %v140 = vld [vmem:[#allocation9 + $0x28] sm:$0xff]
    %v141 = vld [vmem:[#allocation9 + $0x30] sm:$0xff]
    %v142 = vld [vmem:[#allocation9 + $0x38] sm:$0xff]
    %v143 = vld [vmem:[#allocation9 + $0x40] sm:$0xff]
    %v144 = vld [vmem:[#allocation9 + $0x48] sm:$0xff]
    %v145 = vld [vmem:[#allocation9 + $0x50] sm:$0xff]
    %v146 = vld [vmem:[#allocation9 + $0x58] sm:$0xff]
    %v147 = vld [vmem:[#allocation9 + $0x60] sm:$0xff]
    %v148 = vld [vmem:[#allocation9 + $0x68] sm:$0xff]
    %v149 = vld [vmem:[#allocation9 + $0x70] sm:$0xff]
    %v150 = vld [vmem:[#allocation9 + $0x78] sm:$0xff]
    %v151 = vld [vmem:[#allocation9 + $0x80] sm:$0xff]
    %v152 = vld [vmem:[#allocation9 + $0x88] sm:$0xff]
    %v153 = vld [vmem:[#allocation9 + $0x90] sm:$0xff]
    %v154 = vld [vmem:[#allocation9 + $0x98] sm:$0xff]
    %v155 = vld [vmem:[#allocation9 + $0xa0] sm:$0xff]
    %v156 = vld [vmem:[#allocation9 + $0xa8] sm:$0xff]
    %v157 = vld [vmem:[#allocation9 + $0xb0] sm:$0xff]
    %v158 = vld [vmem:[#allocation9 + $0xb8] sm:$0xff]
    %v159 = vld [vmem:[%s2] sm:$0x3]
    %v161 = vlaneseq
    %v162 = vshrl.u32 %v161, 7
    %v163 = vsub.s32 0, %v162
    %v164 = vrot.slane %v159, %v163
    %v165 = vlaneseq
    %v166 = vshrl.u32 %v165, 7
    %v167 = vsub.s32 1, %v166
    %v168 = vrot.slane %v159, %v167
    %vm171 = vcmask 785408
    %v173 = vsel %vm171, %v131, 0
    %v176 = vsel %vm171, %v132, 0
    %178 = vmatprep.subr.mxu0 0.0
    %179 = vmatpush1.msra.mxu0 0.0
    %180 = vmatprep.subr.mxu0 0.0
    %181 = vmatpush1.msra.mxu0 0.0
    %182 = vmatprep.subr.mxu0 0.0
    %183 = vmatpush1.msra.mxu0 0.0
    %184 = vmatprep.subr.mxu0 0.0
    %185 = vmatpush1.msra.mxu0 0.0
    %186 = vmatprep.subr.mxu0 %v158
    %187 = vmatpush1.msra.mxu0 %v157
    %188 = vmatprep.subr.mxu0 %v156
    %189 = vmatpush1.msra.mxu0 %v155
    %190 = vmatprep.subr.mxu0 %v154
    %191 = vmatpush1.msra.mxu0 %v153
    %192 = vmatprep.subr.mxu0 %v152
    %193 = vmatpush1.msra.mxu0 %v151
    %194 = vmatprep.subr.mxu0 %v150
    %195 = vmatpush1.msra.mxu0 %v149
    %196 = vmatprep.subr.mxu0 %v148
    %197 = vmatpush1.msra.mxu0 %v147
    %198 = vmatprep.subr.mxu0 %v146
    %199 = vmatpush1.msra.mxu0 %v145
    %200 = vmatprep.subr.mxu0 %v144
    %201 = vmatpush1.msra.mxu0 %v143
    %202 = vmatprep.subr.mxu0 %v142
    %203 = vmatpush1.msra.mxu0 %v141
    %204 = vmatprep.subr.mxu0 %v140
    %205 = vmatpush1.msra.mxu0 %v139
    %206 = vmatprep.subr.mxu0 %v138
    %207 = vmatpush1.msra.mxu0 %v137
    %208 = vmatprep.subr.mxu0 %v136
    %209 = vmatpush1.msra.mxu0 %v135
    %210 = vmatprep.subr.mxu0 0.0
    %211 = vmatpush2.msra.mxu0 0.0
    %212 = vmatprep.subr.mxu0 0.0
    %213 = vmatpush2.msra.mxu0 0.0
    %214 = vmatprep.subr.mxu0 0.0
    %215 = vmatpush2.msra.mxu0 0.0
    %216 = vmatprep.subr.mxu0 0.0
    %217 = vmatpush2.msra.mxu0 0.0
    %218 = vmatprep.subr.mxu0 0.0
    %219 = vmatpush2.msra.mxu0 0.0
    %220 = vmatprep.subr.mxu0 0.0
    %221 = vmatpush2.msra.mxu0 0.0
    %222 = vmatprep.subr.mxu0 0.0
    %223 = vmatpush2.msra.mxu0 0.0
    %224 = vmatprep.subr.mxu0 0.0
    %225 = vmatpush2.msra.mxu0 0.0
    %226 = vmatprep.subr.mxu0 0.0
    %227 = vmatpush2.msra.mxu0 0.0
    %228 = vmatprep.subr.mxu0 0.0
    %229 = vmatpush2.msra.mxu0 0.0
    %230 = vmatprep.subr.mxu0 0.0
    %231 = vmatpush2.msra.mxu0 0.0
    %232 = vmatprep.subr.mxu0 0.0
    %233 = vmatpush2.msra.mxu0 0.0
    %234 = vmatprep.subr.mxu0 0.0
    %235 = vmatpush2.msra.mxu0 0.0
    %236 = vmatprep.subr.mxu0 0.0
    %237 = vmatpush2.msra.mxu0 0.0
    %238 = vmatprep.subr.mxu0 0.0
    %239 = vmatpush2.msra.mxu0 0.0
    %240 = vmatprep.subr.mxu0 0.0
    %241 = vmatpush2.msra.mxu0 0.0
    %242 = vmatprep.mubr.f32.mxu0 0.0
    %243 = vmatmul.mubr.f32.gmra.mxu0 %v173
    %v244 = vpop.f32.mrf.mxu0
    %v245 = vadd.f32 %v164, %v244
    %v246 = vpop.f32.mrf.mxu0
    %v247 = vadd.f32 %v168, %v246
    %248 = vmatprep.mubr.f32.mxu0 0.0
    %249 = vmatmul.mubr.f32.gmra.mxu0 %v176
    %v250 = vpop.f32.mrf.mxu0
    %v251 = vadd.f32 %v164, %v250
    %v252 = vpop.f32.mrf.mxu0
    %v253 = vadd.f32 %v168, %v252
    %254 = vdwg.mxu0
    %v255 = vxor.u32 %v245, 2147483648
    %v256 = vxor.u32 %v251, 2147483648
    %v257 = vmul.f32 %v255, 1.442695
    %v258 = vpow.pop %v257
    %v259 = vmul.f32 %v256, 1.442695
    %v260 = vpow.pop %v259
    %v261 = vadd.f32 %v258, 1.0
    %v262 = vadd.f32 %v260, 1.0
    %v263 = vrcp.pop %v261
    %v264 = vmul.f32 1.0, %v263
    %v265 = vrcp.pop %v262
    %v266 = vmul.f32 1.0, %v265
    %v267 = vtanh.pop %v247
    %v268 = vtanh.pop %v253
    %v269 = vxor.u32 %v247, 2147483648
    %v270 = vxor.u32 %v253, 2147483648
    %v271 = vmul.f32 %v269, 1.442695
    %v272 = vpow.pop %v271
    %v273 = vmul.f32 %v270, 1.442695
    %v274 = vpow.pop %v273
    %v275 = vadd.f32 %v272, 1.0
    %v276 = vadd.f32 %v274, 1.0
    %v277 = vrcp.pop %v275
    %v278 = vmul.f32 1.0, %v277
    %v279 = vrcp.pop %v276
    %v280 = vmul.f32 1.0, %v279
    %283 = vrot.lane.b32.xlu0 %v133, 64
    %v284 = vpop.permute.xlu0 %283
    %285 = vrot.lane.b32.xlu0 %v134, 64
    %v286 = vpop.permute.xlu0 %285
    %v289 = vmul.f32 %v264, %v284
    %v290 = vmul.f32 %v266, %v286
    %v291 = vmul.f32 %v264, %v267
    %v292 = vmul.f32 %v266, %v268
    %295 = vrot.lane.b32.xlu0 %v291, 64
    %v296 = vpop.permute.xlu0 %295
    %297 = vrot.lane.b32.xlu0 %v292, 64
    %v298 = vpop.permute.xlu0 %297
    %v301 = vadd.f32 %v289, %v296
    %v302 = vadd.f32 %v290, %v298
    %v303 = vtanh.pop %v301
    %v304 = vtanh.pop %v302
    %v305 = vmul.f32 %v278, %v303
    %v306 = vmul.f32 %v280, %v304
    %309 = vrot.lane.b32.xlu0 %v305, 64
    %v310 = vpop.permute.xlu0 %309
    %311 = vrot.lane.b32.xlu0 %v306, 64
    %v312 = vpop.permute.xlu0 %311
    %315 = vst.msk [vmem:[#allocation2] sm:$0xff] %vm101, %v310
    %316 = vst.msk [vmem:[#allocation2 + $0x8] sm:$0xff] %vm101, %v312
    %319 = vrot.lane.b32.xlu0 %v301, 64
    %v320 = vpop.permute.xlu0 %319
    %321 = vrot.lane.b32.xlu0 %v302, 64
    %v322 = vpop.permute.xlu0 %321
    %325 = vst.msk [vmem:[#allocation3] sm:$0xff] %vm101, %v320
    %326 = vst.msk [vmem:[#allocation3 + $0x8] sm:$0xff] %vm101, %v322
    %v327 = vld [vmem:[#allocation4] sm:$0xff]
    %v328 = vld [vmem:[#allocation4 + $0x8] sm:$0xff]
    %331 = vrot.lane.b32.xlu0 %v327, 64
    %v332 = vpop.permute.xlu0 %331
    %333 = vrot.lane.b32.xlu0 %v328, 64
    %v334 = vpop.permute.xlu0 %333
    %v337 = vsel %vm101, %v310, %v332
    %v338 = vsel %vm101, %v312, %v334
    %v339 = vld [vmem:[#allocation5] sm:$0xff]
    %v340 = vld [vmem:[#allocation5 + $0x8] sm:$0xff]
    %v341 = vld [vmem:[#allocation11] sm:$0xff]
    %v342 = vld [vmem:[#allocation11 + $0x8] sm:$0xff]
    %v343 = vld [vmem:[#allocation11 + $0x10] sm:$0xff]
    %v344 = vld [vmem:[#allocation11 + $0x18] sm:$0xff]
    %v345 = vld [vmem:[#allocation11 + $0x20] sm:$0xff]
    %v346 = vld [vmem:[#allocation11 + $0x28] sm:$0xff]
    %v347 = vld [vmem:[#allocation11 + $0x30] sm:$0xff]
    %v348 = vld [vmem:[#allocation11 + $0x38] sm:$0xff]
    %v349 = vld [vmem:[#allocation11 + $0x40] sm:$0xff]
    %v350 = vld [vmem:[#allocation11 + $0x48] sm:$0xff]
    %v351 = vld [vmem:[#allocation11 + $0x50] sm:$0xff]
    %v352 = vld [vmem:[#allocation11 + $0x58] sm:$0xff]
    %v353 = vld [vmem:[#allocation11 + $0x60] sm:$0xff]
    %v354 = vld [vmem:[#allocation11 + $0x68] sm:$0xff]
    %v355 = vld [vmem:[#allocation11 + $0x70] sm:$0xff]
    %v356 = vld [vmem:[#allocation11 + $0x78] sm:$0xff]
    %v357 = vld [vmem:[#allocation11 + $0x80] sm:$0xff]
    %v358 = vld [vmem:[#allocation11 + $0x88] sm:$0xff]
    %v359 = vld [vmem:[#allocation11 + $0x90] sm:$0xff]
    %v360 = vld [vmem:[#allocation11 + $0x98] sm:$0xff]
    %v361 = vld [vmem:[#allocation11 + $0xa0] sm:$0xff]
    %v362 = vld [vmem:[#allocation11 + $0xa8] sm:$0xff]
    %v363 = vld [vmem:[#allocation11 + $0xb0] sm:$0xff]
    %v364 = vld [vmem:[#allocation11 + $0xb8] sm:$0xff]
    %v365 = vld [vmem:[#allocation11 + $0xc0] sm:$0xff]
    %v366 = vld [vmem:[#allocation11 + $0xc8] sm:$0xff]
    %v367 = vld [vmem:[#allocation11 + $0xd0] sm:$0xff]
    %v368 = vld [vmem:[#allocation11 + $0xd8] sm:$0xff]
    %v369 = vld [vmem:[#allocation11 + $0xe0] sm:$0xff]
    %v370 = vld [vmem:[#allocation11 + $0xe8] sm:$0xff]
    %v371 = vld [vmem:[#allocation11 + $0xf0] sm:$0xff]
    %v372 = vld [vmem:[#allocation11 + $0xf8] sm:$0xff]
    %v373 = vld [vmem:[%s4] sm:$0x3]
    %v375 = vlaneseq
    %v376 = vshrl.u32 %v375, 7
    %v377 = vsub.s32 0, %v376
    %v378 = vrot.slane %v373, %v377
    %v379 = vlaneseq
    %v380 = vshrl.u32 %v379, 7
    %v381 = vsub.s32 1, %v380
    %v382 = vrot.slane %v373, %v381
    %385 = vmatprep.subr.mxu0 %v372
    %386 = vmatpush1.msra.mxu0 %v371
    %387 = vmatprep.subr.mxu0 %v370
    %388 = vmatpush1.msra.mxu0 %v369
    %389 = vmatprep.subr.mxu0 %v368
    %390 = vmatpush1.msra.mxu0 %v367
    %391 = vmatprep.subr.mxu0 %v366
    %392 = vmatpush1.msra.mxu0 %v365
    %393 = vmatprep.subr.mxu0 %v364
    %394 = vmatpush1.msra.mxu0 %v363
    %395 = vmatprep.subr.mxu0 %v362
    %396 = vmatpush1.msra.mxu0 %v361
    %397 = vmatprep.subr.mxu0 %v360
    %398 = vmatpush1.msra.mxu0 %v359
    %399 = vmatprep.subr.mxu0 %v358
    %400 = vmatpush1.msra.mxu0 %v357
    %401 = vmatprep.subr.mxu0 %v356
    %402 = vmatpush1.msra.mxu0 %v355
    %403 = vmatprep.subr.mxu0 %v354
    %404 = vmatpush1.msra.mxu0 %v353
    %405 = vmatprep.subr.mxu0 %v352
    %406 = vmatpush1.msra.mxu0 %v351
    %407 = vmatprep.subr.mxu0 %v350
    %408 = vmatpush1.msra.mxu0 %v349
    %409 = vmatprep.subr.mxu0 %v348
    %410 = vmatpush1.msra.mxu0 %v347
    %411 = vmatprep.subr.mxu0 %v346
    %412 = vmatpush1.msra.mxu0 %v345
    %413 = vmatprep.subr.mxu0 %v344
    %414 = vmatpush1.msra.mxu0 %v343
    %415 = vmatprep.subr.mxu0 %v342
    %416 = vmatpush1.msra.mxu0 %v341
    %417 = vmatprep.subr.mxu0 0.0
    %418 = vmatpush2.msra.mxu0 0.0
    %419 = vmatprep.subr.mxu0 0.0
    %420 = vmatpush2.msra.mxu0 0.0
    %421 = vmatprep.subr.mxu0 0.0
    %422 = vmatpush2.msra.mxu0 0.0
    %423 = vmatprep.subr.mxu0 0.0
    %424 = vmatpush2.msra.mxu0 0.0
    %425 = vmatprep.subr.mxu0 0.0
    %426 = vmatpush2.msra.mxu0 0.0
    %427 = vmatprep.subr.mxu0 0.0
    %428 = vmatpush2.msra.mxu0 0.0
    %429 = vmatprep.subr.mxu0 0.0
    %430 = vmatpush2.msra.mxu0 0.0
    %431 = vmatprep.subr.mxu0 0.0
    %432 = vmatpush2.msra.mxu0 0.0
    %433 = vmatprep.subr.mxu0 0.0
    %434 = vmatpush2.msra.mxu0 0.0
    %435 = vmatprep.subr.mxu0 0.0
    %436 = vmatpush2.msra.mxu0 0.0
    %437 = vmatprep.subr.mxu0 0.0
    %438 = vmatpush2.msra.mxu0 0.0
    %439 = vmatprep.subr.mxu0 0.0
    %440 = vmatpush2.msra.mxu0 0.0
    %441 = vmatprep.subr.mxu0 0.0
    %442 = vmatpush2.msra.mxu0 0.0
    %443 = vmatprep.subr.mxu0 0.0
    %444 = vmatpush2.msra.mxu0 0.0
    %445 = vmatprep.subr.mxu0 0.0
    %446 = vmatpush2.msra.mxu0 0.0
    %447 = vmatprep.subr.mxu0 0.0
    %448 = vmatpush2.msra.mxu0 0.0
    %449 = vmatprep.mubr.f32.mxu0 0.0
    %450 = vmatmul.mubr.f32.gmra.mxu0 %v337
    %v451 = vpop.f32.mrf.mxu0
    %v452 = vadd.f32 %v378, %v451
    %v453 = vpop.f32.mrf.mxu0
    %v454 = vadd.f32 %v382, %v453
    %455 = vmatprep.mubr.f32.mxu0 0.0
    %456 = vmatmul.mubr.f32.gmra.mxu0 %v338
    %v457 = vpop.f32.mrf.mxu0
    %v458 = vadd.f32 %v378, %v457
    %v459 = vpop.f32.mrf.mxu0
    %v460 = vadd.f32 %v382, %v459
    %461 = vdwg.mxu0
    %v462 = vxor.u32 %v452, 2147483648
    %v463 = vxor.u32 %v458, 2147483648
    %v464 = vmul.f32 %v462, 1.442695
    %v465 = vpow.pop %v464
    %v466 = vmul.f32 %v463, 1.442695
    %v467 = vpow.pop %v466
    %v468 = vadd.f32 %v465, 1.0
    %v469 = vadd.f32 %v467, 1.0
    %v470 = vrcp.pop %v468
    %v471 = vmul.f32 1.0, %v470
    %v472 = vrcp.pop %v469
    %v473 = vmul.f32 1.0, %v472
    %v474 = vtanh.pop %v454
    %v475 = vtanh.pop %v460
    %v476 = vxor.u32 %v454, 2147483648
    %v477 = vxor.u32 %v460, 2147483648
    %v478 = vmul.f32 %v476, 1.442695
    %v479 = vpow.pop %v478
    %v480 = vmul.f32 %v477, 1.442695
    %v481 = vpow.pop %v480
    %v482 = vadd.f32 %v479, 1.0
    %v483 = vadd.f32 %v481, 1.0
    %v484 = vrcp.pop %v482
    %v485 = vmul.f32 1.0, %v484
    %v486 = vrcp.pop %v483
    %v487 = vmul.f32 1.0, %v486
    %490 = vrot.lane.b32.xlu0 %v339, 64
    %v491 = vpop.permute.xlu0 %490
    %492 = vrot.lane.b32.xlu0 %v340, 64
    %v493 = vpop.permute.xlu0 %492
    %v496 = vmul.f32 %v471, %v491
    %v497 = vmul.f32 %v473, %v493
    %v498 = vmul.f32 %v471, %v474
    %v499 = vmul.f32 %v473, %v475
    %502 = vrot.lane.b32.xlu0 %v498, 64
    %v503 = vpop.permute.xlu0 %502
    %504 = vrot.lane.b32.xlu0 %v499, 64
    %v505 = vpop.permute.xlu0 %504
    %v508 = vadd.f32 %v496, %v503
    %v509 = vadd.f32 %v497, %v505
    %v510 = vtanh.pop %v508
    %v511 = vtanh.pop %v509
    %v512 = vmul.f32 %v485, %v510
    %v513 = vmul.f32 %v487, %v511
    %516 = vrot.lane.b32.xlu0 %v512, 64
    %v517 = vpop.permute.xlu0 %516
    %518 = vrot.lane.b32.xlu0 %v513, 64
    %v519 = vpop.permute.xlu0 %518
    %522 = vst.msk [vmem:[#allocation4] sm:$0xff] %vm101, %v517
    %523 = vst.msk [vmem:[#allocation4 + $0x8] sm:$0xff] %vm101, %v519
    %526 = vrot.lane.b32.xlu0 %v508, 64
    %v527 = vpop.permute.xlu0 %526
    %528 = vrot.lane.b32.xlu0 %v509, 64
    %v529 = vpop.permute.xlu0 %528
    %532 = vst.msk [vmem:[#allocation5] sm:$0xff] %vm101, %v527
    %533 = vst.msk [vmem:[#allocation5 + $0x8] sm:$0xff] %vm101, %v529
    %534 = vst.msk [vmem:[#allocation15] sm:$0xff] %vm101, %v517
    %535 = vst.msk [vmem:[#allocation15 + $0x8] sm:$0xff] %vm101, %v519
    %s536 = scalar_lea.vmem [#allocation6], 16
    %v537 = vld [vmem:[%s536] sm:$0xff]
    %v538 = vld [vmem:[%s536 + $0x8] sm:$0xff]
    %v539 = vld [vmem:[#allocation2] sm:$0xff]
    %v540 = vld [vmem:[#allocation2 + $0x8] sm:$0xff]
    %543 = vrot.lane.b32.xlu0 %v539, 32
    %v544 = vpop.permute.xlu0 %543
    %545 = vrot.lane.b32.xlu0 %v540, 32
    %v546 = vpop.permute.xlu0 %545
    %v549 = vsel %vm130, %v537, %v544
    %v550 = vsel %vm130, %v538, %v546
    %v551 = vld [vmem:[#allocation3] sm:$0xff]
    %v552 = vld [vmem:[#allocation3 + $0x8] sm:$0xff]
    %v553 = vld [vmem:[#allocation9] sm:$0xff]
    %v554 = vld [vmem:[#allocation9 + $0x8] sm:$0xff]
    %v555 = vld [vmem:[#allocation9 + $0x10] sm:$0xff]
    %v556 = vld [vmem:[#allocation9 + $0x18] sm:$0xff]
    %v557 = vld [vmem:[#allocation9 + $0x20] sm:$0xff]
    %v558 = vld [vmem:[#allocation9 + $0x28] sm:$0xff]
    %v559 = vld [vmem:[#allocation9 + $0x30] sm:$0xff]
    %v560 = vld [vmem:[#allocation9 + $0x38] sm:$0xff]
    %v561 = vld [vmem:[#allocation9 + $0x40] sm:$0xff]
    %v562 = vld [vmem:[#allocation9 + $0x48] sm:$0xff]
    %v563 = vld [vmem:[#allocation9 + $0x50] sm:$0xff]
    %v564 = vld [vmem:[#allocation9 + $0x58] sm:$0xff]
    %v565 = vld [vmem:[#allocation9 + $0x60] sm:$0xff]
    %v566 = vld [vmem:[#allocation9 + $0x68] sm:$0xff]
    %v567 = vld [vmem:[#allocation9 + $0x70] sm:$0xff]
    %v568 = vld [vmem:[#allocation9 + $0x78] sm:$0xff]
    %v569 = vld [vmem:[#allocation9 + $0x80] sm:$0xff]
    %v570 = vld [vmem:[#allocation9 + $0x88] sm:$0xff]
    %v571 = vld [vmem:[#allocation9 + $0x90] sm:$0xff]
    %v572 = vld [vmem:[#allocation9 + $0x98] sm:$0xff]
    %v573 = vld [vmem:[#allocation9 + $0xa0] sm:$0xff]
    %v574 = vld [vmem:[#allocation9 + $0xa8] sm:$0xff]
    %v575 = vld [vmem:[#allocation9 + $0xb0] sm:$0xff]
    %v576 = vld [vmem:[#allocation9 + $0xb8] sm:$0xff]
    %v577 = vld [vmem:[%s2] sm:$0x3]
    %v579 = vlaneseq
    %v580 = vshrl.u32 %v579, 7
    %v581 = vsub.s32 0, %v580
    %v582 = vrot.slane %v577, %v581
    %v583 = vlaneseq
    %v584 = vshrl.u32 %v583, 7
    %v585 = vsub.s32 1, %v584
    %v586 = vrot.slane %v577, %v585
    %v590 = vsel %vm171, %v549, 0
    %v593 = vsel %vm171, %v550, 0
    %595 = vmatprep.subr.mxu0 0.0
    %596 = vmatpush1.msra.mxu0 0.0
    %597 = vmatprep.subr.mxu0 0.0
    %598 = vmatpush1.msra.mxu0 0.0
    %599 = vmatprep.subr.mxu0 0.0
    %600 = vmatpush1.msra.mxu0 0.0
    %601 = vmatprep.subr.mxu0 0.0
    %602 = vmatpush1.msra.mxu0 0.0
    %603 = vmatprep.subr.mxu0 %v576
    %604 = vmatpush1.msra.mxu0 %v575
    %605 = vmatprep.subr.mxu0 %v574
    %606 = vmatpush1.msra.mxu0 %v573
    %607 = vmatprep.subr.mxu0 %v572
    %608 = vmatpush1.msra.mxu0 %v571
    %609 = vmatprep.subr.mxu0 %v570
    %610 = vmatpush1.msra.mxu0 %v569
    %611 = vmatprep.subr.mxu0 %v568
    %612 = vmatpush1.msra.mxu0 %v567
    %613 = vmatprep.subr.mxu0 %v566
    %614 = vmatpush1.msra.mxu0 %v565
    %615 = vmatprep.subr.mxu0 %v564
    %616 = vmatpush1.msra.mxu0 %v563
    %617 = vmatprep.subr.mxu0 %v562
    %618 = vmatpush1.msra.mxu0 %v561
    %619 = vmatprep.subr.mxu0 %v560
    %620 = vmatpush1.msra.mxu0 %v559
    %621 = vmatprep.subr.mxu0 %v558
    %622 = vmatpush1.msra.mxu0 %v557
    %623 = vmatprep.subr.mxu0 %v556
    %624 = vmatpush1.msra.mxu0 %v555
    %625 = vmatprep.subr.mxu0 %v554
    %626 = vmatpush1.msra.mxu0 %v553
    %627 = vmatprep.subr.mxu0 0.0
    %628 = vmatpush2.msra.mxu0 0.0
    %629 = vmatprep.subr.mxu0 0.0
    %630 = vmatpush2.msra.mxu0 0.0
    %631 = vmatprep.subr.mxu0 0.0
    %632 = vmatpush2.msra.mxu0 0.0
    %633 = vmatprep.subr.mxu0 0.0
    %634 = vmatpush2.msra.mxu0 0.0
    %635 = vmatprep.subr.mxu0 0.0
    %636 = vmatpush2.msra.mxu0 0.0
    %637 = vmatprep.subr.mxu0 0.0
    %638 = vmatpush2.msra.mxu0 0.0
    %639 = vmatprep.subr.mxu0 0.0
    %640 = vmatpush2.msra.mxu0 0.0
    %641 = vmatprep.subr.mxu0 0.0
    %642 = vmatpush2.msra.mxu0 0.0
    %643 = vmatprep.subr.mxu0 0.0
    %644 = vmatpush2.msra.mxu0 0.0
    %645 = vmatprep.subr.mxu0 0.0
    %646 = vmatpush2.msra.mxu0 0.0
    %647 = vmatprep.subr.mxu0 0.0
    %648 = vmatpush2.msra.mxu0 0.0
    %649 = vmatprep.subr.mxu0 0.0
    %650 = vmatpush2.msra.mxu0 0.0
    %651 = vmatprep.subr.mxu0 0.0
    %652 = vmatpush2.msra.mxu0 0.0
    %653 = vmatprep.subr.mxu0 0.0
    %654 = vmatpush2.msra.mxu0 0.0
    %655 = vmatprep.subr.mxu0 0.0
    %656 = vmatpush2.msra.mxu0 0.0
    %657 = vmatprep.subr.mxu0 0.0
    %658 = vmatpush2.msra.mxu0 0.0
    %659 = vmatprep.mubr.f32.mxu0 0.0
    %660 = vmatmul.mubr.f32.gmra.mxu0 %v590
    %v661 = vpop.f32.mrf.mxu0
    %v662 = vadd.f32 %v582, %v661
    %v663 = vpop.f32.mrf.mxu0
    %v664 = vadd.f32 %v586, %v663
    %665 = vmatprep.mubr.f32.mxu0 0.0
    %666 = vmatmul.mubr.f32.gmra.mxu0 %v593
    %v667 = vpop.f32.mrf.mxu0
    %v668 = vadd.f32 %v582, %v667
    %v669 = vpop.f32.mrf.mxu0
    %v670 = vadd.f32 %v586, %v669
    %671 = vdwg.mxu0
    %v672 = vxor.u32 %v662, 2147483648
    %v673 = vxor.u32 %v668, 2147483648
    %v674 = vmul.f32 %v672, 1.442695
    %v675 = vpow.pop %v674
    %v676 = vmul.f32 %v673, 1.442695
    %v677 = vpow.pop %v676
    %v678 = vadd.f32 %v675, 1.0
    %v679 = vadd.f32 %v677, 1.0
    %v680 = vrcp.pop %v678
    %v681 = vmul.f32 1.0, %v680
    %v682 = vrcp.pop %v679
    %v683 = vmul.f32 1.0, %v682
    %v684 = vtanh.pop %v664
    %v685 = vtanh.pop %v670
    %v686 = vxor.u32 %v664, 2147483648
    %v687 = vxor.u32 %v670, 2147483648
    %v688 = vmul.f32 %v686, 1.442695
    %v689 = vpow.pop %v688
    %v690 = vmul.f32 %v687, 1.442695
    %v691 = vpow.pop %v690
    %v692 = vadd.f32 %v689, 1.0
    %v693 = vadd.f32 %v691, 1.0
    %v694 = vrcp.pop %v692
    %v695 = vmul.f32 1.0, %v694
    %v696 = vrcp.pop %v693
    %v697 = vmul.f32 1.0, %v696
    %700 = vrot.lane.b32.xlu0 %v551, 64
    %v701 = vpop.permute.xlu0 %700
    %702 = vrot.lane.b32.xlu0 %v552, 64
    %v703 = vpop.permute.xlu0 %702
    %v706 = vmul.f32 %v681, %v701
    %v707 = vmul.f32 %v683, %v703
    %v708 = vmul.f32 %v681, %v684
    %v709 = vmul.f32 %v683, %v685
    %712 = vrot.lane.b32.xlu0 %v708, 64
    %v713 = vpop.permute.xlu0 %712
    %714 = vrot.lane.b32.xlu0 %v709, 64
    %v715 = vpop.permute.xlu0 %714
    %v718 = vadd.f32 %v706, %v713
    %v719 = vadd.f32 %v707, %v715
    %v720 = vtanh.pop %v718
    %v721 = vtanh.pop %v719
    %v722 = vmul.f32 %v695, %v720
    %v723 = vmul.f32 %v697, %v721
    %726 = vrot.lane.b32.xlu0 %v722, 64
    %v727 = vpop.permute.xlu0 %726
    %728 = vrot.lane.b32.xlu0 %v723, 64
    %v729 = vpop.permute.xlu0 %728
    %732 = vst.msk [vmem:[#allocation2] sm:$0xff] %vm101, %v727
    %733 = vst.msk [vmem:[#allocation2 + $0x8] sm:$0xff] %vm101, %v729
    %736 = vrot.lane.b32.xlu0 %v718, 64
    %v737 = vpop.permute.xlu0 %736
    %738 = vrot.lane.b32.xlu0 %v719, 64
    %v739 = vpop.permute.xlu0 %738
    %742 = vst.msk [vmem:[#allocation3] sm:$0xff] %vm101, %v737
    %743 = vst.msk [vmem:[#allocation3 + $0x8] sm:$0xff] %vm101, %v739
    %v744 = vld [vmem:[#allocation4] sm:$0xff]
    %v745 = vld [vmem:[#allocation4 + $0x8] sm:$0xff]
    %748 = vrot.lane.b32.xlu0 %v744, 64
    %v749 = vpop.permute.xlu0 %748
    %750 = vrot.lane.b32.xlu0 %v745, 64
    %v751 = vpop.permute.xlu0 %750
    %v754 = vsel %vm101, %v727, %v749
    %v755 = vsel %vm101, %v729, %v751
    %v756 = vld [vmem:[#allocation5] sm:$0xff]
    %v757 = vld [vmem:[#allocation5 + $0x8] sm:$0xff]
    %v758 = vld [vmem:[#allocation11] sm:$0xff]
    %v759 = vld [vmem:[#allocation11 + $0x8] sm:$0xff]
    %v760 = vld [vmem:[#allocation11 + $0x10] sm:$0xff]
    %v761 = vld [vmem:[#allocation11 + $0x18] sm:$0xff]
    %v762 = vld [vmem:[#allocation11 + $0x20] sm:$0xff]
    %v763 = vld [vmem:[#allocation11 + $0x28] sm:$0xff]
    %v764 = vld [vmem:[#allocation11 + $0x30] sm:$0xff]
    %v765 = vld [vmem:[#allocation11 + $0x38] sm:$0xff]
    %v766 = vld [vmem:[#allocation11 + $0x40] sm:$0xff]
    %v767 = vld [vmem:[#allocation11 + $0x48] sm:$0xff]
    %v768 = vld [vmem:[#allocation11 + $0x50] sm:$0xff]
    %v769 = vld [vmem:[#allocation11 + $0x58] sm:$0xff]
    %v770 = vld [vmem:[#allocation11 + $0x60] sm:$0xff]
    %v771 = vld [vmem:[#allocation11 + $0x68] sm:$0xff]
    %v772 = vld [vmem:[#allocation11 + $0x70] sm:$0xff]
    %v773 = vld [vmem:[#allocation11 + $0x78] sm:$0xff]
    %v774 = vld [vmem:[#allocation11 + $0x80] sm:$0xff]
    %v775 = vld [vmem:[#allocation11 + $0x88] sm:$0xff]
    %v776 = vld [vmem:[#allocation11 + $0x90] sm:$0xff]
    %v777 = vld [vmem:[#allocation11 + $0x98] sm:$0xff]
    %v778 = vld [vmem:[#allocation11 + $0xa0] sm:$0xff]
    %v779 = vld [vmem:[#allocation11 + $0xa8] sm:$0xff]
    %v780 = vld [vmem:[#allocation11 + $0xb0] sm:$0xff]
    %v781 = vld [vmem:[#allocation11 + $0xb8] sm:$0xff]
    %v782 = vld [vmem:[#allocation11 + $0xc0] sm:$0xff]
    %v783 = vld [vmem:[#allocation11 + $0xc8] sm:$0xff]
    %v784 = vld [vmem:[#allocation11 + $0xd0] sm:$0xff]
    %v785 = vld [vmem:[#allocation11 + $0xd8] sm:$0xff]
    %v786 = vld [vmem:[#allocation11 + $0xe0] sm:$0xff]
    %v787 = vld [vmem:[#allocation11 + $0xe8] sm:$0xff]
    %v788 = vld [vmem:[#allocation11 + $0xf0] sm:$0xff]
    %v789 = vld [vmem:[#allocation11 + $0xf8] sm:$0xff]
    %v790 = vld [vmem:[%s4] sm:$0x3]
    %v792 = vlaneseq
    %v793 = vshrl.u32 %v792, 7
    %v794 = vsub.s32 0, %v793
    %v795 = vrot.slane %v790, %v794
    %v796 = vlaneseq
    %v797 = vshrl.u32 %v796, 7
    %v798 = vsub.s32 1, %v797
    %v799 = vrot.slane %v790, %v798
    %802 = vmatprep.subr.mxu0 %v789
    %803 = vmatpush1.msra.mxu0 %v788
    %804 = vmatprep.subr.mxu0 %v787
    %805 = vmatpush1.msra.mxu0 %v786
    %806 = vmatprep.subr.mxu0 %v785
    %807 = vmatpush1.msra.mxu0 %v784
    %808 = vmatprep.subr.mxu0 %v783
    %809 = vmatpush1.msra.mxu0 %v782
    %810 = vmatprep.subr.mxu0 %v781
    %811 = vmatpush1.msra.mxu0 %v780
    %812 = vmatprep.subr.mxu0 %v779
    %813 = vmatpush1.msra.mxu0 %v778
    %814 = vmatprep.subr.mxu0 %v777
    %815 = vmatpush1.msra.mxu0 %v776
    %816 = vmatprep.subr.mxu0 %v775
    %817 = vmatpush1.msra.mxu0 %v774
    %818 = vmatprep.subr.mxu0 %v773
    %819 = vmatpush1.msra.mxu0 %v772
    %820 = vmatprep.subr.mxu0 %v771
    %821 = vmatpush1.msra.mxu0 %v770
    %822 = vmatprep.subr.mxu0 %v769
    %823 = vmatpush1.msra.mxu0 %v768
    %824 = vmatprep.subr.mxu0 %v767
    %825 = vmatpush1.msra.mxu0 %v766
    %826 = vmatprep.subr.mxu0 %v765
    %827 = vmatpush1.msra.mxu0 %v764
    %828 = vmatprep.subr.mxu0 %v763
    %829 = vmatpush1.msra.mxu0 %v762
    %830 = vmatprep.subr.mxu0 %v761
    %831 = vmatpush1.msra.mxu0 %v760
    %832 = vmatprep.subr.mxu0 %v759
    %833 = vmatpush1.msra.mxu0 %v758
    %834 = vmatprep.subr.mxu0 0.0
    %835 = vmatpush2.msra.mxu0 0.0
    %836 = vmatprep.subr.mxu0 0.0
    %837 = vmatpush2.msra.mxu0 0.0
    %838 = vmatprep.subr.mxu0 0.0
    %839 = vmatpush2.msra.mxu0 0.0
    %840 = vmatprep.subr.mxu0 0.0
    %841 = vmatpush2.msra.mxu0 0.0
    %842 = vmatprep.subr.mxu0 0.0
    %843 = vmatpush2.msra.mxu0 0.0
    %844 = vmatprep.subr.mxu0 0.0
    %845 = vmatpush2.msra.mxu0 0.0
    %846 = vmatprep.subr.mxu0 0.0
    %847 = vmatpush2.msra.mxu0 0.0
    %848 = vmatprep.subr.mxu0 0.0
    %849 = vmatpush2.msra.mxu0 0.0
    %850 = vmatprep.subr.mxu0 0.0
    %851 = vmatpush2.msra.mxu0 0.0
    %852 = vmatprep.subr.mxu0 0.0
    %853 = vmatpush2.msra.mxu0 0.0
    %854 = vmatprep.subr.mxu0 0.0
    %855 = vmatpush2.msra.mxu0 0.0
    %856 = vmatprep.subr.mxu0 0.0
    %857 = vmatpush2.msra.mxu0 0.0
    %858 = vmatprep.subr.mxu0 0.0
    %859 = vmatpush2.msra.mxu0 0.0
    %860 = vmatprep.subr.mxu0 0.0
    %861 = vmatpush2.msra.mxu0 0.0
    %862 = vmatprep.subr.mxu0 0.0
    %863 = vmatpush2.msra.mxu0 0.0
    %864 = vmatprep.subr.mxu0 0.0
    %865 = vmatpush2.msra.mxu0 0.0
    %866 = vmatprep.mubr.f32.mxu0 0.0
    %867 = vmatmul.mubr.f32.gmra.mxu0 %v754
    %v868 = vpop.f32.mrf.mxu0
    %v869 = vadd.f32 %v795, %v868
    %v870 = vpop.f32.mrf.mxu0
    %v871 = vadd.f32 %v799, %v870
    %872 = vmatprep.mubr.f32.mxu0 0.0
    %873 = vmatmul.mubr.f32.gmra.mxu0 %v755
    %v874 = vpop.f32.mrf.mxu0
    %v875 = vadd.f32 %v795, %v874
    %v876 = vpop.f32.mrf.mxu0
    %v877 = vadd.f32 %v799, %v876
    %878 = vdwg.mxu0
    %v879 = vxor.u32 %v869, 2147483648
    %v880 = vxor.u32 %v875, 2147483648
    %v881 = vmul.f32 %v879, 1.442695
    %v882 = vpow.pop %v881
    %v883 = vmul.f32 %v880, 1.442695
    %v884 = vpow.pop %v883
    %v885 = vadd.f32 %v882, 1.0
    %v886 = vadd.f32 %v884, 1.0
    %v887 = vrcp.pop %v885
    %v888 = vmul.f32 1.0, %v887
    %v889 = vrcp.pop %v886
    %v890 = vmul.f32 1.0, %v889
    %v891 = vtanh.pop %v871
    %v892 = vtanh.pop %v877
    %v893 = vxor.u32 %v871, 2147483648
    %v894 = vxor.u32 %v877, 2147483648
    %v895 = vmul.f32 %v893, 1.442695
    %v896 = vpow.pop %v895
    %v897 = vmul.f32 %v894, 1.442695
    %v898 = vpow.pop %v897
    %v899 = vadd.f32 %v896, 1.0
    %v900 = vadd.f32 %v898, 1.0
    %v901 = vrcp.pop %v899
    %v902 = vmul.f32 1.0, %v901
    %v903 = vrcp.pop %v900
    %v904 = vmul.f32 1.0, %v903
    %907 = vrot.lane.b32.xlu0 %v756, 64
    %v908 = vpop.permute.xlu0 %907
    %909 = vrot.lane.b32.xlu0 %v757, 64
    %v910 = vpop.permute.xlu0 %909
    %v913 = vmul.f32 %v888, %v908
    %v914 = vmul.f32 %v890, %v910
    %v915 = vmul.f32 %v888, %v891
    %v916 = vmul.f32 %v890, %v892
    %919 = vrot.lane.b32.xlu0 %v915, 64
    %v920 = vpop.permute.xlu0 %919
    %921 = vrot.lane.b32.xlu0 %v916, 64
    %v922 = vpop.permute.xlu0 %921
    %v925 = vadd.f32 %v913, %v920
    %v926 = vadd.f32 %v914, %v922
    %v927 = vtanh.pop %v925
    %v928 = vtanh.pop %v926
    %v929 = vmul.f32 %v902, %v927
    %v930 = vmul.f32 %v904, %v928
    %933 = vrot.lane.b32.xlu0 %v929, 64
    %v934 = vpop.permute.xlu0 %933
    %935 = vrot.lane.b32.xlu0 %v930, 64
    %v936 = vpop.permute.xlu0 %935
    %939 = vst.msk [vmem:[#allocation4] sm:$0xff] %vm101, %v934
    %940 = vst.msk [vmem:[#allocation4 + $0x8] sm:$0xff] %vm101, %v936
    %943 = vrot.lane.b32.xlu0 %v925, 64
    %v944 = vpop.permute.xlu0 %943
    %945 = vrot.lane.b32.xlu0 %v926, 64
    %v946 = vpop.permute.xlu0 %945
    %949 = vst.msk [vmem:[#allocation5] sm:$0xff] %vm101, %v944
    %950 = vst.msk [vmem:[#allocation5 + $0x8] sm:$0xff] %vm101, %v946
    %s951 = scalar_lea.vmem [#allocation15], 16
    %952 = vst.msk [vmem:[%s951] sm:$0xff] %vm101, %v934
    %953 = vst.msk [vmem:[%s951 + $0x8] sm:$0xff] %vm101, %v936
    %s954 = scalar_lea.vmem [#allocation6], 32
    %v955 = vld [vmem:[%s954] sm:$0xff]
    %v956 = vld [vmem:[%s954 + $0x8] sm:$0xff]
    %v957 = vld [vmem:[#allocation2] sm:$0xff]
    %v958 = vld [vmem:[#allocation2 + $0x8] sm:$0xff]
    %961 = vrot.lane.b32.xlu0 %v957, 32
    %v962 = vpop.permute.xlu0 %961
    %963 = vrot.lane.b32.xlu0 %v958, 32
    %v964 = vpop.permute.xlu0 %963
    %v967 = vsel %vm130, %v955, %v962
    %v968 = vsel %vm130, %v956, %v964
    %v969 = vld [vmem:[#allocation3] sm:$0xff]
    %v970 = vld [vmem:[#allocation3 + $0x8] sm:$0xff]
    %v971 = vld [vmem:[#allocation9] sm:$0xff]
    %v972 = vld [vmem:[#allocation9 + $0x8] sm:$0xff]
    %v973 = vld [vmem:[#allocation9 + $0x10] sm:$0xff]
    %v974 = vld [vmem:[#allocation9 + $0x18] sm:$0xff]
    %v975 = vld [vmem:[#allocation9 + $0x20] sm:$0xff]
    %v976 = vld [vmem:[#allocation9 + $0x28] sm:$0xff]
    %v977 = vld [vmem:[#allocation9 + $0x30] sm:$0xff]
    %v978 = vld [vmem:[#allocation9 + $0x38] sm:$0xff]
    %v979 = vld [vmem:[#allocation9 + $0x40] sm:$0xff]
    %v980 = vld [vmem:[#allocation9 + $0x48] sm:$0xff]
    %v981 = vld [vmem:[#allocation9 + $0x50] sm:$0xff]
    %v982 = vld [vmem:[#allocation9 + $0x58] sm:$0xff]
    %v983 = vld [vmem:[#allocation9 + $0x60] sm:$0xff]
    %v984 = vld [vmem:[#allocation9 + $0x68] sm:$0xff]
    %v985 = vld [vmem:[#allocation9 + $0x70] sm:$0xff]
    %v986 = vld [vmem:[#allocation9 + $0x78] sm:$0xff]
    %v987 = vld [vmem:[#allocation9 + $0x80] sm:$0xff]
    %v988 = vld [vmem:[#allocation9 + $0x88] sm:$0xff]
    %v989 = vld [vmem:[#allocation9 + $0x90] sm:$0xff]
    %v990 = vld [vmem:[#allocation9 + $0x98] sm:$0xff]
    %v991 = vld [vmem:[#allocation9 + $0xa0] sm:$0xff]
    %v992 = vld [vmem:[#allocation9 + $0xa8] sm:$0xff]
    %v993 = vld [vmem:[#allocation9 + $0xb0] sm:$0xff]
    %v994 = vld [vmem:[#allocation9 + $0xb8] sm:$0xff]
    %v995 = vld [vmem:[%s2] sm:$0x3]
    %v997 = vlaneseq
    %v998 = vshrl.u32 %v997, 7
    %v999 = vsub.s32 0, %v998
    %v1000 = vrot.slane %v995, %v999
    %v1001 = vlaneseq
    %v1002 = vshrl.u32 %v1001, 7
    %v1003 = vsub.s32 1, %v1002
    %v1004 = vrot.slane %v995, %v1003
    %v1008 = vsel %vm171, %v967, 0
    %v1011 = vsel %vm171, %v968, 0
    %1013 = vmatprep.subr.mxu0 0.0
    %1014 = vmatpush1.msra.mxu0 0.0
    %1015 = vmatprep.subr.mxu0 0.0
    %1016 = vmatpush1.msra.mxu0 0.0
    %1017 = vmatprep.subr.mxu0 0.0
    %1018 = vmatpush1.msra.mxu0 0.0
    %1019 = vmatprep.subr.mxu0 0.0
    %1020 = vmatpush1.msra.mxu0 0.0
    %1021 = vmatprep.subr.mxu0 %v994
    %1022 = vmatpush1.msra.mxu0 %v993
    %1023 = vmatprep.subr.mxu0 %v992
    %1024 = vmatpush1.msra.mxu0 %v991
    %1025 = vmatprep.subr.mxu0 %v990
    %1026 = vmatpush1.msra.mxu0 %v989
    %1027 = vmatprep.subr.mxu0 %v988
    %1028 = vmatpush1.msra.mxu0 %v987
    %1029 = vmatprep.subr.mxu0 %v986
    %1030 = vmatpush1.msra.mxu0 %v985
    %1031 = vmatprep.subr.mxu0 %v984
    %1032 = vmatpush1.msra.mxu0 %v983
    %1033 = vmatprep.subr.mxu0 %v982
    %1034 = vmatpush1.msra.mxu0 %v981
    %1035 = vmatprep.subr.mxu0 %v980
    %1036 = vmatpush1.msra.mxu0 %v979
    %1037 = vmatprep.subr.mxu0 %v978
    %1038 = vmatpush1.msra.mxu0 %v977
    %1039 = vmatprep.subr.mxu0 %v976
    %1040 = vmatpush1.msra.mxu0 %v975
    %1041 = vmatprep.subr.mxu0 %v974
    %1042 = vmatpush1.msra.mxu0 %v973
    %1043 = vmatprep.subr.mxu0 %v972
    %1044 = vmatpush1.msra.mxu0 %v971
    %1045 = vmatprep.subr.mxu0 0.0
    %1046 = vmatpush2.msra.mxu0 0.0
    %1047 = vmatprep.subr.mxu0 0.0
    %1048 = vmatpush2.msra.mxu0 0.0
    %1049 = vmatprep.subr.mxu0 0.0
    %1050 = vmatpush2.msra.mxu0 0.0
    %1051 = vmatprep.subr.mxu0 0.0
    %1052 = vmatpush2.msra.mxu0 0.0
    %1053 = vmatprep.subr.mxu0 0.0
    %1054 = vmatpush2.msra.mxu0 0.0
    %1055 = vmatprep.subr.mxu0 0.0
    %1056 = vmatpush2.msra.mxu0 0.0
    %1057 = vmatprep.subr.mxu0 0.0
    %1058 = vmatpush2.msra.mxu0 0.0
    %1059 = vmatprep.subr.mxu0 0.0
    %1060 = vmatpush2.msra.mxu0 0.0
    %1061 = vmatprep.subr.mxu0 0.0
    %1062 = vmatpush2.msra.mxu0 0.0
    %1063 = vmatprep.subr.mxu0 0.0
    %1064 = vmatpush2.msra.mxu0 0.0
    %1065 = vmatprep.subr.mxu0 0.0
    %1066 = vmatpush2.msra.mxu0 0.0
    %1067 = vmatprep.subr.mxu0 0.0
    %1068 = vmatpush2.msra.mxu0 0.0
    %1069 = vmatprep.subr.mxu0 0.0
    %1070 = vmatpush2.msra.mxu0 0.0
    %1071 = vmatprep.subr.mxu0 0.0
    %1072 = vmatpush2.msra.mxu0 0.0
    %1073 = vmatprep.subr.mxu0 0.0
    %1074 = vmatpush2.msra.mxu0 0.0
    %1075 = vmatprep.subr.mxu0 0.0
    %1076 = vmatpush2.msra.mxu0 0.0
    %1077 = vmatprep.mubr.f32.mxu0 0.0
    %1078 = vmatmul.mubr.f32.gmra.mxu0 %v1008
    %v1079 = vpop.f32.mrf.mxu0
    %v1080 = vadd.f32 %v1000, %v1079
    %v1081 = vpop.f32.mrf.mxu0
    %v1082 = vadd.f32 %v1004, %v1081
    %1083 = vmatprep.mubr.f32.mxu0 0.0
    %1084 = vmatmul.mubr.f32.gmra.mxu0 %v1011
    %v1085 = vpop.f32.mrf.mxu0
    %v1086 = vadd.f32 %v1000, %v1085
    %v1087 = vpop.f32.mrf.mxu0
    %v1088 = vadd.f32 %v1004, %v1087
    %1089 = vdwg.mxu0
    %v1090 = vxor.u32 %v1080, 2147483648
    %v1091 = vxor.u32 %v1086, 2147483648
    %v1092 = vmul.f32 %v1090, 1.442695
    %v1093 = vpow.pop %v1092
    %v1094 = vmul.f32 %v1091, 1.442695
    %v1095 = vpow.pop %v1094
    %v1096 = vadd.f32 %v1093, 1.0
    %v1097 = vadd.f32 %v1095, 1.0
    %v1098 = vrcp.pop %v1096
    %v1099 = vmul.f32 1.0, %v1098
    %v1100 = vrcp.pop %v1097
    %v1101 = vmul.f32 1.0, %v1100
    %v1102 = vtanh.pop %v1082
    %v1103 = vtanh.pop %v1088
    %v1104 = vxor.u32 %v1082, 2147483648
    %v1105 = vxor.u32 %v1088, 2147483648
    %v1106 = vmul.f32 %v1104, 1.442695
    %v1107 = vpow.pop %v1106
    %v1108 = vmul.f32 %v1105, 1.442695
    %v1109 = vpow.pop %v1108
    %v1110 = vadd.f32 %v1107, 1.0
    %v1111 = vadd.f32 %v1109, 1.0
    %v1112 = vrcp.pop %v1110
    %v1113 = vmul.f32 1.0, %v1112
    %v1114 = vrcp.pop %v1111
    %v1115 = vmul.f32 1.0, %v1114
    %1118 = vrot.lane.b32.xlu0 %v969, 64
    %v1119 = vpop.permute.xlu0 %1118
    %1120 = vrot.lane.b32.xlu0 %v970, 64
    %v1121 = vpop.permute.xlu0 %1120
    %v1124 = vmul.f32 %v1099, %v1119
    %v1125 = vmul.f32 %v1101, %v1121
    %v1126 = vmul.f32 %v1099, %v1102
    %v1127 = vmul.f32 %v1101, %v1103
    %1130 = vrot.lane.b32.xlu0 %v1126, 64
    %v1131 = vpop.permute.xlu0 %1130
    %1132 = vrot.lane.b32.xlu0 %v1127, 64
    %v1133 = vpop.permute.xlu0 %1132
    %v1136 = vadd.f32 %v1124, %v1131
    %v1137 = vadd.f32 %v1125, %v1133
    %v1138 = vtanh.pop %v1136
    %v1139 = vtanh.pop %v1137
    %v1140 = vmul.f32 %v1113, %v1138
    %v1141 = vmul.f32 %v1115, %v1139
    %1144 = vrot.lane.b32.xlu0 %v1140, 64
    %v1145 = vpop.permute.xlu0 %1144
    %1146 = vrot.lane.b32.xlu0 %v1141, 64
    %v1147 = vpop.permute.xlu0 %1146
    %1150 = vst.msk [vmem:[#allocation2] sm:$0xff] %vm101, %v1145
    %1151 = vst.msk [vmem:[#allocation2 + $0x8] sm:$0xff] %vm101, %v1147
    %1154 = vrot.lane.b32.xlu0 %v1136, 64
    %v1155 = vpop.permute.xlu0 %1154
    %1156 = vrot.lane.b32.xlu0 %v1137, 64
    %v1157 = vpop.permute.xlu0 %1156
    %1160 = vst.msk [vmem:[#allocation3] sm:$0xff] %vm101, %v1155
    %1161 = vst.msk [vmem:[#allocation3 + $0x8] sm:$0xff] %vm101, %v1157
    %v1162 = vld [vmem:[#allocation4] sm:$0xff]
    %v1163 = vld [vmem:[#allocation4 + $0x8] sm:$0xff]
    %1166 = vrot.lane.b32.xlu0 %v1162, 64
    %v1167 = vpop.permute.xlu0 %1166
    %1168 = vrot.lane.b32.xlu0 %v1163, 64
    %v1169 = vpop.permute.xlu0 %1168
    %v1172 = vsel %vm101, %v1145, %v1167
    %v1173 = vsel %vm101, %v1147, %v1169
    %v1174 = vld [vmem:[#allocation5] sm:$0xff]
    %v1175 = vld [vmem:[#allocation5 + $0x8] sm:$0xff]
    %v1176 = vld [vmem:[#allocation11] sm:$0xff]
    %v1177 = vld [vmem:[#allocation11 + $0x8] sm:$0xff]
    %v1178 = vld [vmem:[#allocation11 + $0x10] sm:$0xff]
    %v1179 = vld [vmem:[#allocation11 + $0x18] sm:$0xff]
    %v1180 = vld [vmem:[#allocation11 + $0x20] sm:$0xff]
    %v1181 = vld [vmem:[#allocation11 + $0x28] sm:$0xff]
    %v1182 = vld [vmem:[#allocation11 + $0x30] sm:$0xff]
    %v1183 = vld [vmem:[#allocation11 + $0x38] sm:$0xff]
    %v1184 = vld [vmem:[#allocation11 + $0x40] sm:$0xff]
    %v1185 = vld [vmem:[#allocation11 + $0x48] sm:$0xff]
    %v1186 = vld [vmem:[#allocation11 + $0x50] sm:$0xff]
    %v1187 = vld [vmem:[#allocation11 + $0x58] sm:$0xff]
    %v1188 = vld [vmem:[#allocation11 + $0x60] sm:$0xff]
    %v1189 = vld [vmem:[#allocation11 + $0x68] sm:$0xff]
    %v1190 = vld [vmem:[#allocation11 + $0x70] sm:$0xff]
    %v1191 = vld [vmem:[#allocation11 + $0x78] sm:$0xff]
    %v1192 = vld [vmem:[#allocation11 + $0x80] sm:$0xff]
    %v1193 = vld [vmem:[#allocation11 + $0x88] sm:$0xff]
    %v1194 = vld [vmem:[#allocation11 + $0x90] sm:$0xff]
    %v1195 = vld [vmem:[#allocation11 + $0x98] sm:$0xff]
    %v1196 = vld [vmem:[#allocation11 + $0xa0] sm:$0xff]
    %v1197 = vld [vmem:[#allocation11 + $0xa8] sm:$0xff]
    %v1198 = vld [vmem:[#allocation11 + $0xb0] sm:$0xff]
    %v1199 = vld [vmem:[#allocation11 + $0xb8] sm:$0xff]
    %v1200 = vld [vmem:[#allocation11 + $0xc0] sm:$0xff]
    %v1201 = vld [vmem:[#allocation11 + $0xc8] sm:$0xff]
    %v1202 = vld [vmem:[#allocation11 + $0xd0] sm:$0xff]
    %v1203 = vld [vmem:[#allocation11 + $0xd8] sm:$0xff]
    %v1204 = vld [vmem:[#allocation11 + $0xe0] sm:$0xff]
    %v1205 = vld [vmem:[#allocation11 + $0xe8] sm:$0xff]
    %v1206 = vld [vmem:[#allocation11 + $0xf0] sm:$0xff]
    %v1207 = vld [vmem:[#allocation11 + $0xf8] sm:$0xff]
    %v1208 = vld [vmem:[%s4] sm:$0x3]
    %v1210 = vlaneseq
    %v1211 = vshrl.u32 %v1210, 7
    %v1212 = vsub.s32 0, %v1211
    %v1213 = vrot.slane %v1208, %v1212
    %v1214 = vlaneseq
    %v1215 = vshrl.u32 %v1214, 7
    %v1216 = vsub.s32 1, %v1215
    %v1217 = vrot.slane %v1208, %v1216
    %1220 = vmatprep.subr.mxu0 %v1207
    %1221 = vmatpush1.msra.mxu0 %v1206
    %1222 = vmatprep.subr.mxu0 %v1205
    %1223 = vmatpush1.msra.mxu0 %v1204
    %1224 = vmatprep.subr.mxu0 %v1203
    %1225 = vmatpush1.msra.mxu0 %v1202
    %1226 = vmatprep.subr.mxu0 %v1201
    %1227 = vmatpush1.msra.mxu0 %v1200
    %1228 = vmatprep.subr.mxu0 %v1199
    %1229 = vmatpush1.msra.mxu0 %v1198
    %1230 = vmatprep.subr.mxu0 %v1197
    %1231 = vmatpush1.msra.mxu0 %v1196
    %1232 = vmatprep.subr.mxu0 %v1195
    %1233 = vmatpush1.msra.mxu0 %v1194
    %1234 = vmatprep.subr.mxu0 %v1193
    %1235 = vmatpush1.msra.mxu0 %v1192
    %1236 = vmatprep.subr.mxu0 %v1191
    %1237 = vmatpush1.msra.mxu0 %v1190
    %1238 = vmatprep.subr.mxu0 %v1189
    %1239 = vmatpush1.msra.mxu0 %v1188
    %1240 = vmatprep.subr.mxu0 %v1187
    %1241 = vmatpush1.msra.mxu0 %v1186
    %1242 = vmatprep.subr.mxu0 %v1185
    %1243 = vmatpush1.msra.mxu0 %v1184
    %1244 = vmatprep.subr.mxu0 %v1183
    %1245 = vmatpush1.msra.mxu0 %v1182
    %1246 = vmatprep.subr.mxu0 %v1181
    %1247 = vmatpush1.msra.mxu0 %v1180
    %1248 = vmatprep.subr.mxu0 %v1179
    %1249 = vmatpush1.msra.mxu0 %v1178
    %1250 = vmatprep.subr.mxu0 %v1177
    %1251 = vmatpush1.msra.mxu0 %v1176
    %1252 = vmatprep.subr.mxu0 0.0
    %1253 = vmatpush2.msra.mxu0 0.0
    %1254 = vmatprep.subr.mxu0 0.0
    %1255 = vmatpush2.msra.mxu0 0.0
    %1256 = vmatprep.subr.mxu0 0.0
    %1257 = vmatpush2.msra.mxu0 0.0
    %1258 = vmatprep.subr.mxu0 0.0
    %1259 = vmatpush2.msra.mxu0 0.0
    %1260 = vmatprep.subr.mxu0 0.0
    %1261 = vmatpush2.msra.mxu0 0.0
    %1262 = vmatprep.subr.mxu0 0.0
    %1263 = vmatpush2.msra.mxu0 0.0
    %1264 = vmatprep.subr.mxu0 0.0
    %1265 = vmatpush2.msra.mxu0 0.0
    %1266 = vmatprep.subr.mxu0 0.0
    %1267 = vmatpush2.msra.mxu0 0.0
    %1268 = vmatprep.subr.mxu0 0.0
    %1269 = vmatpush2.msra.mxu0 0.0
    %1270 = vmatprep.subr.mxu0 0.0
    %1271 = vmatpush2.msra.mxu0 0.0
    %1272 = vmatprep.subr.mxu0 0.0
    %1273 = vmatpush2.msra.mxu0 0.0
    %1274 = vmatprep.subr.mxu0 0.0
    %1275 = vmatpush2.msra.mxu0 0.0
    %1276 = vmatprep.subr.mxu0 0.0
    %1277 = vmatpush2.msra.mxu0 0.0
    %1278 = vmatprep.subr.mxu0 0.0
    %1279 = vmatpush2.msra.mxu0 0.0
    %1280 = vmatprep.subr.mxu0 0.0
    %1281 = vmatpush2.msra.mxu0 0.0
    %1282 = vmatprep.subr.mxu0 0.0
    %1283 = vmatpush2.msra.mxu0 0.0
    %1284 = vmatprep.mubr.f32.mxu0 0.0
    %1285 = vmatmul.mubr.f32.gmra.mxu0 %v1172
    %v1286 = vpop.f32.mrf.mxu0
    %v1287 = vadd.f32 %v1213, %v1286
    %v1288 = vpop.f32.mrf.mxu0
    %v1289 = vadd.f32 %v1217, %v1288
    %1290 = vmatprep.mubr.f32.mxu0 0.0
    %1291 = vmatmul.mubr.f32.gmra.mxu0 %v1173
    %v1292 = vpop.f32.mrf.mxu0
    %v1293 = vadd.f32 %v1213, %v1292
    %v1294 = vpop.f32.mrf.mxu0
    %v1295 = vadd.f32 %v1217, %v1294
    %1296 = vdwg.mxu0
    %v1297 = vxor.u32 %v1287, 2147483648
    %v1298 = vxor.u32 %v1293, 2147483648
    %v1299 = vmul.f32 %v1297, 1.442695
    %v1300 = vpow.pop %v1299
    %v1301 = vmul.f32 %v1298, 1.442695
    %v1302 = vpow.pop %v1301
    %v1303 = vadd.f32 %v1300, 1.0
    %v1304 = vadd.f32 %v1302, 1.0
    %v1305 = vrcp.pop %v1303
    %v1306 = vmul.f32 1.0, %v1305
    %v1307 = vrcp.pop %v1304
    %v1308 = vmul.f32 1.0, %v1307
    %v1309 = vtanh.pop %v1289
    %v1310 = vtanh.pop %v1295
    %v1311 = vxor.u32 %v1289, 2147483648
    %v1312 = vxor.u32 %v1295, 2147483648
    %v1313 = vmul.f32 %v1311, 1.442695
    %v1314 = vpow.pop %v1313
    %v1315 = vmul.f32 %v1312, 1.442695
    %v1316 = vpow.pop %v1315
    %v1317 = vadd.f32 %v1314, 1.0
    %v1318 = vadd.f32 %v1316, 1.0
    %v1319 = vrcp.pop %v1317
    %v1320 = vmul.f32 1.0, %v1319
    %v1321 = vrcp.pop %v1318
    %v1322 = vmul.f32 1.0, %v1321
    %1325 = vrot.lane.b32.xlu0 %v1174, 64
    %v1326 = vpop.permute.xlu0 %1325
    %1327 = vrot.lane.b32.xlu0 %v1175, 64
    %v1328 = vpop.permute.xlu0 %1327
    %v1331 = vmul.f32 %v1306, %v1326
    %v1332 = vmul.f32 %v1308, %v1328
    %v1333 = vmul.f32 %v1306, %v1309
    %v1334 = vmul.f32 %v1308, %v1310
    %1337 = vrot.lane.b32.xlu0 %v1333, 64
    %v1338 = vpop.permute.xlu0 %1337
    %1339 = vrot.lane.b32.xlu0 %v1334, 64
    %v1340 = vpop.permute.xlu0 %1339
    %v1343 = vadd.f32 %v1331, %v1338
    %v1344 = vadd.f32 %v1332, %v1340
    %v1345 = vtanh.pop %v1343
    %v1346 = vtanh.pop %v1344
    %v1347 = vmul.f32 %v1320, %v1345
    %v1348 = vmul.f32 %v1322, %v1346
    %1351 = vrot.lane.b32.xlu0 %v1347, 64
    %v1352 = vpop.permute.xlu0 %1351
    %1353 = vrot.lane.b32.xlu0 %v1348, 64
    %v1354 = vpop.permute.xlu0 %1353
    %1357 = vst.msk [vmem:[#allocation4] sm:$0xff] %vm101, %v1352
    %1358 = vst.msk [vmem:[#allocation4 + $0x8] sm:$0xff] %vm101, %v1354
    %1361 = vrot.lane.b32.xlu0 %v1343, 64
    %v1362 = vpop.permute.xlu0 %1361
    %1363 = vrot.lane.b32.xlu0 %v1344, 64
    %v1364 = vpop.permute.xlu0 %1363
    %1367 = vst.msk [vmem:[#allocation5] sm:$0xff] %vm101, %v1362
    %1368 = vst.msk [vmem:[#allocation5 + $0x8] sm:$0xff] %vm101, %v1364
    %s1369 = scalar_lea.vmem [#allocation15], 32
    %1370 = vst.msk [vmem:[%s1369] sm:$0xff] %vm101, %v1352
    %1371 = vst.msk [vmem:[%s1369 + $0x8] sm:$0xff] %vm101, %v1354
    %s1372 = scalar_lea.vmem [#allocation6], 48
    %v1373 = vld [vmem:[%s1372] sm:$0xff]
    %v1374 = vld [vmem:[%s1372 + $0x8] sm:$0xff]
    %v1375 = vld [vmem:[#allocation2] sm:$0xff]
    %v1376 = vld [vmem:[#allocation2 + $0x8] sm:$0xff]
    %1379 = vrot.lane.b32.xlu0 %v1375, 32
    %v1380 = vpop.permute.xlu0 %1379
    %1381 = vrot.lane.b32.xlu0 %v1376, 32
    %v1382 = vpop.permute.xlu0 %1381
    %v1385 = vsel %vm130, %v1373, %v1380
    %v1386 = vsel %vm130, %v1374, %v1382
    %v1387 = vld [vmem:[#allocation3] sm:$0xff]
    %v1388 = vld [vmem:[#allocation3 + $0x8] sm:$0xff]
    %v1389 = vld [vmem:[#allocation9] sm:$0xff]
    %v1390 = vld [vmem:[#allocation9 + $0x8] sm:$0xff]
    %v1391 = vld [vmem:[#allocation9 + $0x10] sm:$0xff]
    %v1392 = vld [vmem:[#allocation9 + $0x18] sm:$0xff]
    %v1393 = vld [vmem:[#allocation9 + $0x20] sm:$0xff]
    %v1394 = vld [vmem:[#allocation9 + $0x28] sm:$0xff]
    %v1395 = vld [vmem:[#allocation9 + $0x30] sm:$0xff]
    %v1396 = vld [vmem:[#allocation9 + $0x38] sm:$0xff]
    %v1397 = vld [vmem:[#allocation9 + $0x40] sm:$0xff]
    %v1398 = vld [vmem:[#allocation9 + $0x48] sm:$0xff]
    %v1399 = vld [vmem:[#allocation9 + $0x50] sm:$0xff]
    %v1400 = vld [vmem:[#allocation9 + $0x58] sm:$0xff]
    %v1401 = vld [vmem:[#allocation9 + $0x60] sm:$0xff]
    %v1402 = vld [vmem:[#allocation9 + $0x68] sm:$0xff]
    %v1403 = vld [vmem:[#allocation9 + $0x70] sm:$0xff]
    %v1404 = vld [vmem:[#allocation9 + $0x78] sm:$0xff]
    %v1405 = vld [vmem:[#allocation9 + $0x80] sm:$0xff]
    %v1406 = vld [vmem:[#allocation9 + $0x88] sm:$0xff]
    %v1407 = vld [vmem:[#allocation9 + $0x90] sm:$0xff]
    %v1408 = vld [vmem:[#allocation9 + $0x98] sm:$0xff]
    %v1409 = vld [vmem:[#allocation9 + $0xa0] sm:$0xff]
    %v1410 = vld [vmem:[#allocation9 + $0xa8] sm:$0xff]
    %v1411 = vld [vmem:[#allocation9 + $0xb0] sm:$0xff]
    %v1412 = vld [vmem:[#allocation9 + $0xb8] sm:$0xff]
    %v1413 = vld [vmem:[%s2] sm:$0x3]
    %v1415 = vlaneseq
    %v1416 = vshrl.u32 %v1415, 7
    %v1417 = vsub.s32 0, %v1416
    %v1418 = vrot.slane %v1413, %v1417
    %v1419 = vlaneseq
    %v1420 = vshrl.u32 %v1419, 7
    %v1421 = vsub.s32 1, %v1420
    %v1422 = vrot.slane %v1413, %v1421
    %v1426 = vsel %vm171, %v1385, 0
    %v1429 = vsel %vm171, %v1386, 0
    %1431 = vmatprep.subr.mxu0 0.0
    %1432 = vmatpush1.msra.mxu0 0.0
    %1433 = vmatprep.subr.mxu0 0.0
    %1434 = vmatpush1.msra.mxu0 0.0
    %1435 = vmatprep.subr.mxu0 0.0
    %1436 = vmatpush1.msra.mxu0 0.0
    %1437 = vmatprep.subr.mxu0 0.0
    %1438 = vmatpush1.msra.mxu0 0.0
    %1439 = vmatprep.subr.mxu0 %v1412
    %1440 = vmatpush1.msra.mxu0 %v1411
    %1441 = vmatprep.subr.mxu0 %v1410
    %1442 = vmatpush1.msra.mxu0 %v1409
    %1443 = vmatprep.subr.mxu0 %v1408
    %1444 = vmatpush1.msra.mxu0 %v1407
    %1445 = vmatprep.subr.mxu0 %v1406
    %1446 = vmatpush1.msra.mxu0 %v1405
    %1447 = vmatprep.subr.mxu0 %v1404
    %1448 = vmatpush1.msra.mxu0 %v1403
    %1449 = vmatprep.subr.mxu0 %v1402
    %1450 = vmatpush1.msra.mxu0 %v1401
    %1451 = vmatprep.subr.mxu0 %v1400
    %1452 = vmatpush1.msra.mxu0 %v1399
    %1453 = vmatprep.subr.mxu0 %v1398
    %1454 = vmatpush1.msra.mxu0 %v1397
    %1455 = vmatprep.subr.mxu0 %v1396
    %1456 = vmatpush1.msra.mxu0 %v1395
    %1457 = vmatprep.subr.mxu0 %v1394
    %1458 = vmatpush1.msra.mxu0 %v1393
    %1459 = vmatprep.subr.mxu0 %v1392
    %1460 = vmatpush1.msra.mxu0 %v1391
    %1461 = vmatprep.subr.mxu0 %v1390
    %1462 = vmatpush1.msra.mxu0 %v1389
    %1463 = vmatprep.subr.mxu0 0.0
    %1464 = vmatpush2.msra.mxu0 0.0
    %1465 = vmatprep.subr.mxu0 0.0
    %1466 = vmatpush2.msra.mxu0 0.0
    %1467 = vmatprep.subr.mxu0 0.0
    %1468 = vmatpush2.msra.mxu0 0.0
    %1469 = vmatprep.subr.mxu0 0.0
    %1470 = vmatpush2.msra.mxu0 0.0
    %1471 = vmatprep.subr.mxu0 0.0
    %1472 = vmatpush2.msra.mxu0 0.0
    %1473 = vmatprep.subr.mxu0 0.0
    %1474 = vmatpush2.msra.mxu0 0.0
    %1475 = vmatprep.subr.mxu0 0.0
    %1476 = vmatpush2.msra.mxu0 0.0
    %1477 = vmatprep.subr.mxu0 0.0
    %1478 = vmatpush2.msra.mxu0 0.0
    %1479 = vmatprep.subr.mxu0 0.0
    %1480 = vmatpush2.msra.mxu0 0.0
    %1481 = vmatprep.subr.mxu0 0.0
    %1482 = vmatpush2.msra.mxu0 0.0
    %1483 = vmatprep.subr.mxu0 0.0
    %1484 = vmatpush2.msra.mxu0 0.0
    %1485 = vmatprep.subr.mxu0 0.0
    %1486 = vmatpush2.msra.mxu0 0.0
    %1487 = vmatprep.subr.mxu0 0.0
    %1488 = vmatpush2.msra.mxu0 0.0
    %1489 = vmatprep.subr.mxu0 0.0
    %1490 = vmatpush2.msra.mxu0 0.0
    %1491 = vmatprep.subr.mxu0 0.0
    %1492 = vmatpush2.msra.mxu0 0.0
    %1493 = vmatprep.subr.mxu0 0.0
    %1494 = vmatpush2.msra.mxu0 0.0
    %1495 = vmatprep.mubr.f32.mxu0 0.0
    %1496 = vmatmul.mubr.f32.gmra.mxu0 %v1426
    %v1497 = vpop.f32.mrf.mxu0
    %v1498 = vadd.f32 %v1418, %v1497
    %v1499 = vpop.f32.mrf.mxu0
    %v1500 = vadd.f32 %v1422, %v1499
    %1501 = vmatprep.mubr.f32.mxu0 0.0
    %1502 = vmatmul.mubr.f32.gmra.mxu0 %v1429
    %v1503 = vpop.f32.mrf.mxu0
    %v1504 = vadd.f32 %v1418, %v1503
    %v1505 = vpop.f32.mrf.mxu0
    %v1506 = vadd.f32 %v1422, %v1505
    %1507 = vdwg.mxu0
    %v1508 = vxor.u32 %v1498, 2147483648
    %v1509 = vxor.u32 %v1504, 2147483648
    %v1510 = vmul.f32 %v1508, 1.442695
    %v1511 = vpow.pop %v1510
    %v1512 = vmul.f32 %v1509, 1.442695
    %v1513 = vpow.pop %v1512
    %v1514 = vadd.f32 %v1511, 1.0
    %v1515 = vadd.f32 %v1513, 1.0
    %v1516 = vrcp.pop %v1514
    %v1517 = vmul.f32 1.0, %v1516
    %v1518 = vrcp.pop %v1515
    %v1519 = vmul.f32 1.0, %v1518
    %v1520 = vtanh.pop %v1500
    %v1521 = vtanh.pop %v1506
    %v1522 = vxor.u32 %v1500, 2147483648
    %v1523 = vxor.u32 %v1506, 2147483648
    %v1524 = vmul.f32 %v1522, 1.442695
    %v1525 = vpow.pop %v1524
    %v1526 = vmul.f32 %v1523, 1.442695
    %v1527 = vpow.pop %v1526
    %v1528 = vadd.f32 %v1525, 1.0
    %v1529 = vadd.f32 %v1527, 1.0
    %v1530 = vrcp.pop %v1528
    %v1531 = vmul.f32 1.0, %v1530
    %v1532 = vrcp.pop %v1529
    %v1533 = vmul.f32 1.0, %v1532
    %1536 = vrot.lane.b32.xlu0 %v1387, 64
    %v1537 = vpop.permute.xlu0 %1536
    %1538 = vrot.lane.b32.xlu0 %v1388, 64
    %v1539 = vpop.permute.xlu0 %1538
    %v1542 = vmul.f32 %v1517, %v1537
    %v1543 = vmul.f32 %v1519, %v1539
    %v1544 = vmul.f32 %v1517, %v1520
    %v1545 = vmul.f32 %v1519, %v1521
    %1548 = vrot.lane.b32.xlu0 %v1544, 64
    %v1549 = vpop.permute.xlu0 %1548
    %1550 = vrot.lane.b32.xlu0 %v1545, 64
    %v1551 = vpop.permute.xlu0 %1550
    %v1554 = vadd.f32 %v1542, %v1549
    %v1555 = vadd.f32 %v1543, %v1551
    %v1556 = vtanh.pop %v1554
    %v1557 = vtanh.pop %v1555
    %v1558 = vmul.f32 %v1531, %v1556
    %v1559 = vmul.f32 %v1533, %v1557
    %1562 = vrot.lane.b32.xlu0 %v1558, 64
    %v1563 = vpop.permute.xlu0 %1562
    %1564 = vrot.lane.b32.xlu0 %v1559, 64
    %v1565 = vpop.permute.xlu0 %1564
    %1568 = vst.msk [vmem:[#allocation2] sm:$0xff] %vm101, %v1563
    %1569 = vst.msk [vmem:[#allocation2 + $0x8] sm:$0xff] %vm101, %v1565
    %1572 = vrot.lane.b32.xlu0 %v1554, 64
    %v1573 = vpop.permute.xlu0 %1572
    %1574 = vrot.lane.b32.xlu0 %v1555, 64
    %v1575 = vpop.permute.xlu0 %1574
    %1578 = vst.msk [vmem:[#allocation3] sm:$0xff] %vm101, %v1573
    %1579 = vst.msk [vmem:[#allocation3 + $0x8] sm:$0xff] %vm101, %v1575
    %v1580 = vld [vmem:[#allocation4] sm:$0xff]
    %v1581 = vld [vmem:[#allocation4 + $0x8] sm:$0xff]
    %1584 = vrot.lane.b32.xlu0 %v1580, 64
    %v1585 = vpop.permute.xlu0 %1584
    %1586 = vrot.lane.b32.xlu0 %v1581, 64
    %v1587 = vpop.permute.xlu0 %1586
    %v1590 = vsel %vm101, %v1563, %v1585
    %v1591 = vsel %vm101, %v1565, %v1587
    %v1592 = vld [vmem:[#allocation5] sm:$0xff]
    %v1593 = vld [vmem:[#allocation5 + $0x8] sm:$0xff]
    %v1594 = vld [vmem:[#allocation11] sm:$0xff]
    %v1595 = vld [vmem:[#allocation11 + $0x8] sm:$0xff]
    %v1596 = vld [vmem:[#allocation11 + $0x10] sm:$0xff]
    %v1597 = vld [vmem:[#allocation11 + $0x18] sm:$0xff]
    %v1598 = vld [vmem:[#allocation11 + $0x20] sm:$0xff]
    %v1599 = vld [vmem:[#allocation11 + $0x28] sm:$0xff]
    %v1600 = vld [vmem:[#allocation11 + $0x30] sm:$0xff]
    %v1601 = vld [vmem:[#allocation11 + $0x38] sm:$0xff]
    %v1602 = vld [vmem:[#allocation11 + $0x40] sm:$0xff]
    %v1603 = vld [vmem:[#allocation11 + $0x48] sm:$0xff]
    %v1604 = vld [vmem:[#allocation11 + $0x50] sm:$0xff]
    %v1605 = vld [vmem:[#allocation11 + $0x58] sm:$0xff]
    %v1606 = vld [vmem:[#allocation11 + $0x60] sm:$0xff]
    %v1607 = vld [vmem:[#allocation11 + $0x68] sm:$0xff]
    %v1608 = vld [vmem:[#allocation11 + $0x70] sm:$0xff]
    %v1609 = vld [vmem:[#allocation11 + $0x78] sm:$0xff]
    %v1610 = vld [vmem:[#allocation11 + $0x80] sm:$0xff]
    %v1611 = vld [vmem:[#allocation11 + $0x88] sm:$0xff]
    %v1612 = vld [vmem:[#allocation11 + $0x90] sm:$0xff]
    %v1613 = vld [vmem:[#allocation11 + $0x98] sm:$0xff]
    %v1614 = vld [vmem:[#allocation11 + $0xa0] sm:$0xff]
    %v1615 = vld [vmem:[#allocation11 + $0xa8] sm:$0xff]
    %v1616 = vld [vmem:[#allocation11 + $0xb0] sm:$0xff]
    %v1617 = vld [vmem:[#allocation11 + $0xb8] sm:$0xff]
    %v1618 = vld [vmem:[#allocation11 + $0xc0] sm:$0xff]
    %v1619 = vld [vmem:[#allocation11 + $0xc8] sm:$0xff]
    %v1620 = vld [vmem:[#allocation11 + $0xd0] sm:$0xff]
    %v1621 = vld [vmem:[#allocation11 + $0xd8] sm:$0xff]
    %v1622 = vld [vmem:[#allocation11 + $0xe0] sm:$0xff]
    %v1623 = vld [vmem:[#allocation11 + $0xe8] sm:$0xff]
    %v1624 = vld [vmem:[#allocation11 + $0xf0] sm:$0xff]
    %v1625 = vld [vmem:[#allocation11 + $0xf8] sm:$0xff]
    %v1626 = vld [vmem:[%s4] sm:$0x3]
    %v1628 = vlaneseq
    %v1629 = vshrl.u32 %v1628, 7
    %v1630 = vsub.s32 0, %v1629
    %v1631 = vrot.slane %v1626, %v1630
    %v1632 = vlaneseq
    %v1633 = vshrl.u32 %v1632, 7
    %v1634 = vsub.s32 1, %v1633
    %v1635 = vrot.slane %v1626, %v1634
    %1638 = vmatprep.subr.mxu0 %v1625
    %1639 = vmatpush1.msra.mxu0 %v1624
    %1640 = vmatprep.subr.mxu0 %v1623
    %1641 = vmatpush1.msra.mxu0 %v1622
    %1642 = vmatprep.subr.mxu0 %v1621
    %1643 = vmatpush1.msra.mxu0 %v1620
    %1644 = vmatprep.subr.mxu0 %v1619
    %1645 = vmatpush1.msra.mxu0 %v1618
    %1646 = vmatprep.subr.mxu0 %v1617
    %1647 = vmatpush1.msra.mxu0 %v1616
    %1648 = vmatprep.subr.mxu0 %v1615
    %1649 = vmatpush1.msra.mxu0 %v1614
    %1650 = vmatprep.subr.mxu0 %v1613
    %1651 = vmatpush1.msra.mxu0 %v1612
    %1652 = vmatprep.subr.mxu0 %v1611
    %1653 = vmatpush1.msra.mxu0 %v1610
    %1654 = vmatprep.subr.mxu0 %v1609
    %1655 = vmatpush1.msra.mxu0 %v1608
    %1656 = vmatprep.subr.mxu0 %v1607
    %1657 = vmatpush1.msra.mxu0 %v1606
    %1658 = vmatprep.subr.mxu0 %v1605
    %1659 = vmatpush1.msra.mxu0 %v1604
    %1660 = vmatprep.subr.mxu0 %v1603
    %1661 = vmatpush1.msra.mxu0 %v1602
    %1662 = vmatprep.subr.mxu0 %v1601
    %1663 = vmatpush1.msra.mxu0 %v1600
    %1664 = vmatprep.subr.mxu0 %v1599
    %1665 = vmatpush1.msra.mxu0 %v1598
    %1666 = vmatprep.subr.mxu0 %v1597
    %1667 = vmatpush1.msra.mxu0 %v1596
    %1668 = vmatprep.subr.mxu0 %v1595
    %1669 = vmatpush1.msra.mxu0 %v1594
    %1670 = vmatprep.subr.mxu0 0.0
    %1671 = vmatpush2.msra.mxu0 0.0
    %1672 = vmatprep.subr.mxu0 0.0
    %1673 = vmatpush2.msra.mxu0 0.0
    %1674 = vmatprep.subr.mxu0 0.0
    %1675 = vmatpush2.msra.mxu0 0.0
    %1676 = vmatprep.subr.mxu0 0.0
    %1677 = vmatpush2.msra.mxu0 0.0
    %1678 = vmatprep.subr.mxu0 0.0
    %1679 = vmatpush2.msra.mxu0 0.0
    %1680 = vmatprep.subr.mxu0 0.0
    %1681 = vmatpush2.msra.mxu0 0.0
    %1682 = vmatprep.subr.mxu0 0.0
    %1683 = vmatpush2.msra.mxu0 0.0
    %1684 = vmatprep.subr.mxu0 0.0
    %1685 = vmatpush2.msra.mxu0 0.0
    %1686 = vmatprep.subr.mxu0 0.0
    %1687 = vmatpush2.msra.mxu0 0.0
    %1688 = vmatprep.subr.mxu0 0.0
    %1689 = vmatpush2.msra.mxu0 0.0
    %1690 = vmatprep.subr.mxu0 0.0
    %1691 = vmatpush2.msra.mxu0 0.0
    %1692 = vmatprep.subr.mxu0 0.0
    %1693 = vmatpush2.msra.mxu0 0.0
    %1694 = vmatprep.subr.mxu0 0.0
    %1695 = vmatpush2.msra.mxu0 0.0
    %1696 = vmatprep.subr.mxu0 0.0
    %1697 = vmatpush2.msra.mxu0 0.0
    %1698 = vmatprep.subr.mxu0 0.0
    %1699 = vmatpush2.msra.mxu0 0.0
    %1700 = vmatprep.subr.mxu0 0.0
    %1701 = vmatpush2.msra.mxu0 0.0
    %1702 = vmatprep.mubr.f32.mxu0 0.0
    %1703 = vmatmul.mubr.f32.gmra.mxu0 %v1590
    %v1704 = vpop.f32.mrf.mxu0
    %v1705 = vadd.f32 %v1631, %v1704
    %v1706 = vpop.f32.mrf.mxu0
    %v1707 = vadd.f32 %v1635, %v1706
    %1708 = vmatprep.mubr.f32.mxu0 0.0
    %1709 = vmatmul.mubr.f32.gmra.mxu0 %v1591
    %v1710 = vpop.f32.mrf.mxu0
    %v1711 = vadd.f32 %v1631, %v1710
    %v1712 = vpop.f32.mrf.mxu0
    %v1713 = vadd.f32 %v1635, %v1712
    %1714 = vdwg.mxu0
    %v1715 = vxor.u32 %v1705, 2147483648
    %v1716 = vxor.u32 %v1711, 2147483648
    %v1717 = vmul.f32 %v1715, 1.442695
    %v1718 = vpow.pop %v1717
    %v1719 = vmul.f32 %v1716, 1.442695
    %v1720 = vpow.pop %v1719
    %v1721 = vadd.f32 %v1718, 1.0
    %v1722 = vadd.f32 %v1720, 1.0
    %v1723 = vrcp.pop %v1721
    %v1724 = vmul.f32 1.0, %v1723
    %v1725 = vrcp.pop %v1722
    %v1726 = vmul.f32 1.0, %v1725
    %v1727 = vtanh.pop %v1707
    %v1728 = vtanh.pop %v1713
    %v1729 = vxor.u32 %v1707, 2147483648
    %v1730 = vxor.u32 %v1713, 2147483648
    %v1731 = vmul.f32 %v1729, 1.442695
    %v1732 = vpow.pop %v1731
    %v1733 = vmul.f32 %v1730, 1.442695
    %v1734 = vpow.pop %v1733
    %v1735 = vadd.f32 %v1732, 1.0
    %v1736 = vadd.f32 %v1734, 1.0
    %v1737 = vrcp.pop %v1735
    %v1738 = vmul.f32 1.0, %v1737
    %v1739 = vrcp.pop %v1736
    %v1740 = vmul.f32 1.0, %v1739
    %1743 = vrot.lane.b32.xlu0 %v1592, 64
    %v1744 = vpop.permute.xlu0 %1743
    %1745 = vrot.lane.b32.xlu0 %v1593, 64
    %v1746 = vpop.permute.xlu0 %1745
    %v1749 = vmul.f32 %v1724, %v1744
    %v1750 = vmul.f32 %v1726, %v1746
    %v1751 = vmul.f32 %v1724, %v1727
    %v1752 = vmul.f32 %v1726, %v1728
    %1755 = vrot.lane.b32.xlu0 %v1751, 64
    %v1756 = vpop.permute.xlu0 %1755
    %1757 = vrot.lane.b32.xlu0 %v1752, 64
    %v1758 = vpop.permute.xlu0 %1757
    %v1761 = vadd.f32 %v1749, %v1756
    %v1762 = vadd.f32 %v1750, %v1758
    %v1763 = vtanh.pop %v1761
    %v1764 = vtanh.pop %v1762
    %v1765 = vmul.f32 %v1738, %v1763
    %v1766 = vmul.f32 %v1740, %v1764
    %1769 = vrot.lane.b32.xlu0 %v1765, 64
    %v1770 = vpop.permute.xlu0 %1769
    %1771 = vrot.lane.b32.xlu0 %v1766, 64
    %v1772 = vpop.permute.xlu0 %1771
    %1775 = vst.msk [vmem:[#allocation4] sm:$0xff] %vm101, %v1770
    %1776 = vst.msk [vmem:[#allocation4 + $0x8] sm:$0xff] %vm101, %v1772
    %1779 = vrot.lane.b32.xlu0 %v1761, 64
    %v1780 = vpop.permute.xlu0 %1779
    %1781 = vrot.lane.b32.xlu0 %v1762, 64
    %v1782 = vpop.permute.xlu0 %1781
    %1785 = vst.msk [vmem:[#allocation5] sm:$0xff] %vm101, %v1780
    %1786 = vst.msk [vmem:[#allocation5 + $0x8] sm:$0xff] %vm101, %v1782
    %s1787 = scalar_lea.vmem [#allocation15], 48
    %1788 = vst.msk [vmem:[%s1787] sm:$0xff] %vm101, %v1770
    %1789 = vst.msk [vmem:[%s1787 + $0x8] sm:$0xff] %vm101, %v1772
    %s1790 = scalar_lea.vmem [#allocation6], 64
    %v1791 = vld [vmem:[%s1790] sm:$0xff]
    %v1792 = vld [vmem:[%s1790 + $0x8] sm:$0xff]
    %v1793 = vld [vmem:[#allocation2] sm:$0xff]
    %v1794 = vld [vmem:[#allocation2 + $0x8] sm:$0xff]
    %1797 = vrot.lane.b32.xlu0 %v1793, 32
    %v1798 = vpop.permute.xlu0 %1797
    %1799 = vrot.lane.b32.xlu0 %v1794, 32
    %v1800 = vpop.permute.xlu0 %1799
    %v1803 = vsel %vm130, %v1791, %v1798
    %v1804 = vsel %vm130, %v1792, %v1800
    %v1805 = vld [vmem:[#allocation3] sm:$0xff]
    %v1806 = vld [vmem:[#allocation3 + $0x8] sm:$0xff]
    %v1807 = vld [vmem:[#allocation9] sm:$0xff]
    %v1808 = vld [vmem:[#allocation9 + $0x8] sm:$0xff]
    %v1809 = vld [vmem:[#allocation9 + $0x10] sm:$0xff]
    %v1810 = vld [vmem:[#allocation9 + $0x18] sm:$0xff]
    %v1811 = vld [vmem:[#allocation9 + $0x20] sm:$0xff]
    %v1812 = vld [vmem:[#allocation9 + $0x28] sm:$0xff]
    %v1813 = vld [vmem:[#allocation9 + $0x30] sm:$0xff]
    %v1814 = vld [vmem:[#allocation9 + $0x38] sm:$0xff]
    %v1815 = vld [vmem:[#allocation9 + $0x40] sm:$0xff]
    %v1816 = vld [vmem:[#allocation9 + $0x48] sm:$0xff]
    %v1817 = vld [vmem:[#allocation9 + $0x50] sm:$0xff]
    %v1818 = vld [vmem:[#allocation9 + $0x58] sm:$0xff]
    %v1819 = vld [vmem:[#allocation9 + $0x60] sm:$0xff]
    %v1820 = vld [vmem:[#allocation9 + $0x68] sm:$0xff]
    %v1821 = vld [vmem:[#allocation9 + $0x70] sm:$0xff]
    %v1822 = vld [vmem:[#allocation9 + $0x78] sm:$0xff]
    %v1823 = vld [vmem:[#allocation9 + $0x80] sm:$0xff]
    %v1824 = vld [vmem:[#allocation9 + $0x88] sm:$0xff]
    %v1825 = vld [vmem:[#allocation9 + $0x90] sm:$0xff]
    %v1826 = vld [vmem:[#allocation9 + $0x98] sm:$0xff]
    %v1827 = vld [vmem:[#allocation9 + $0xa0] sm:$0xff]
    %v1828 = vld [vmem:[#allocation9 + $0xa8] sm:$0xff]
    %v1829 = vld [vmem:[#allocation9 + $0xb0] sm:$0xff]
    %v1830 = vld [vmem:[#allocation9 + $0xb8] sm:$0xff]
    %v1831 = vld [vmem:[%s2] sm:$0x3]
    %v1833 = vlaneseq
    %v1834 = vshrl.u32 %v1833, 7
    %v1835 = vsub.s32 0, %v1834
    %v1836 = vrot.slane %v1831, %v1835
    %v1837 = vlaneseq
    %v1838 = vshrl.u32 %v1837, 7
    %v1839 = vsub.s32 1, %v1838
    %v1840 = vrot.slane %v1831, %v1839
    %v1844 = vsel %vm171, %v1803, 0
    %v1847 = vsel %vm171, %v1804, 0
    %1849 = vmatprep.subr.mxu0 0.0
    %1850 = vmatpush1.msra.mxu0 0.0
    %1851 = vmatprep.subr.mxu0 0.0
    %1852 = vmatpush1.msra.mxu0 0.0
    %1853 = vmatprep.subr.mxu0 0.0
    %1854 = vmatpush1.msra.mxu0 0.0
    %1855 = vmatprep.subr.mxu0 0.0
    %1856 = vmatpush1.msra.mxu0 0.0
    %1857 = vmatprep.subr.mxu0 %v1830
    %1858 = vmatpush1.msra.mxu0 %v1829
    %1859 = vmatprep.subr.mxu0 %v1828
    %1860 = vmatpush1.msra.mxu0 %v1827
    %1861 = vmatprep.subr.mxu0 %v1826
    %1862 = vmatpush1.msra.mxu0 %v1825
    %1863 = vmatprep.subr.mxu0 %v1824
    %1864 = vmatpush1.msra.mxu0 %v1823
    %1865 = vmatprep.subr.mxu0 %v1822
    %1866 = vmatpush1.msra.mxu0 %v1821
    %1867 = vmatprep.subr.mxu0 %v1820
    %1868 = vmatpush1.msra.mxu0 %v1819
    %1869 = vmatprep.subr.mxu0 %v1818
    %1870 = vmatpush1.msra.mxu0 %v1817
    %1871 = vmatprep.subr.mxu0 %v1816
    %1872 = vmatpush1.msra.mxu0 %v1815
    %1873 = vmatprep.subr.mxu0 %v1814
    %1874 = vmatpush1.msra.mxu0 %v1813
    %1875 = vmatprep.subr.mxu0 %v1812
    %1876 = vmatpush1.msra.mxu0 %v1811
    %1877 = vmatprep.subr.mxu0 %v1810
    %1878 = vmatpush1.msra.mxu0 %v1809
    %1879 = vmatprep.subr.mxu0 %v1808
    %1880 = vmatpush1.msra.mxu0 %v1807
    %1881 = vmatprep.subr.mxu0 0.0
    %1882 = vmatpush2.msra.mxu0 0.0
    %1883 = vmatprep.subr.mxu0 0.0
    %1884 = vmatpush2.msra.mxu0 0.0
    %1885 = vmatprep.subr.mxu0 0.0
    %1886 = vmatpush2.msra.mxu0 0.0
    %1887 = vmatprep.subr.mxu0 0.0
    %1888 = vmatpush2.msra.mxu0 0.0
    %1889 = vmatprep.subr.mxu0 0.0
    %1890 = vmatpush2.msra.mxu0 0.0
    %1891 = vmatprep.subr.mxu0 0.0
    %1892 = vmatpush2.msra.mxu0 0.0
    %1893 = vmatprep.subr.mxu0 0.0
    %1894 = vmatpush2.msra.mxu0 0.0
    %1895 = vmatprep.subr.mxu0 0.0
    %1896 = vmatpush2.msra.mxu0 0.0
    %1897 = vmatprep.subr.mxu0 0.0
    %1898 = vmatpush2.msra.mxu0 0.0
    %1899 = vmatprep.subr.mxu0 0.0
    %1900 = vmatpush2.msra.mxu0 0.0
    %1901 = vmatprep.subr.mxu0 0.0
    %1902 = vmatpush2.msra.mxu0 0.0
    %1903 = vmatprep.subr.mxu0 0.0
    %1904 = vmatpush2.msra.mxu0 0.0
    %1905 = vmatprep.subr.mxu0 0.0
    %1906 = vmatpush2.msra.mxu0 0.0
    %1907 = vmatprep.subr.mxu0 0.0
    %1908 = vmatpush2.msra.mxu0 0.0
    %1909 = vmatprep.subr.mxu0 0.0
    %1910 = vmatpush2.msra.mxu0 0.0
    %1911 = vmatprep.subr.mxu0 0.0
    %1912 = vmatpush2.msra.mxu0 0.0
    %1913 = vmatprep.mubr.f32.mxu0 0.0
    %1914 = vmatmul.mubr.f32.gmra.mxu0 %v1844
    %v1915 = vpop.f32.mrf.mxu0
    %v1916 = vadd.f32 %v1836, %v1915
    %v1917 = vpop.f32.mrf.mxu0
    %v1918 = vadd.f32 %v1840, %v1917
    %1919 = vmatprep.mubr.f32.mxu0 0.0
    %1920 = vmatmul.mubr.f32.gmra.mxu0 %v1847
    %v1921 = vpop.f32.mrf.mxu0
    %v1922 = vadd.f32 %v1836, %v1921
    %v1923 = vpop.f32.mrf.mxu0
    %v1924 = vadd.f32 %v1840, %v1923
    %1925 = vdwg.mxu0
    %v1926 = vxor.u32 %v1916, 2147483648
    %v1927 = vxor.u32 %v1922, 2147483648
    %v1928 = vmul.f32 %v1926, 1.442695
    %v1929 = vpow.pop %v1928
    %v1930 = vmul.f32 %v1927, 1.442695
    %v1931 = vpow.pop %v1930
    %v1932 = vadd.f32 %v1929, 1.0
    %v1933 = vadd.f32 %v1931, 1.0
    %v1934 = vrcp.pop %v1932
    %v1935 = vmul.f32 1.0, %v1934
    %v1936 = vrcp.pop %v1933
    %v1937 = vmul.f32 1.0, %v1936
    %v1938 = vtanh.pop %v1918
    %v1939 = vtanh.pop %v1924
    %v1940 = vxor.u32 %v1918, 2147483648
    %v1941 = vxor.u32 %v1924, 2147483648
    %v1942 = vmul.f32 %v1940, 1.442695
    %v1943 = vpow.pop %v1942
    %v1944 = vmul.f32 %v1941, 1.442695
    %v1945 = vpow.pop %v1944
    %v1946 = vadd.f32 %v1943, 1.0
    %v1947 = vadd.f32 %v1945, 1.0
    %v1948 = vrcp.pop %v1946
    %v1949 = vmul.f32 1.0, %v1948
    %v1950 = vrcp.pop %v1947
    %v1951 = vmul.f32 1.0, %v1950
    %1954 = vrot.lane.b32.xlu0 %v1805, 64
    %v1955 = vpop.permute.xlu0 %1954
    %1956 = vrot.lane.b32.xlu0 %v1806, 64
    %v1957 = vpop.permute.xlu0 %1956
    %v1960 = vmul.f32 %v1935, %v1955
    %v1961 = vmul.f32 %v1937, %v1957
    %v1962 = vmul.f32 %v1935, %v1938
    %v1963 = vmul.f32 %v1937, %v1939
    %1966 = vrot.lane.b32.xlu0 %v1962, 64
    %v1967 = vpop.permute.xlu0 %1966
    %1968 = vrot.lane.b32.xlu0 %v1963, 64
    %v1969 = vpop.permute.xlu0 %1968
    %v1972 = vadd.f32 %v1960, %v1967
    %v1973 = vadd.f32 %v1961, %v1969
    %v1974 = vtanh.pop %v1972
    %v1975 = vtanh.pop %v1973
    %v1976 = vmul.f32 %v1949, %v1974
    %v1977 = vmul.f32 %v1951, %v1975
    %1980 = vrot.lane.b32.xlu0 %v1976, 64
    %v1981 = vpop.permute.xlu0 %1980
    %1982 = vrot.lane.b32.xlu0 %v1977, 64
    %v1983 = vpop.permute.xlu0 %1982
    %1986 = vst.msk [vmem:[#allocation2] sm:$0xff] %vm101, %v1981
    %1987 = vst.msk [vmem:[#allocation2 + $0x8] sm:$0xff] %vm101, %v1983
    %1990 = vrot.lane.b32.xlu0 %v1972, 64
    %v1991 = vpop.permute.xlu0 %1990
    %1992 = vrot.lane.b32.xlu0 %v1973, 64
    %v1993 = vpop.permute.xlu0 %1992
    %1996 = vst.msk [vmem:[#allocation3] sm:$0xff] %vm101, %v1991
    %1997 = vst.msk [vmem:[#allocation3 + $0x8] sm:$0xff] %vm101, %v1993
    %v1998 = vld [vmem:[#allocation4] sm:$0xff]
    %v1999 = vld [vmem:[#allocation4 + $0x8] sm:$0xff]
    %2002 = vrot.lane.b32.xlu0 %v1998, 64
    %v2003 = vpop.permute.xlu0 %2002
    %2004 = vrot.lane.b32.xlu0 %v1999, 64
    %v2005 = vpop.permute.xlu0 %2004
    %v2008 = vsel %vm101, %v1981, %v2003
    %v2009 = vsel %vm101, %v1983, %v2005
    %v2010 = vld [vmem:[#allocation5] sm:$0xff]
    %v2011 = vld [vmem:[#allocation5 + $0x8] sm:$0xff]
    %v2012 = vld [vmem:[#allocation11] sm:$0xff]
    %v2013 = vld [vmem:[#allocation11 + $0x8] sm:$0xff]
    %v2014 = vld [vmem:[#allocation11 + $0x10] sm:$0xff]
    %v2015 = vld [vmem:[#allocation11 + $0x18] sm:$0xff]
    %v2016 = vld [vmem:[#allocation11 + $0x20] sm:$0xff]
    %v2017 = vld [vmem:[#allocation11 + $0x28] sm:$0xff]
    %v2018 = vld [vmem:[#allocation11 + $0x30] sm:$0xff]
    %v2019 = vld [vmem:[#allocation11 + $0x38] sm:$0xff]
    %v2020 = vld [vmem:[#allocation11 + $0x40] sm:$0xff]
    %v2021 = vld [vmem:[#allocation11 + $0x48] sm:$0xff]
    %v2022 = vld [vmem:[#allocation11 + $0x50] sm:$0xff]
    %v2023 = vld [vmem:[#allocation11 + $0x58] sm:$0xff]
    %v2024 = vld [vmem:[#allocation11 + $0x60] sm:$0xff]
    %v2025 = vld [vmem:[#allocation11 + $0x68] sm:$0xff]
    %v2026 = vld [vmem:[#allocation11 + $0x70] sm:$0xff]
    %v2027 = vld [vmem:[#allocation11 + $0x78] sm:$0xff]
    %v2028 = vld [vmem:[#allocation11 + $0x80] sm:$0xff]
    %v2029 = vld [vmem:[#allocation11 + $0x88] sm:$0xff]
    %v2030 = vld [vmem:[#allocation11 + $0x90] sm:$0xff]
    %v2031 = vld [vmem:[#allocation11 + $0x98] sm:$0xff]
    %v2032 = vld [vmem:[#allocation11 + $0xa0] sm:$0xff]
    %v2033 = vld [vmem:[#allocation11 + $0xa8] sm:$0xff]
    %v2034 = vld [vmem:[#allocation11 + $0xb0] sm:$0xff]
    %v2035 = vld [vmem:[#allocation11 + $0xb8] sm:$0xff]
    %v2036 = vld [vmem:[#allocation11 + $0xc0] sm:$0xff]
    %v2037 = vld [vmem:[#allocation11 + $0xc8] sm:$0xff]
    %v2038 = vld [vmem:[#allocation11 + $0xd0] sm:$0xff]
    %v2039 = vld [vmem:[#allocation11 + $0xd8] sm:$0xff]
    %v2040 = vld [vmem:[#allocation11 + $0xe0] sm:$0xff]
    %v2041 = vld [vmem:[#allocation11 + $0xe8] sm:$0xff]
    %v2042 = vld [vmem:[#allocation11 + $0xf0] sm:$0xff]
    %v2043 = vld [vmem:[#allocation11 + $0xf8] sm:$0xff]
    %v2044 = vld [vmem:[%s4] sm:$0x3]
    %v2046 = vlaneseq
    %v2047 = vshrl.u32 %v2046, 7
    %v2048 = vsub.s32 0, %v2047
    %v2049 = vrot.slane %v2044, %v2048
    %v2050 = vlaneseq
    %v2051 = vshrl.u32 %v2050, 7
    %v2052 = vsub.s32 1, %v2051
    %v2053 = vrot.slane %v2044, %v2052
    %2056 = vmatprep.subr.mxu0 %v2043
    %2057 = vmatpush1.msra.mxu0 %v2042
    %2058 = vmatprep.subr.mxu0 %v2041
    %2059 = vmatpush1.msra.mxu0 %v2040
    %2060 = vmatprep.subr.mxu0 %v2039
    %2061 = vmatpush1.msra.mxu0 %v2038
    %2062 = vmatprep.subr.mxu0 %v2037
    %2063 = vmatpush1.msra.mxu0 %v2036
    %2064 = vmatprep.subr.mxu0 %v2035
    %2065 = vmatpush1.msra.mxu0 %v2034
    %2066 = vmatprep.subr.mxu0 %v2033
    %2067 = vmatpush1.msra.mxu0 %v2032
    %2068 = vmatprep.subr.mxu0 %v2031
    %2069 = vmatpush1.msra.mxu0 %v2030
    %2070 = vmatprep.subr.mxu0 %v2029
    %2071 = vmatpush1.msra.mxu0 %v2028
    %2072 = vmatprep.subr.mxu0 %v2027
    %2073 = vmatpush1.msra.mxu0 %v2026
    %2074 = vmatprep.subr.mxu0 %v2025
    %2075 = vmatpush1.msra.mxu0 %v2024
    %2076 = vmatprep.subr.mxu0 %v2023
    %2077 = vmatpush1.msra.mxu0 %v2022
    %2078 = vmatprep.subr.mxu0 %v2021
    %2079 = vmatpush1.msra.mxu0 %v2020
    %2080 = vmatprep.subr.mxu0 %v2019
    %2081 = vmatpush1.msra.mxu0 %v2018
    %2082 = vmatprep.subr.mxu0 %v2017
    %2083 = vmatpush1.msra.mxu0 %v2016
    %2084 = vmatprep.subr.mxu0 %v2015
    %2085 = vmatpush1.msra.mxu0 %v2014
    %2086 = vmatprep.subr.mxu0 %v2013
    %2087 = vmatpush1.msra.mxu0 %v2012
    %2088 = vmatprep.subr.mxu0 0.0
    %2089 = vmatpush2.msra.mxu0 0.0
    %2090 = vmatprep.subr.mxu0 0.0
    %2091 = vmatpush2.msra.mxu0 0.0
    %2092 = vmatprep.subr.mxu0 0.0
    %2093 = vmatpush2.msra.mxu0 0.0
    %2094 = vmatprep.subr.mxu0 0.0
    %2095 = vmatpush2.msra.mxu0 0.0
    %2096 = vmatprep.subr.mxu0 0.0
    %2097 = vmatpush2.msra.mxu0 0.0
    %2098 = vmatprep.subr.mxu0 0.0
    %2099 = vmatpush2.msra.mxu0 0.0
    %2100 = vmatprep.subr.mxu0 0.0
    %2101 = vmatpush2.msra.mxu0 0.0
    %2102 = vmatprep.subr.mxu0 0.0
    %2103 = vmatpush2.msra.mxu0 0.0
    %2104 = vmatprep.subr.mxu0 0.0
    %2105 = vmatpush2.msra.mxu0 0.0
    %2106 = vmatprep.subr.mxu0 0.0
    %2107 = vmatpush2.msra.mxu0 0.0
    %2108 = vmatprep.subr.mxu0 0.0
    %2109 = vmatpush2.msra.mxu0 0.0
    %2110 = vmatprep.subr.mxu0 0.0
    %2111 = vmatpush2.msra.mxu0 0.0
    %2112 = vmatprep.subr.mxu0 0.0
    %2113 = vmatpush2.msra.mxu0 0.0
    %2114 = vmatprep.subr.mxu0 0.0
    %2115 = vmatpush2.msra.mxu0 0.0
    %2116 = vmatprep.subr.mxu0 0.0
    %2117 = vmatpush2.msra.mxu0 0.0
    %2118 = vmatprep.subr.mxu0 0.0
    %2119 = vmatpush2.msra.mxu0 0.0
    %2120 = vmatprep.mubr.f32.mxu0 0.0
    %2121 = vmatmul.mubr.f32.gmra.mxu0 %v2008
    %v2122 = vpop.f32.mrf.mxu0
    %v2123 = vadd.f32 %v2049, %v2122
    %v2124 = vpop.f32.mrf.mxu0
    %v2125 = vadd.f32 %v2053, %v2124
    %2126 = vmatprep.mubr.f32.mxu0 0.0
    %2127 = vmatmul.mubr.f32.gmra.mxu0 %v2009
    %v2128 = vpop.f32.mrf.mxu0
    %v2129 = vadd.f32 %v2049, %v2128
    %v2130 = vpop.f32.mrf.mxu0
    %v2131 = vadd.f32 %v2053, %v2130
    %2132 = vdwg.mxu0
    %v2133 = vxor.u32 %v2123, 2147483648
    %v2134 = vxor.u32 %v2129, 2147483648
    %v2135 = vmul.f32 %v2133, 1.442695
    %v2136 = vpow.pop %v2135
    %v2137 = vmul.f32 %v2134, 1.442695
    %v2138 = vpow.pop %v2137
    %v2139 = vadd.f32 %v2136, 1.0
    %v2140 = vadd.f32 %v2138, 1.0
    %v2141 = vrcp.pop %v2139
    %v2142 = vmul.f32 1.0, %v2141
    %v2143 = vrcp.pop %v2140
    %v2144 = vmul.f32 1.0, %v2143
    %v2145 = vtanh.pop %v2125
    %v2146 = vtanh.pop %v2131
    %v2147 = vxor.u32 %v2125, 2147483648
    %v2148 = vxor.u32 %v2131, 2147483648
    %v2149 = vmul.f32 %v2147, 1.442695
    %v2150 = vpow.pop %v2149
    %v2151 = vmul.f32 %v2148, 1.442695
    %v2152 = vpow.pop %v2151
    %v2153 = vadd.f32 %v2150, 1.0
    %v2154 = vadd.f32 %v2152, 1.0
    %v2155 = vrcp.pop %v2153
    %v2156 = vmul.f32 1.0, %v2155
    %v2157 = vrcp.pop %v2154
    %v2158 = vmul.f32 1.0, %v2157
    %2161 = vrot.lane.b32.xlu0 %v2010, 64
    %v2162 = vpop.permute.xlu0 %2161
    %2163 = vrot.lane.b32.xlu0 %v2011, 64
    %v2164 = vpop.permute.xlu0 %2163
    %v2167 = vmul.f32 %v2142, %v2162
    %v2168 = vmul.f32 %v2144, %v2164
    %v2169 = vmul.f32 %v2142, %v2145
    %v2170 = vmul.f32 %v2144, %v2146
    %2173 = vrot.lane.b32.xlu0 %v2169, 64
    %v2174 = vpop.permute.xlu0 %2173
    %2175 = vrot.lane.b32.xlu0 %v2170, 64
    %v2176 = vpop.permute.xlu0 %2175
    %v2179 = vadd.f32 %v2167, %v2174
    %v2180 = vadd.f32 %v2168, %v2176
    %v2181 = vtanh.pop %v2179
    %v2182 = vtanh.pop %v2180
    %v2183 = vmul.f32 %v2156, %v2181
    %v2184 = vmul.f32 %v2158, %v2182
    %2187 = vrot.lane.b32.xlu0 %v2183, 64
    %v2188 = vpop.permute.xlu0 %2187
    %2189 = vrot.lane.b32.xlu0 %v2184, 64
    %v2190 = vpop.permute.xlu0 %2189
    %2193 = vst.msk [vmem:[#allocation4] sm:$0xff] %vm101, %v2188
    %2194 = vst.msk [vmem:[#allocation4 + $0x8] sm:$0xff] %vm101, %v2190
    %2197 = vrot.lane.b32.xlu0 %v2179, 64
    %v2198 = vpop.permute.xlu0 %2197
    %2199 = vrot.lane.b32.xlu0 %v2180, 64
    %v2200 = vpop.permute.xlu0 %2199
    %2203 = vst.msk [vmem:[#allocation5] sm:$0xff] %vm101, %v2198
    %2204 = vst.msk [vmem:[#allocation5 + $0x8] sm:$0xff] %vm101, %v2200
    %s2205 = scalar_lea.vmem [#allocation15], 64
    %2206 = vst.msk [vmem:[%s2205] sm:$0xff] %vm101, %v2188
    %2207 = vst.msk [vmem:[%s2205 + $0x8] sm:$0xff] %vm101, %v2190
    %s2208 = scalar_lea.vmem [#allocation6], 80
    %v2209 = vld [vmem:[%s2208] sm:$0xff]
    %v2210 = vld [vmem:[%s2208 + $0x8] sm:$0xff]
    %v2211 = vld [vmem:[#allocation2] sm:$0xff]
    %v2212 = vld [vmem:[#allocation2 + $0x8] sm:$0xff]
    %2215 = vrot.lane.b32.xlu0 %v2211, 32
    %v2216 = vpop.permute.xlu0 %2215
    %2217 = vrot.lane.b32.xlu0 %v2212, 32
    %v2218 = vpop.permute.xlu0 %2217
    %v2221 = vsel %vm130, %v2209, %v2216
    %v2222 = vsel %vm130, %v2210, %v2218
    %v2223 = vld [vmem:[#allocation3] sm:$0xff]
    %v2224 = vld [vmem:[#allocation3 + $0x8] sm:$0xff]
    %v2225 = vld [vmem:[#allocation9] sm:$0xff]
    %v2226 = vld [vmem:[#allocation9 + $0x8] sm:$0xff]
    %v2227 = vld [vmem:[#allocation9 + $0x10] sm:$0xff]
    %v2228 = vld [vmem:[#allocation9 + $0x18] sm:$0xff]
    %v2229 = vld [vmem:[#allocation9 + $0x20] sm:$0xff]
    %v2230 = vld [vmem:[#allocation9 + $0x28] sm:$0xff]
    %v2231 = vld [vmem:[#allocation9 + $0x30] sm:$0xff]
    %v2232 = vld [vmem:[#allocation9 + $0x38] sm:$0xff]
    %v2233 = vld [vmem:[#allocation9 + $0x40] sm:$0xff]
    %v2234 = vld [vmem:[#allocation9 + $0x48] sm:$0xff]
    %v2235 = vld [vmem:[#allocation9 + $0x50] sm:$0xff]
    %v2236 = vld [vmem:[#allocation9 + $0x58] sm:$0xff]
    %v2237 = vld [vmem:[#allocation9 + $0x60] sm:$0xff]
    %v2238 = vld [vmem:[#allocation9 + $0x68] sm:$0xff]
    %v2239 = vld [vmem:[#allocation9 + $0x70] sm:$0xff]
    %v2240 = vld [vmem:[#allocation9 + $0x78] sm:$0xff]
    %v2241 = vld [vmem:[#allocation9 + $0x80] sm:$0xff]
    %v2242 = vld [vmem:[#allocation9 + $0x88] sm:$0xff]
    %v2243 = vld [vmem:[#allocation9 + $0x90] sm:$0xff]
    %v2244 = vld [vmem:[#allocation9 + $0x98] sm:$0xff]
    %v2245 = vld [vmem:[#allocation9 + $0xa0] sm:$0xff]
    %v2246 = vld [vmem:[#allocation9 + $0xa8] sm:$0xff]
    %v2247 = vld [vmem:[#allocation9 + $0xb0] sm:$0xff]
    %v2248 = vld [vmem:[#allocation9 + $0xb8] sm:$0xff]
    %v2249 = vld [vmem:[%s2] sm:$0x3]
    %v2251 = vlaneseq
    %v2252 = vshrl.u32 %v2251, 7
    %v2253 = vsub.s32 0, %v2252
    %v2254 = vrot.slane %v2249, %v2253
    %v2255 = vlaneseq
    %v2256 = vshrl.u32 %v2255, 7
    %v2257 = vsub.s32 1, %v2256
    %v2258 = vrot.slane %v2249, %v2257
    %v2262 = vsel %vm171, %v2221, 0
    %v2265 = vsel %vm171, %v2222, 0
    %2267 = vmatprep.subr.mxu0 0.0
    %2268 = vmatpush1.msra.mxu0 0.0
    %2269 = vmatprep.subr.mxu0 0.0
    %2270 = vmatpush1.msra.mxu0 0.0
    %2271 = vmatprep.subr.mxu0 0.0
    %2272 = vmatpush1.msra.mxu0 0.0
    %2273 = vmatprep.subr.mxu0 0.0
    %2274 = vmatpush1.msra.mxu0 0.0
    %2275 = vmatprep.subr.mxu0 %v2248
    %2276 = vmatpush1.msra.mxu0 %v2247
    %2277 = vmatprep.subr.mxu0 %v2246
    %2278 = vmatpush1.msra.mxu0 %v2245
    %2279 = vmatprep.subr.mxu0 %v2244
    %2280 = vmatpush1.msra.mxu0 %v2243
    %2281 = vmatprep.subr.mxu0 %v2242
    %2282 = vmatpush1.msra.mxu0 %v2241
    %2283 = vmatprep.subr.mxu0 %v2240
    %2284 = vmatpush1.msra.mxu0 %v2239
    %2285 = vmatprep.subr.mxu0 %v2238
    %2286 = vmatpush1.msra.mxu0 %v2237
    %2287 = vmatprep.subr.mxu0 %v2236
    %2288 = vmatpush1.msra.mxu0 %v2235
    %2289 = vmatprep.subr.mxu0 %v2234
    %2290 = vmatpush1.msra.mxu0 %v2233
    %2291 = vmatprep.subr.mxu0 %v2232
    %2292 = vmatpush1.msra.mxu0 %v2231
    %2293 = vmatprep.subr.mxu0 %v2230
    %2294 = vmatpush1.msra.mxu0 %v2229
    %2295 = vmatprep.subr.mxu0 %v2228
    %2296 = vmatpush1.msra.mxu0 %v2227
    %2297 = vmatprep.subr.mxu0 %v2226
    %2298 = vmatpush1.msra.mxu0 %v2225
    %2299 = vmatprep.subr.mxu0 0.0
    %2300 = vmatpush2.msra.mxu0 0.0
    %2301 = vmatprep.subr.mxu0 0.0
    %2302 = vmatpush2.msra.mxu0 0.0
    %2303 = vmatprep.subr.mxu0 0.0
    %2304 = vmatpush2.msra.mxu0 0.0
    %2305 = vmatprep.subr.mxu0 0.0
    %2306 = vmatpush2.msra.mxu0 0.0
    %2307 = vmatprep.subr.mxu0 0.0
    %2308 = vmatpush2.msra.mxu0 0.0
    %2309 = vmatprep.subr.mxu0 0.0
    %2310 = vmatpush2.msra.mxu0 0.0
    %2311 = vmatprep.subr.mxu0 0.0
    %2312 = vmatpush2.msra.mxu0 0.0
    %2313 = vmatprep.subr.mxu0 0.0
    %2314 = vmatpush2.msra.mxu0 0.0
    %2315 = vmatprep.subr.mxu0 0.0
    %2316 = vmatpush2.msra.mxu0 0.0
    %2317 = vmatprep.subr.mxu0 0.0
    %2318 = vmatpush2.msra.mxu0 0.0
    %2319 = vmatprep.subr.mxu0 0.0
    %2320 = vmatpush2.msra.mxu0 0.0
    %2321 = vmatprep.subr.mxu0 0.0
    %2322 = vmatpush2.msra.mxu0 0.0
    %2323 = vmatprep.subr.mxu0 0.0
    %2324 = vmatpush2.msra.mxu0 0.0
    %2325 = vmatprep.subr.mxu0 0.0
    %2326 = vmatpush2.msra.mxu0 0.0
    %2327 = vmatprep.subr.mxu0 0.0
    %2328 = vmatpush2.msra.mxu0 0.0
    %2329 = vmatprep.subr.mxu0 0.0
    %2330 = vmatpush2.msra.mxu0 0.0
    %2331 = vmatprep.mubr.f32.mxu0 0.0
    %2332 = vmatmul.mubr.f32.gmra.mxu0 %v2262
    %v2333 = vpop.f32.mrf.mxu0
    %v2334 = vadd.f32 %v2254, %v2333
    %v2335 = vpop.f32.mrf.mxu0
    %v2336 = vadd.f32 %v2258, %v2335
    %2337 = vmatprep.mubr.f32.mxu0 0.0
    %2338 = vmatmul.mubr.f32.gmra.mxu0 %v2265
    %v2339 = vpop.f32.mrf.mxu0
    %v2340 = vadd.f32 %v2254, %v2339
    %v2341 = vpop.f32.mrf.mxu0
    %v2342 = vadd.f32 %v2258, %v2341
    %2343 = vdwg.mxu0
    %v2344 = vxor.u32 %v2334, 2147483648
    %v2345 = vxor.u32 %v2340, 2147483648
    %v2346 = vmul.f32 %v2344, 1.442695
    %v2347 = vpow.pop %v2346
    %v2348 = vmul.f32 %v2345, 1.442695
    %v2349 = vpow.pop %v2348
    %v2350 = vadd.f32 %v2347, 1.0
    %v2351 = vadd.f32 %v2349, 1.0
    %v2352 = vrcp.pop %v2350
    %v2353 = vmul.f32 1.0, %v2352
    %v2354 = vrcp.pop %v2351
    %v2355 = vmul.f32 1.0, %v2354
    %v2356 = vtanh.pop %v2336
    %v2357 = vtanh.pop %v2342
    %v2358 = vxor.u32 %v2336, 2147483648
    %v2359 = vxor.u32 %v2342, 2147483648
    %v2360 = vmul.f32 %v2358, 1.442695
    %v2361 = vpow.pop %v2360
    %v2362 = vmul.f32 %v2359, 1.442695
    %v2363 = vpow.pop %v2362
    %v2364 = vadd.f32 %v2361, 1.0
    %v2365 = vadd.f32 %v2363, 1.0
    %v2366 = vrcp.pop %v2364
    %v2367 = vmul.f32 1.0, %v2366
    %v2368 = vrcp.pop %v2365
    %v2369 = vmul.f32 1.0, %v2368
    %2372 = vrot.lane.b32.xlu0 %v2223, 64
    %v2373 = vpop.permute.xlu0 %2372
    %2374 = vrot.lane.b32.xlu0 %v2224, 64
    %v2375 = vpop.permute.xlu0 %2374
    %v2378 = vmul.f32 %v2353, %v2373
    %v2379 = vmul.f32 %v2355, %v2375
    %v2380 = vmul.f32 %v2353, %v2356
    %v2381 = vmul.f32 %v2355, %v2357
    %2384 = vrot.lane.b32.xlu0 %v2380, 64
    %v2385 = vpop.permute.xlu0 %2384
    %2386 = vrot.lane.b32.xlu0 %v2381, 64
    %v2387 = vpop.permute.xlu0 %2386
    %v2390 = vadd.f32 %v2378, %v2385
    %v2391 = vadd.f32 %v2379, %v2387
    %v2392 = vtanh.pop %v2390
    %v2393 = vtanh.pop %v2391
    %v2394 = vmul.f32 %v2367, %v2392
    %v2395 = vmul.f32 %v2369, %v2393
    %2398 = vrot.lane.b32.xlu0 %v2394, 64
    %v2399 = vpop.permute.xlu0 %2398
    %2400 = vrot.lane.b32.xlu0 %v2395, 64
    %v2401 = vpop.permute.xlu0 %2400
    %2404 = vst.msk [vmem:[#allocation2] sm:$0xff] %vm101, %v2399
    %2405 = vst.msk [vmem:[#allocation2 + $0x8] sm:$0xff] %vm101, %v2401
    %2408 = vrot.lane.b32.xlu0 %v2390, 64
    %v2409 = vpop.permute.xlu0 %2408
    %2410 = vrot.lane.b32.xlu0 %v2391, 64
    %v2411 = vpop.permute.xlu0 %2410
    %2414 = vst.msk [vmem:[#allocation3] sm:$0xff] %vm101, %v2409
    %2415 = vst.msk [vmem:[#allocation3 + $0x8] sm:$0xff] %vm101, %v2411
    %v2416 = vld [vmem:[#allocation4] sm:$0xff]
    %v2417 = vld [vmem:[#allocation4 + $0x8] sm:$0xff]
    %2420 = vrot.lane.b32.xlu0 %v2416, 64
    %v2421 = vpop.permute.xlu0 %2420
    %2422 = vrot.lane.b32.xlu0 %v2417, 64
    %v2423 = vpop.permute.xlu0 %2422
    %v2426 = vsel %vm101, %v2399, %v2421
    %v2427 = vsel %vm101, %v2401, %v2423
    %v2428 = vld [vmem:[#allocation5] sm:$0xff]
    %v2429 = vld [vmem:[#allocation5 + $0x8] sm:$0xff]
    %v2430 = vld [vmem:[#allocation11] sm:$0xff]
    %v2431 = vld [vmem:[#allocation11 + $0x8] sm:$0xff]
    %v2432 = vld [vmem:[#allocation11 + $0x10] sm:$0xff]
    %v2433 = vld [vmem:[#allocation11 + $0x18] sm:$0xff]
    %v2434 = vld [vmem:[#allocation11 + $0x20] sm:$0xff]
    %v2435 = vld [vmem:[#allocation11 + $0x28] sm:$0xff]
    %v2436 = vld [vmem:[#allocation11 + $0x30] sm:$0xff]
    %v2437 = vld [vmem:[#allocation11 + $0x38] sm:$0xff]
    %v2438 = vld [vmem:[#allocation11 + $0x40] sm:$0xff]
    %v2439 = vld [vmem:[#allocation11 + $0x48] sm:$0xff]
    %v2440 = vld [vmem:[#allocation11 + $0x50] sm:$0xff]
    %v2441 = vld [vmem:[#allocation11 + $0x58] sm:$0xff]
    %v2442 = vld [vmem:[#allocation11 + $0x60] sm:$0xff]
    %v2443 = vld [vmem:[#allocation11 + $0x68] sm:$0xff]
    %v2444 = vld [vmem:[#allocation11 + $0x70] sm:$0xff]
    %v2445 = vld [vmem:[#allocation11 + $0x78] sm:$0xff]
    %v2446 = vld [vmem:[#allocation11 + $0x80] sm:$0xff]
    %v2447 = vld [vmem:[#allocation11 + $0x88] sm:$0xff]
    %v2448 = vld [vmem:[#allocation11 + $0x90] sm:$0xff]
    %v2449 = vld [vmem:[#allocation11 + $0x98] sm:$0xff]
    %v2450 = vld [vmem:[#allocation11 + $0xa0] sm:$0xff]
    %v2451 = vld [vmem:[#allocation11 + $0xa8] sm:$0xff]
    %v2452 = vld [vmem:[#allocation11 + $0xb0] sm:$0xff]
    %v2453 = vld [vmem:[#allocation11 + $0xb8] sm:$0xff]
    %v2454 = vld [vmem:[#allocation11 + $0xc0] sm:$0xff]
    %v2455 = vld [vmem:[#allocation11 + $0xc8] sm:$0xff]
    %v2456 = vld [vmem:[#allocation11 + $0xd0] sm:$0xff]
    %v2457 = vld [vmem:[#allocation11 + $0xd8] sm:$0xff]
    %v2458 = vld [vmem:[#allocation11 + $0xe0] sm:$0xff]
    %v2459 = vld [vmem:[#allocation11 + $0xe8] sm:$0xff]
    %v2460 = vld [vmem:[#allocation11 + $0xf0] sm:$0xff]
    %v2461 = vld [vmem:[#allocation11 + $0xf8] sm:$0xff]
    %v2462 = vld [vmem:[%s4] sm:$0x3]
    %v2464 = vlaneseq
    %v2465 = vshrl.u32 %v2464, 7
    %v2466 = vsub.s32 0, %v2465
    %v2467 = vrot.slane %v2462, %v2466
    %v2468 = vlaneseq
    %v2469 = vshrl.u32 %v2468, 7
    %v2470 = vsub.s32 1, %v2469
    %v2471 = vrot.slane %v2462, %v2470
    %2474 = vmatprep.subr.mxu0 %v2461
    %2475 = vmatpush1.msra.mxu0 %v2460
    %2476 = vmatprep.subr.mxu0 %v2459
    %2477 = vmatpush1.msra.mxu0 %v2458
    %2478 = vmatprep.subr.mxu0 %v2457
    %2479 = vmatpush1.msra.mxu0 %v2456
    %2480 = vmatprep.subr.mxu0 %v2455
    %2481 = vmatpush1.msra.mxu0 %v2454
    %2482 = vmatprep.subr.mxu0 %v2453
    %2483 = vmatpush1.msra.mxu0 %v2452
    %2484 = vmatprep.subr.mxu0 %v2451
    %2485 = vmatpush1.msra.mxu0 %v2450
    %2486 = vmatprep.subr.mxu0 %v2449
    %2487 = vmatpush1.msra.mxu0 %v2448
    %2488 = vmatprep.subr.mxu0 %v2447
    %2489 = vmatpush1.msra.mxu0 %v2446
    %2490 = vmatprep.subr.mxu0 %v2445
    %2491 = vmatpush1.msra.mxu0 %v2444
    %2492 = vmatprep.subr.mxu0 %v2443
    %2493 = vmatpush1.msra.mxu0 %v2442
    %2494 = vmatprep.subr.mxu0 %v2441
    %2495 = vmatpush1.msra.mxu0 %v2440
    %2496 = vmatprep.subr.mxu0 %v2439
    %2497 = vmatpush1.msra.mxu0 %v2438
    %2498 = vmatprep.subr.mxu0 %v2437
    %2499 = vmatpush1.msra.mxu0 %v2436
    %2500 = vmatprep.subr.mxu0 %v2435
    %2501 = vmatpush1.msra.mxu0 %v2434
    %2502 = vmatprep.subr.mxu0 %v2433
    %2503 = vmatpush1.msra.mxu0 %v2432
    %2504 = vmatprep.subr.mxu0 %v2431
    %2505 = vmatpush1.msra.mxu0 %v2430
    %2506 = vmatprep.subr.mxu0 0.0
    %2507 = vmatpush2.msra.mxu0 0.0
    %2508 = vmatprep.subr.mxu0 0.0
    %2509 = vmatpush2.msra.mxu0 0.0
    %2510 = vmatprep.subr.mxu0 0.0
    %2511 = vmatpush2.msra.mxu0 0.0
    %2512 = vmatprep.subr.mxu0 0.0
    %2513 = vmatpush2.msra.mxu0 0.0
    %2514 = vmatprep.subr.mxu0 0.0
    %2515 = vmatpush2.msra.mxu0 0.0
    %2516 = vmatprep.subr.mxu0 0.0
    %2517 = vmatpush2.msra.mxu0 0.0
    %2518 = vmatprep.subr.mxu0 0.0
    %2519 = vmatpush2.msra.mxu0 0.0
    %2520 = vmatprep.subr.mxu0 0.0
    %2521 = vmatpush2.msra.mxu0 0.0
    %2522 = vmatprep.subr.mxu0 0.0
    %2523 = vmatpush2.msra.mxu0 0.0
    %2524 = vmatprep.subr.mxu0 0.0
    %2525 = vmatpush2.msra.mxu0 0.0
    %2526 = vmatprep.subr.mxu0 0.0
    %2527 = vmatpush2.msra.mxu0 0.0
    %2528 = vmatprep.subr.mxu0 0.0
    %2529 = vmatpush2.msra.mxu0 0.0
    %2530 = vmatprep.subr.mxu0 0.0
    %2531 = vmatpush2.msra.mxu0 0.0
    %2532 = vmatprep.subr.mxu0 0.0
    %2533 = vmatpush2.msra.mxu0 0.0
    %2534 = vmatprep.subr.mxu0 0.0
    %2535 = vmatpush2.msra.mxu0 0.0
    %2536 = vmatprep.subr.mxu0 0.0
    %2537 = vmatpush2.msra.mxu0 0.0
    %2538 = vmatprep.mubr.f32.mxu0 0.0
    %2539 = vmatmul.mubr.f32.gmra.mxu0 %v2426
    %v2540 = vpop.f32.mrf.mxu0
    %v2541 = vadd.f32 %v2467, %v2540
    %v2542 = vpop.f32.mrf.mxu0
    %v2543 = vadd.f32 %v2471, %v2542
    %2544 = vmatprep.mubr.f32.mxu0 0.0
    %2545 = vmatmul.mubr.f32.gmra.mxu0 %v2427
    %v2546 = vpop.f32.mrf.mxu0
    %v2547 = vadd.f32 %v2467, %v2546
    %v2548 = vpop.f32.mrf.mxu0
    %v2549 = vadd.f32 %v2471, %v2548
    %2550 = vdwg.mxu0
    %v2551 = vxor.u32 %v2541, 2147483648
    %v2552 = vxor.u32 %v2547, 2147483648
    %v2553 = vmul.f32 %v2551, 1.442695
    %v2554 = vpow.pop %v2553
    %v2555 = vmul.f32 %v2552, 1.442695
    %v2556 = vpow.pop %v2555
    %v2557 = vadd.f32 %v2554, 1.0
    %v2558 = vadd.f32 %v2556, 1.0
    %v2559 = vrcp.pop %v2557
    %v2560 = vmul.f32 1.0, %v2559
    %v2561 = vrcp.pop %v2558
    %v2562 = vmul.f32 1.0, %v2561
    %v2563 = vtanh.pop %v2543
    %v2564 = vtanh.pop %v2549
    %v2565 = vxor.u32 %v2543, 2147483648
    %v2566 = vxor.u32 %v2549, 2147483648
    %v2567 = vmul.f32 %v2565, 1.442695
    %v2568 = vpow.pop %v2567
    %v2569 = vmul.f32 %v2566, 1.442695
    %v2570 = vpow.pop %v2569
    %v2571 = vadd.f32 %v2568, 1.0
    %v2572 = vadd.f32 %v2570, 1.0
    %v2573 = vrcp.pop %v2571
    %v2574 = vmul.f32 1.0, %v2573
    %v2575 = vrcp.pop %v2572
    %v2576 = vmul.f32 1.0, %v2575
    %2579 = vrot.lane.b32.xlu0 %v2428, 64
    %v2580 = vpop.permute.xlu0 %2579
    %2581 = vrot.lane.b32.xlu0 %v2429, 64
    %v2582 = vpop.permute.xlu0 %2581
    %v2585 = vmul.f32 %v2560, %v2580
    %v2586 = vmul.f32 %v2562, %v2582
    %v2587 = vmul.f32 %v2560, %v2563
    %v2588 = vmul.f32 %v2562, %v2564
    %2591 = vrot.lane.b32.xlu0 %v2587, 64
    %v2592 = vpop.permute.xlu0 %2591
    %2593 = vrot.lane.b32.xlu0 %v2588, 64
    %v2594 = vpop.permute.xlu0 %2593
    %v2597 = vadd.f32 %v2585, %v2592
    %v2598 = vadd.f32 %v2586, %v2594
    %v2599 = vtanh.pop %v2597
    %v2600 = vtanh.pop %v2598
    %v2601 = vmul.f32 %v2574, %v2599
    %v2602 = vmul.f32 %v2576, %v2600
    %2605 = vrot.lane.b32.xlu0 %v2601, 64
    %v2606 = vpop.permute.xlu0 %2605
    %2607 = vrot.lane.b32.xlu0 %v2602, 64
    %v2608 = vpop.permute.xlu0 %2607
    %2611 = vst.msk [vmem:[#allocation4] sm:$0xff] %vm101, %v2606
    %2612 = vst.msk [vmem:[#allocation4 + $0x8] sm:$0xff] %vm101, %v2608
    %2615 = vrot.lane.b32.xlu0 %v2597, 64
    %v2616 = vpop.permute.xlu0 %2615
    %2617 = vrot.lane.b32.xlu0 %v2598, 64
    %v2618 = vpop.permute.xlu0 %2617
    %2621 = vst.msk [vmem:[#allocation5] sm:$0xff] %vm101, %v2616
    %2622 = vst.msk [vmem:[#allocation5 + $0x8] sm:$0xff] %vm101, %v2618
    %s2623 = scalar_lea.vmem [#allocation15], 80
    %2624 = vst.msk [vmem:[%s2623] sm:$0xff] %vm101, %v2606
    %2625 = vst.msk [vmem:[%s2623 + $0x8] sm:$0xff] %vm101, %v2608
    %v2626 = vld [vmem:[#allocation2] sm:$0xff]
    %v2627 = vld [vmem:[#allocation2 + $0x8] sm:$0xff]
    %2628 = vst.msk [vmem:[#allocation16] sm:$0xff] %vm101, %v2626
    %2629 = vst.msk [vmem:[#allocation16 + $0x8] sm:$0xff] %vm101, %v2627
    %v2630 = vld [vmem:[#allocation4] sm:$0xff]
    %v2631 = vld [vmem:[#allocation4 + $0x8] sm:$0xff]
    %s2632 = scalar_lea.vmem [#allocation16], 16
    %2633 = vst.msk [vmem:[%s2632] sm:$0xff] %vm101, %v2630
    %2634 = vst.msk [vmem:[%s2632 + $0x8] sm:$0xff] %vm101, %v2631
    %v2635 = vld [vmem:[#allocation3] sm:$0xff]
    %v2636 = vld [vmem:[#allocation3 + $0x8] sm:$0xff]
    %2637 = vst.msk [vmem:[#allocation18] sm:$0xff] %vm101, %v2635
    %2638 = vst.msk [vmem:[#allocation18 + $0x8] sm:$0xff] %vm101, %v2636
    %v2639 = vld [vmem:[#allocation5] sm:$0xff]
    %v2640 = vld [vmem:[#allocation5 + $0x8] sm:$0xff]
    %s2641 = scalar_lea.vmem [#allocation18], 16
    %2642 = vst.msk [vmem:[%s2641] sm:$0xff] %vm101, %v2639
    %2643 = vst.msk [vmem:[%s2641 + $0x8] sm:$0xff] %vm101, %v2640
    // Predicated region
    $region50: #{tpu_custom_call.1} parent=1 // pred_check
      _
    $region51: #{tpu_custom_call.1} parent=1 // pred_check_branch
      %2645 = sbr.rel (0) target = $region53
    $region52: #{tpu_custom_call.1} parent=1 // pred_region
      %s2647 = ssub.s32 1536, 1536
      %2648 = vsyncadd [#allocation8], %s2647
      %s2649 = sshll.u32 [#allocation15], 4
      %s2650 = int_to_ptr.vmem [resolvable:$true] %s2649
      %2655 = dma.vmem_to_hbm [thread:$0]  %s2650, 1536, %s7, [#allocation8], 128, 128, 8
    $region53: #{tpu_custom_call.1} parent=1 // pred_fallthru
      _
    // Predicated region
    $region54: #{tpu_custom_call.1} parent=1 // pred_check
      _
    $region55: #{tpu_custom_call.1} parent=1 // pred_check_branch
      %2657 = sbr.rel (0) target = $region57
    $region56: #{tpu_custom_call.1} parent=1 // pred_region
      %s2659 = ssub.s32 512, 512
      %2660 = vsyncadd [#allocation17], %s2659
      %s2661 = sshll.u32 [#allocation16], 4
      %s2662 = int_to_ptr.vmem [resolvable:$true] %s2661
      %2667 = dma.vmem_to_hbm [thread:$0]  %s2662, 512, %s8, [#allocation17], 128, 128, 8
    $region57: #{tpu_custom_call.1} parent=1 // pred_fallthru
      _
    // Predicated region
    $region58: #{tpu_custom_call.1} parent=1 // pred_check
      _
    $region59: #{tpu_custom_call.1} parent=1 // pred_check_branch
      %2669 = sbr.rel (0) target = $region61
    $region60: #{tpu_custom_call.1} parent=1 // pred_region
      %s2671 = ssub.s32 512, 512
      %2672 = vsyncadd [#allocation17], %s2671
      %s2673 = sshll.u32 [#allocation18], 4
      %s2674 = int_to_ptr.vmem [resolvable:$true] %s2673
      %2679 = dma.vmem_to_hbm [thread:$0]  %s2674, 512, %s9, [#allocation17], 128, 128, 8
    $region61: #{tpu_custom_call.1} parent=1 // pred_fallthru
      _
    // Predicated region
    $region62: #{tpu_custom_call.1} parent=1 // pred_check
      _
    $region63: #{tpu_custom_call.1} parent=1 // pred_check_branch
      %2681 = sbr.rel (0) target = $region65
    $region64: #{tpu_custom_call.1} parent=1 // pred_region
      %2682 = dma.done [#allocation8], 1536
    $region65: #{tpu_custom_call.1} parent=1 // pred_fallthru
      _
    // Predicated region
    $region66: #{tpu_custom_call.1} parent=1 // pred_check
      _
    $region67: #{tpu_custom_call.1} parent=1 // pred_check_branch
      %2684 = sbr.rel (0) target = $region69
    $region68: #{tpu_custom_call.1} parent=1 // pred_region
      %2685 = dma.done [#allocation17], 512
    $region69: #{tpu_custom_call.1} parent=1 // pred_fallthru
      _
    // Predicated region
    $region70: #{tpu_custom_call.1} parent=1 // pred_check
      _
    $region71: #{tpu_custom_call.1} parent=1 // pred_check_branch
      %2687 = sbr.rel (0) target = $region73
    $region72: #{tpu_custom_call.1} parent=1 // pred_region
      %2688 = dma.done [#allocation17], 512
    $region73: #{tpu_custom_call.1} parent=1 // pred_fallthru
      _
    %2689 = vsyncpa [#allocation7], 1
    %2690 = vsyncpa [#allocation10], 1
    %2691 = vsyncpa [#allocation13], 1
    %2692 = vsyncpa [#allocation8], 1
    %2693 = vsyncpa [#allocation17], 1

</llo_original>
